<compile_context>
chip_gen: v6e
topology: v6e:2x2x1
jax: 0.10.0
libtpu: 0.0.40
codegen_flags: <defaults>
</compile_context>

<pallas_src>
import jax
import jax.numpy as jnp
from jax.experimental import pallas as pl
from jax.experimental.pallas import tpu as pltpu


def _round_up(n, m):
    return ((n + m - 1) // m) * m


def _chip_defaults():
    """Pick (batch-tile cap, scoped-VMEM limit) from the chip's VMEM size."""
    vmem_bytes = 64 * 1024 * 1024                   # conservative (v7x-like)
    try:
        info = pltpu.get_tpu_info()
        vmem_bytes = int(getattr(info, "vmem_capacity_bytes", vmem_bytes))
    except Exception:
        pass
    if vmem_bytes >= 96 * 1024 * 1024:              # v5e / v6e: 128 MiB VMEM
        return 1024, 96 * 1024 * 1024
    return 512, 48 * 1024 * 1024                    # v7x: 64 MiB VMEM


def _pick_batch_tiles(B, tb_max):
    """Batch tile + padded batch. Guarantees tb % 8 == 0, b_pad % tb == 0,
    and >= 2 grid steps whenever the padded batch is >= 16 rows (so both of
    v7x's TensorCores get work; also amortizes per-step overhead elsewhere)."""
    tb_max = max(8, _round_up(tb_max, 8))
    b_pad0 = _round_up(B, 8)
    min_steps = 2 if b_pad0 >= 16 else 1
    n_steps = max(min_steps, -(-b_pad0 // tb_max))
    tb = _round_up(-(-b_pad0 // n_steps), 8)
    tb = min(tb, tb_max)
    b_pad = n_steps * tb
    return tb, b_pad


def _mlp_kernel(x_ref,
                w1_ref, b1_ref,
                w2_ref, b2_ref,
                w3_ref, b3_ref,
                w4_ref, b4_ref,
                w5_ref, b5_ref,
                o_ref):
    # One batch tile per grid step; all 5 Linear+ReLU layers fused.
    # Weights (bf16, ~3.8 MiB total after padding) are VMEM-resident across
    # the whole grid (constant block index); activations stay in vregs/VMEM.
    def layer(h, w_ref, b_ref):
        acc = jnp.dot(h, w_ref[...], preferred_element_type=jnp.float32)
        return jnp.maximum(acc + b_ref[...], 0.0)

    # In-kernel f32 -> bf16 cast of the input tile (no wrapper-side HBM pass).
    h = x_ref[...].astype(jnp.bfloat16)                 # (TB, 3072)
    h = layer(h, w1_ref, b1_ref).astype(jnp.bfloat16)   # (TB, 512)
    h = layer(h, w2_ref, b2_ref).astype(jnp.bfloat16)   # (TB, 256)
    h = layer(h, w3_ref, b3_ref).astype(jnp.bfloat16)   # (TB, 256)
    h = layer(h, w4_ref, b4_ref).astype(jnp.bfloat16)   # (TB, 256)
    h = layer(h, w5_ref, b5_ref)                        # (TB, 256) f32 acc
    o_ref[...] = h.astype(o_ref.dtype)                  # lane-dense bf16 store


def init_params(key):
    """Deterministic init matching the module's __init__ shapes.

    Weights: kaiming_normal_(nonlinearity='relu') -> N(0, sqrt(2/fan_in)).
    Biases: PyTorch Linear default U(-1/sqrt(fan_in), 1/sqrt(fan_in)).
    Returned as f32 (in, out) weights and (out,) biases (pre-transposed).
    """
    hidden = 200
    sizes = [32 * 32 * 3, hidden * 2, hidden, hidden, hidden, hidden]
    params = []
    for i in range(1, 6):
        fan_in, fan_out = sizes[i - 1], sizes[i]
        key, kw, kb = jax.random.split(key, 3)
        std = (2.0 / fan_in) ** 0.5
        w = jax.random.normal(kw, (fan_out, fan_in), dtype=jnp.float32) * std
        bound = 1.0 / (fan_in ** 0.5)
        b = jax.random.uniform(kb, (fan_out,), dtype=jnp.float32,
                               minval=-bound, maxval=bound)
        params.append((w.T, b))  # (in, out), (out,)
    return params


def prepare_params(params_f32):
    """Pad feature dims to multiples of 128 and cast weights to bf16.

    Zero padding of weight rows/cols and bias entries keeps the padded
    columns mathematically inert (they stay exactly zero through ReLU).
    Biases stay f32 (tiny) and are added to the f32 accumulator.
    """
    prepared = []
    for (w, b) in params_f32:
        in_d, out_d = w.shape
        in_p, out_p = _round_up(in_d, 128), _round_up(out_d, 128)
        wp = jnp.zeros((in_p, out_p), jnp.bfloat16)
        wp = wp.at[:in_d, :out_d].set(w.astype(jnp.bfloat16))
        bp = jnp.zeros((1, out_p), jnp.float32)
        bp = bp.at[0, :out_d].set(b)
        prepared.append((wp, bp))
    return prepared


def mlp_forward(x_nchw, prepared_params, out_features=200,
                out_dtype=jnp.bfloat16):
    """x_nchw: (B, 3, 32, 32) float32 (or bf16). prepared_params: padded params.

    Returns (B, out_features) in `out_dtype` (bf16 by default so the trailing
    slice pass moves half the bytes; ask for f32 if downstream needs it)."""
    B = x_nchw.shape[0]
    x = x_nchw.reshape(B, -1)                 # (B, 3072), like .view(B, -1)
    in_dim = x.shape[1]

    tb_max, vmem_limit = _chip_defaults()
    tb, b_pad = _pick_batch_tiles(B, tb_max)
    if b_pad != B:
        x = jnp.pad(x, ((0, b_pad - B), (0, 0)))

    out_pad = prepared_params[-1][0].shape[1]  # 256 (lane-dense output slab)

    flat_args = [x]
    in_specs = [pl.BlockSpec((tb, in_dim), lambda i: (i, 0))]
    for (w, b) in prepared_params:
        flat_args += [w, b]
        # Constant block index -> weights/biases DMA'd once, stay VMEM-resident.
        in_specs += [pl.BlockSpec(w.shape, lambda i: (0, 0)),
                     pl.BlockSpec(b.shape, lambda i: (0, 0))]

    flops = 2 * int(b_pad) * sum(int(w.shape[0]) * int(w.shape[1])
                                 for (w, _) in prepared_params)
    bytes_accessed = int(
        x.size * x.dtype.itemsize
        + sum(w.size * w.dtype.itemsize + b.size * b.dtype.itemsize
              for (w, b) in prepared_params)
        + b_pad * out_pad * jnp.dtype(out_dtype).itemsize)

    # TODO(synk): on v7x, verify "parallel" really shards the batch axis over
    # both TensorCores; if not, switch it to pltpu.CORE_PARALLEL / core_map.
    out = pl.pallas_call(
        _mlp_kernel,
        out_shape=jax.ShapeDtypeStruct((b_pad, out_pad), out_dtype),
        grid=(b_pad // tb,),
        in_specs=in_specs,
        out_specs=pl.BlockSpec((tb, out_pad), lambda i: (i, 0)),
        compiler_params=pltpu.CompilerParams(
            dimension_semantics=("parallel",),
            vmem_limit_bytes=vmem_limit),
        cost_estimate=pl.CostEstimate(flops=flops, transcendentals=0,
                                      bytes_accessed=bytes_accessed),
    )(*flat_args)

    return out[:B, :out_features]


def reference_forward(x_nchw, params_f32):
    """Pure-JAX reference emulating the kernel's bf16-weight / f32-accumulate
    numerics (so the tolerance stays tight)."""
    h = x_nchw.reshape(x_nchw.shape[0], -1).astype(jnp.bfloat16)
    n = len(params_f32)
    for idx, (w, b) in enumerate(params_f32):
        acc = jnp.dot(h, w.astype(jnp.bfloat16),
                      preferred_element_type=jnp.float32)
        a = jnp.maximum(acc + b, 0.0)
        h = a.astype(jnp.bfloat16) if idx < n - 1 else a
    return h  # f32


if __name__ == "__main__":
    key = jax.random.PRNGKey(0)
    kx, kx2, kp = jax.random.split(key, 3)
    params_f32 = init_params(kp)
    params_kernel = prepare_params(params_f32)

    # Input implied by the first Linear(3072, ...): CIFAR-like NCHW tensor.
    x = jax.random.normal(kx, (2, 3, 32, 32), dtype=jnp.float32)
    out = jax.block_until_ready(mlp_forward(x, params_kernel))
    ref = reference_forward(x, params_f32)
    assert out.shape == (2, 200), out.shape
    assert jnp.allclose(out.astype(jnp.float32), ref, atol=2e-2, rtol=2e-2), \
        "mismatch vs reference (B=2)"

    # Second, slightly larger batch to exercise the multi-step grid path.
    x2 = jax.random.normal(kx2, (16, 3, 32, 32), dtype=jnp.float32)
    out2 = jax.block_until_ready(mlp_forward(x2, params_kernel))
    ref2 = reference_forward(x2, params_f32)
    assert out2.shape == (16, 200), out2.shape
    assert jnp.allclose(out2.astype(jnp.float32), ref2, atol=2e-2, rtol=2e-2), \
        "mismatch vs reference (B=16)"

    print("KERNEL_OK")
</pallas_src>

<mosaic_0001>
module attributes {stable_mosaic.version = 11 : i64} {
  func.func @_mlp_kernel(%arg0: i32, %arg1: memref<8x3072xf32, #tpu.memory_space<vmem>>, %arg2: memref<3072x512xbf16, #tpu.memory_space<vmem>>, %arg3: memref<1x512xf32, #tpu.memory_space<vmem>>, %arg4: memref<512x256xbf16, #tpu.memory_space<vmem>>, %arg5: memref<1x256xf32, #tpu.memory_space<vmem>>, %arg6: memref<256x256xbf16, #tpu.memory_space<vmem>>, %arg7: memref<1x256xf32, #tpu.memory_space<vmem>>, %arg8: memref<256x256xbf16, #tpu.memory_space<vmem>>, %arg9: memref<1x256xf32, #tpu.memory_space<vmem>>, %arg10: memref<256x256xbf16, #tpu.memory_space<vmem>>, %arg11: memref<1x256xf32, #tpu.memory_space<vmem>>, %arg12: memref<8x256xbf16, #tpu.memory_space<vmem>>) attributes {dimension_semantics = [#tpu.dimension_semantics<parallel>], iteration_bounds = array<i64: 1>, scalar_prefetch = 0 : i64, scratch_operands = 0 : i64, tpu.core_type = #tpu.core_type<tc>, window_params = [{transform_indices = @transform_0, window_bounds = array<i64: 8, 3072>}, {pipeline_mode = #tpu.pipeline_mode<synchronous>, transform_indices = @transform_1, window_bounds = array<i64: 3072, 512>}, {pipeline_mode = #tpu.pipeline_mode<synchronous>, transform_indices = @transform_2, window_bounds = array<i64: 1, 512>}, {pipeline_mode = #tpu.pipeline_mode<synchronous>, transform_indices = @transform_3, window_bounds = array<i64: 512, 256>}, {pipeline_mode = #tpu.pipeline_mode<synchronous>, transform_indices = @transform_4, window_bounds = array<i64: 1, 256>}, {pipeline_mode = #tpu.pipeline_mode<synchronous>, transform_indices = @transform_5, window_bounds = array<i64: 256, 256>}, {pipeline_mode = #tpu.pipeline_mode<synchronous>, transform_indices = @transform_6, window_bounds = array<i64: 1, 256>}, {pipeline_mode = #tpu.pipeline_mode<synchronous>, transform_indices = @transform_7, window_bounds = array<i64: 256, 256>}, {pipeline_mode = #tpu.pipeline_mode<synchronous>, transform_indices = @transform_8, window_bounds = array<i64: 1, 256>}, {pipeline_mode = #tpu.pipeline_mode<synchronous>, transform_indices = @transform_9, window_bounds = array<i64: 256, 256>}, {pipeline_mode = #tpu.pipeline_mode<synchronous>, transform_indices = @transform_10, window_bounds = array<i64: 1, 256>}, {transform_indices = @transform_11, window_bounds = array<i64: 8, 256>}]} {
    %c0 = arith.constant 0 : index
    %c0_0 = arith.constant 0 : index
    %0 = vector.load %arg1[%c0, %c0_0] : memref<8x3072xf32, #tpu.memory_space<vmem>>, vector<8x3072xf32>
    %1 = arith.truncf %0 : vector<8x3072xf32> to vector<8x3072xbf16>
    %c0_1 = arith.constant 0 : index
    %c0_2 = arith.constant 0 : index
    %2 = vector.load %arg2[%c0_1, %c0_2] : memref<3072x512xbf16, #tpu.memory_space<vmem>>, vector<3072x512xbf16>
    %cst = arith.constant dense<0.000000e+00> : vector<8x512xf32>
    %3 = tpu.matmul %1, %2, %cst {dimension_numbers = #tpu.dot_dimension_numbers<[1], [0], [0], [1], [0, 0, 1, 1], [], []>} : vector<8x3072xbf16>, vector<3072x512xbf16>, vector<8x512xf32> -> vector<8x512xf32>
    %c0_3 = arith.constant 0 : index
    %c0_4 = arith.constant 0 : index
    %4 = vector.load %arg3[%c0_3, %c0_4] : memref<1x512xf32, #tpu.memory_space<vmem>>, vector<1x512xf32>
    %5 = vector.broadcast %4 : vector<1x512xf32> to vector<8x512xf32>
    %6 = arith.addf %3, %5 : vector<8x512xf32>
    %cst_5 = arith.constant 0.000000e+00 : f32
    %7 = vector.broadcast %cst_5 : f32 to vector<8x512xf32>
    %8 = arith.maximumf %6, %7 : vector<8x512xf32>
    %9 = arith.truncf %8 : vector<8x512xf32> to vector<8x512xbf16>
    %c0_6 = arith.constant 0 : index
    %c0_7 = arith.constant 0 : index
    %10 = vector.load %arg4[%c0_6, %c0_7] : memref<512x256xbf16, #tpu.memory_space<vmem>>, vector<512x256xbf16>
    %cst_8 = arith.constant dense<0.000000e+00> : vector<8x256xf32>
    %11 = tpu.matmul %9, %10, %cst_8 {dimension_numbers = #tpu.dot_dimension_numbers<[1], [0], [0], [1], [0, 0, 1, 1], [], []>} : vector<8x512xbf16>, vector<512x256xbf16>, vector<8x256xf32> -> vector<8x256xf32>
    %c0_9 = arith.constant 0 : index
    %c0_10 = arith.constant 0 : index
    %12 = vector.load %arg5[%c0_9, %c0_10] : memref<1x256xf32, #tpu.memory_space<vmem>>, vector<1x256xf32>
    %13 = vector.broadcast %12 : vector<1x256xf32> to vector<8x256xf32>
    %14 = arith.addf %11, %13 : vector<8x256xf32>
    %cst_11 = arith.constant 0.000000e+00 : f32
    %15 = vector.broadcast %cst_11 : f32 to vector<8x256xf32>
    %16 = arith.maximumf %14, %15 : vector<8x256xf32>
    %17 = arith.truncf %16 : vector<8x256xf32> to vector<8x256xbf16>
    %c0_12 = arith.constant 0 : index
    %c0_13 = arith.constant 0 : index
    %18 = vector.load %arg6[%c0_12, %c0_13] : memref<256x256xbf16, #tpu.memory_space<vmem>>, vector<256x256xbf16>
    %cst_14 = arith.constant dense<0.000000e+00> : vector<8x256xf32>
    %19 = tpu.matmul %17, %18, %cst_14 {dimension_numbers = #tpu.dot_dimension_numbers<[1], [0], [0], [1], [0, 0, 1, 1], [], []>} : vector<8x256xbf16>, vector<256x256xbf16>, vector<8x256xf32> -> vector<8x256xf32>
    %c0_15 = arith.constant 0 : index
    %c0_16 = arith.constant 0 : index
    %20 = vector.load %arg7[%c0_15, %c0_16] : memref<1x256xf32, #tpu.memory_space<vmem>>, vector<1x256xf32>
    %21 = vector.broadcast %20 : vector<1x256xf32> to vector<8x256xf32>
    %22 = arith.addf %19, %21 : vector<8x256xf32>
    %cst_17 = arith.constant 0.000000e+00 : f32
    %23 = vector.broadcast %cst_17 : f32 to vector<8x256xf32>
    %24 = arith.maximumf %22, %23 : vector<8x256xf32>
    %25 = arith.truncf %24 : vector<8x256xf32> to vector<8x256xbf16>
    %c0_18 = arith.constant 0 : index
    %c0_19 = arith.constant 0 : index
    %26 = vector.load %arg8[%c0_18, %c0_19] : memref<256x256xbf16, #tpu.memory_space<vmem>>, vector<256x256xbf16>
    %cst_20 = arith.constant dense<0.000000e+00> : vector<8x256xf32>
    %27 = tpu.matmul %25, %26, %cst_20 {dimension_numbers = #tpu.dot_dimension_numbers<[1], [0], [0], [1], [0, 0, 1, 1], [], []>} : vector<8x256xbf16>, vector<256x256xbf16>, vector<8x256xf32> -> vector<8x256xf32>
    %c0_21 = arith.constant 0 : index
    %c0_22 = arith.constant 0 : index
    %28 = vector.load %arg9[%c0_21, %c0_22] : memref<1x256xf32, #tpu.memory_space<vmem>>, vector<1x256xf32>
    %29 = vector.broadcast %28 : vector<1x256xf32> to vector<8x256xf32>
    %30 = arith.addf %27, %29 : vector<8x256xf32>
    %cst_23 = arith.constant 0.000000e+00 : f32
    %31 = vector.broadcast %cst_23 : f32 to vector<8x256xf32>
    %32 = arith.maximumf %30, %31 : vector<8x256xf32>
    %33 = arith.truncf %32 : vector<8x256xf32> to vector<8x256xbf16>
    %c0_24 = arith.constant 0 : index
    %c0_25 = arith.constant 0 : index
    %34 = vector.load %arg10[%c0_24, %c0_25] : memref<256x256xbf16, #tpu.memory_space<vmem>>, vector<256x256xbf16>
    %cst_26 = arith.constant dense<0.000000e+00> : vector<8x256xf32>
    %35 = tpu.matmul %33, %34, %cst_26 {dimension_numbers = #tpu.dot_dimension_numbers<[1], [0], [0], [1], [0, 0, 1, 1], [], []>} : vector<8x256xbf16>, vector<256x256xbf16>, vector<8x256xf32> -> vector<8x256xf32>
    %c0_27 = arith.constant 0 : index
    %c0_28 = arith.constant 0 : index
    %36 = vector.load %arg11[%c0_27, %c0_28] : memref<1x256xf32, #tpu.memory_space<vmem>>, vector<1x256xf32>
    %37 = vector.broadcast %36 : vector<1x256xf32> to vector<8x256xf32>
    %38 = arith.addf %35, %37 : vector<8x256xf32>
    %cst_29 = arith.constant 0.000000e+00 : f32
    %39 = vector.broadcast %cst_29 : f32 to vector<8x256xf32>
    %40 = arith.maximumf %38, %39 : vector<8x256xf32>
    %41 = arith.truncf %40 : vector<8x256xf32> to vector<8x256xbf16>
    %c0_30 = arith.constant 0 : index
    %c0_31 = arith.constant 0 : index
    %42 = vector.load %arg12[%c0_30, %c0_31] : memref<8x256xbf16, #tpu.memory_space<vmem>>, vector<8x256xbf16>
    tpu.vector_store %arg12[%c0_30, %c0_31], %41 {strides = array<i32>} : memref<8x256xbf16, #tpu.memory_space<vmem>>, vector<8x256xbf16>,
    return
  }
  func.func @transform_0(%arg0: i32) -> (i32, i32) {
    %c0_i32 = arith.constant 0 : i32
    %c0_i32_0 = arith.constant 0 : i32
    return %arg0, %c0_i32 : i32, i32
  }
  func.func @transform_1(%arg0: i32) -> (i32, i32) {
    %c0_i32 = arith.constant 0 : i32
    %c0_i32_0 = arith.constant 0 : i32
    %c0_i32_1 = arith.constant 0 : i32
    return %c0_i32, %c0_i32_0 : i32, i32
  }
  func.func @transform_2(%arg0: i32) -> (i32, i32) {
    %c0_i32 = arith.constant 0 : i32
    %c0_i32_0 = arith.constant 0 : i32
    %c0_i32_1 = arith.constant 0 : i32
    return %c0_i32, %c0_i32_0 : i32, i32
  }
  func.func @transform_3(%arg0: i32) -> (i32, i32) {
    %c0_i32 = arith.constant 0 : i32
    %c0_i32_0 = arith.constant 0 : i32
    %c0_i32_1 = arith.constant 0 : i32
    return %c0_i32, %c0_i32_0 : i32, i32
  }
  func.func @transform_4(%arg0: i32) -> (i32, i32) {
    %c0_i32 = arith.constant 0 : i32
    %c0_i32_0 = arith.constant 0 : i32
    %c0_i32_1 = arith.constant 0 : i32
    return %c0_i32, %c0_i32_0 : i32, i32
  }
  func.func @transform_5(%arg0: i32) -> (i32, i32) {
    %c0_i32 = arith.constant 0 : i32
    %c0_i32_0 = arith.constant 0 : i32
    %c0_i32_1 = arith.constant 0 : i32
    return %c0_i32, %c0_i32_0 : i32, i32
  }
  func.func @transform_6(%arg0: i32) -> (i32, i32) {
    %c0_i32 = arith.constant 0 : i32
    %c0_i32_0 = arith.constant 0 : i32
    %c0_i32_1 = arith.constant 0 : i32
    return %c0_i32, %c0_i32_0 : i32, i32
  }
  func.func @transform_7(%arg0: i32) -> (i32, i32) {
    %c0_i32 = arith.constant 0 : i32
    %c0_i32_0 = arith.constant 0 : i32
    %c0_i32_1 = arith.constant 0 : i32
    return %c0_i32, %c0_i32_0 : i32, i32
  }
  func.func @transform_8(%arg0: i32) -> (i32, i32) {
    %c0_i32 = arith.constant 0 : i32
    %c0_i32_0 = arith.constant 0 : i32
    %c0_i32_1 = arith.constant 0 : i32
    return %c0_i32, %c0_i32_0 : i32, i32
  }
  func.func @transform_9(%arg0: i32) -> (i32, i32) {
    %c0_i32 = arith.constant 0 : i32
    %c0_i32_0 = arith.constant 0 : i32
    %c0_i32_1 = arith.constant 0 : i32
    return %c0_i32, %c0_i32_0 : i32, i32
  }
  func.func @transform_10(%arg0: i32) -> (i32, i32) {
    %c0_i32 = arith.constant 0 : i32
    %c0_i32_0 = arith.constant 0 : i32
    %c0_i32_1 = arith.constant 0 : i32
    return %c0_i32, %c0_i32_0 : i32, i32
  }
  func.func @transform_11(%arg0: i32) -> (i32, i32) {
    %c0_i32 = arith.constant 0 : i32
    %c0_i32_0 = arith.constant 0 : i32
    return %arg0, %c0_i32 : i32, i32
  }
}

</mosaic_0001>

<llo_original>
// kernel: tpu_custom_call.1
$region0: #{tpu_custom_call.1}
  #allocation0 [shape = 'u32[]', space=smem, size = 0x4, offset = 0x4, fixed_abs, tag = 'smem constant byte address 0x4 - core index']
  #allocation1 [shape = 'u32[144,128]{1,0:T(1,128)}', space=vmem, size = 0x12000, scoped, tag = 'internal scratch']
  %s0 = inlined_call_operand.hbm [shape: f32[8,3072], index: 0, kind: input, shape index: {}]
  %s1 = inlined_call_operand.hbm [shape: bf16[3072,512], index: 1, kind: input, shape index: {}]
  %s2 = inlined_call_operand.hbm [shape: f32[1,512], index: 2, kind: input, shape index: {}]
  %s3 = inlined_call_operand.hbm [shape: bf16[512,256], index: 3, kind: input, shape index: {}]
  %s4 = inlined_call_operand.hbm [shape: f32[1,256], index: 4, kind: input, shape index: {}]
  %s5 = inlined_call_operand.hbm [shape: bf16[256,256], index: 5, kind: input, shape index: {}]
  %s6 = inlined_call_operand.hbm [shape: f32[1,256], index: 6, kind: input, shape index: {}]
  %s7 = inlined_call_operand.hbm [shape: bf16[256,256], index: 7, kind: input, shape index: {}]
  %s8 = inlined_call_operand.hbm [shape: f32[1,256], index: 8, kind: input, shape index: {}]
  %s9 = inlined_call_operand.hbm [shape: bf16[256,256], index: 9, kind: input, shape index: {}]
  %s10 = inlined_call_operand.hbm [shape: f32[1,256], index: 10, kind: input, shape index: {}]
  %s11 = inlined_call_operand.hbm [shape: bf16[8,256], index: 11, kind: output, shape index: {}]
  %s12 = sld [smem:[#allocation0]]
  $region98: #{tpu_custom_call.1} parent=0
    _
  %s14 = ssub.s32 1, %s12
  %s15 = scalar_select 0, %s14, %s12
  $region1: #{tpu_custom_call.1} parent=0
    #allocation2 [shape = 'u8[98304]{0}', space=vmem, size = 0x18000, scoped, tag = 'input window, operand 0, single buffered']
    #allocation3 [shape = 's32[1]{0}', space=sflag, size = 0x4, scoped, tag = 'scoped memory for tpu_custom_call.1']
    #allocation4 [shape = 's32[1]{0}', space=sflag, size = 0x4, scoped, tag = 'scoped memory for tpu_custom_call.1']
    #allocation5 [shape = 'u8[3145728]{0}', space=vmem, size = 0x300000, scoped, tag = 'input window, operand 1, single buffered']
    #allocation6 [shape = 's32[1]{0}', space=sflag, size = 0x4, scoped, tag = 'scoped memory for tpu_custom_call.1']
    #allocation7 [shape = 'u8[2048]{0}', space=vmem, size = 0x800, scoped, tag = 'input window, operand 2, single buffered']
    #allocation8 [shape = 'u8[262144]{0}', space=vmem, size = 0x40000, scoped, tag = 'input window, operand 3, single buffered']
    #allocation9 [shape = 's32[1]{0}', space=sflag, size = 0x4, scoped, tag = 'scoped memory for tpu_custom_call.1']
    #allocation10 [shape = 'u8[1024]{0}', space=vmem, size = 0x400, scoped, tag = 'input window, operand 4, single buffered']
    #allocation11 [shape = 'u8[131072]{0}', space=vmem, size = 0x20000, scoped, tag = 'input window, operand 5, single buffered']
    #allocation12 [shape = 's32[1]{0}', space=sflag, size = 0x4, scoped, tag = 'scoped memory for tpu_custom_call.1']
    #allocation13 [shape = 'u8[1024]{0}', space=vmem, size = 0x400, scoped, tag = 'input window, operand 6, single buffered']
    #allocation14 [shape = 'u8[131072]{0}', space=vmem, size = 0x20000, scoped, tag = 'input window, operand 7, single buffered']
    #allocation15 [shape = 's32[1]{0}', space=sflag, size = 0x4, scoped, tag = 'scoped memory for tpu_custom_call.1']
    #allocation16 [shape = 'u8[1024]{0}', space=vmem, size = 0x400, scoped, tag = 'input window, operand 8, single buffered']
    #allocation17 [shape = 'u8[131072]{0}', space=vmem, size = 0x20000, scoped, tag = 'input window, operand 9, single buffered']
    #allocation18 [shape = 's32[1]{0}', space=sflag, size = 0x4, scoped, tag = 'scoped memory for tpu_custom_call.1']
    #allocation19 [shape = 'u8[1024]{0}', space=vmem, size = 0x400, scoped, tag = 'input window, operand 10, single buffered']
    #allocation20 [shape = 'u8[4096]{0}', space=vmem, size = 0x1000, scoped, tag = 'output window, operand 0, single buffered']
    %16 = vsyncpa [#allocation3], 0
    %17 = vsyncpa [#allocation6], 0
    %18 = vsyncpa [#allocation9], 0
    %19 = vsyncpa [#allocation12], 0
    %20 = vsyncpa [#allocation15], 0
    %21 = vsyncpa [#allocation18], 0
    %22 = vsyncpa [#allocation4], 0
    // Predicated region
    $region2: #{tpu_custom_call.1} parent=1 // pred_check
      _
    $region3: #{tpu_custom_call.1} parent=1 // pred_check_branch
      %24 = sbr.rel (0) target = $region5
    $region4: #{tpu_custom_call.1} parent=1 // pred_region
      %s26 = ssub.s32 3072, 3072
      %27 = vsyncadd [#allocation3], %s26
      %s29 = sshll.u32 [#allocation2], 4
      %s30 = int_to_ptr.vmem [resolvable:$true] %s29
      %32 = dma.hbm_to_vmem [thread:$0]  %s0, 3072, %s30, [#allocation3]
    $region5: #{tpu_custom_call.1} parent=1 // pred_fallthru
      _
    // Predicated region
    $region6: #{tpu_custom_call.1} parent=1 // pred_check
      _
    $region7: #{tpu_custom_call.1} parent=1 // pred_check_branch
      %34 = sbr.rel (0) target = $region9
    $region8: #{tpu_custom_call.1} parent=1 // pred_region
      %s36 = ssub.s32 98304, 98304
      %37 = vsyncadd [#allocation6], %s36
      %s38 = sshll.u32 [#allocation5], 4
      %s39 = int_to_ptr.vmem [resolvable:$true] %s38
      %44 = dma.hbm_to_vmem [thread:$0]  %s1, 98304, %s39, [#allocation6], 256, 256, 16
    $region9: #{tpu_custom_call.1} parent=1 // pred_fallthru
      _
    // Predicated region
    $region10: #{tpu_custom_call.1} parent=1 // pred_check
      _
    $region11: #{tpu_custom_call.1} parent=1 // pred_check_branch
      %46 = sbr.rel (0) target = $region13
    $region12: #{tpu_custom_call.1} parent=1 // pred_region
      %s48 = ssub.s32 64, 64
      %49 = vsyncadd [#allocation6], %s48
      %s51 = sshll.u32 [#allocation7], 4
      %s52 = int_to_ptr.vmem [resolvable:$true] %s51
      %54 = dma.hbm_to_vmem [thread:$0]  %s2, 64, %s52, [#allocation6]
    $region13: #{tpu_custom_call.1} parent=1 // pred_fallthru
      _
    // Predicated region
    $region14: #{tpu_custom_call.1} parent=1 // pred_check
      _
    $region15: #{tpu_custom_call.1} parent=1 // pred_check_branch
      %56 = sbr.rel (0) target = $region17
    $region16: #{tpu_custom_call.1} parent=1 // pred_region
      %s58 = ssub.s32 8192, 8192
      %59 = vsyncadd [#allocation9], %s58
      %s60 = sshll.u32 [#allocation8], 4
      %s61 = int_to_ptr.vmem [resolvable:$true] %s60
      %66 = dma.hbm_to_vmem [thread:$0]  %s3, 8192, %s61, [#allocation9], 128, 128, 8
    $region17: #{tpu_custom_call.1} parent=1 // pred_fallthru
      _
    // Predicated region
    $region18: #{tpu_custom_call.1} parent=1 // pred_check
      _
    $region19: #{tpu_custom_call.1} parent=1 // pred_check_branch
      %68 = sbr.rel (0) target = $region21
    $region20: #{tpu_custom_call.1} parent=1 // pred_region
      %s70 = ssub.s32 32, 32
      %71 = vsyncadd [#allocation9], %s70
      %s73 = sshll.u32 [#allocation10], 4
      %s74 = int_to_ptr.vmem [resolvable:$true] %s73
      %76 = dma.hbm_to_vmem [thread:$0]  %s4, 32, %s74, [#allocation9]
    $region21: #{tpu_custom_call.1} parent=1 // pred_fallthru
      _
    // Predicated region
    $region22: #{tpu_custom_call.1} parent=1 // pred_check
      _
    $region23: #{tpu_custom_call.1} parent=1 // pred_check_branch
      %78 = sbr.rel (0) target = $region25
    $region24: #{tpu_custom_call.1} parent=1 // pred_region
      %s80 = ssub.s32 4096, 4096
      %81 = vsyncadd [#allocation12], %s80
      %s82 = sshll.u32 [#allocation11], 4
      %s83 = int_to_ptr.vmem [resolvable:$true] %s82
      %88 = dma.hbm_to_vmem [thread:$0]  %s5, 4096, %s83, [#allocation12], 128, 128, 8
    $region25: #{tpu_custom_call.1} parent=1 // pred_fallthru
      _
    // Predicated region
    $region26: #{tpu_custom_call.1} parent=1 // pred_check
      _
    $region27: #{tpu_custom_call.1} parent=1 // pred_check_branch
      %90 = sbr.rel (0) target = $region29
    $region28: #{tpu_custom_call.1} parent=1 // pred_region
      %s92 = ssub.s32 32, 32
      %93 = vsyncadd [#allocation12], %s92
      %s95 = sshll.u32 [#allocation13], 4
      %s96 = int_to_ptr.vmem [resolvable:$true] %s95
      %98 = dma.hbm_to_vmem [thread:$0]  %s6, 32, %s96, [#allocation12]
    $region29: #{tpu_custom_call.1} parent=1 // pred_fallthru
      _
    // Predicated region
    $region30: #{tpu_custom_call.1} parent=1 // pred_check
      _
    $region31: #{tpu_custom_call.1} parent=1 // pred_check_branch
      %100 = sbr.rel (0) target = $region33
    $region32: #{tpu_custom_call.1} parent=1 // pred_region
      %s102 = ssub.s32 4096, 4096
      %103 = vsyncadd [#allocation15], %s102
      %s104 = sshll.u32 [#allocation14], 4
      %s105 = int_to_ptr.vmem [resolvable:$true] %s104
      %110 = dma.hbm_to_vmem [thread:$0]  %s7, 4096, %s105, [#allocation15], 128, 128, 8
    $region33: #{tpu_custom_call.1} parent=1 // pred_fallthru
      _
    // Predicated region
    $region34: #{tpu_custom_call.1} parent=1 // pred_check
      _
    $region35: #{tpu_custom_call.1} parent=1 // pred_check_branch
      %112 = sbr.rel (0) target = $region37
    $region36: #{tpu_custom_call.1} parent=1 // pred_region
      %s114 = ssub.s32 32, 32
      %115 = vsyncadd [#allocation15], %s114
      %s117 = sshll.u32 [#allocation16], 4
      %s118 = int_to_ptr.vmem [resolvable:$true] %s117
      %120 = dma.hbm_to_vmem [thread:$0]  %s8, 32, %s118, [#allocation15]
    $region37: #{tpu_custom_call.1} parent=1 // pred_fallthru
      _
    // Predicated region
    $region38: #{tpu_custom_call.1} parent=1 // pred_check
      _
    $region39: #{tpu_custom_call.1} parent=1 // pred_check_branch
      %122 = sbr.rel (0) target = $region41
    $region40: #{tpu_custom_call.1} parent=1 // pred_region
      %s124 = ssub.s32 4096, 4096
      %125 = vsyncadd [#allocation18], %s124
      %s126 = sshll.u32 [#allocation17], 4
      %s127 = int_to_ptr.vmem [resolvable:$true] %s126
      %132 = dma.hbm_to_vmem [thread:$0]  %s9, 4096, %s127, [#allocation18], 128, 128, 8
    $region41: #{tpu_custom_call.1} parent=1 // pred_fallthru
      _
    // Predicated region
    $region42: #{tpu_custom_call.1} parent=1 // pred_check
      _
    $region43: #{tpu_custom_call.1} parent=1 // pred_check_branch
      %134 = sbr.rel (0) target = $region45
    $region44: #{tpu_custom_call.1} parent=1 // pred_region
      %s136 = ssub.s32 32, 32
      %137 = vsyncadd [#allocation18], %s136
      %s139 = sshll.u32 [#allocation19], 4
      %s140 = int_to_ptr.vmem [resolvable:$true] %s139
      %142 = dma.hbm_to_vmem [thread:$0]  %s10, 32, %s140, [#allocation18]
    $region45: #{tpu_custom_call.1} parent=1 // pred_fallthru
      _
    // Predicated region
    $region46: #{tpu_custom_call.1} parent=1 // pred_check
      _
    $region47: #{tpu_custom_call.1} parent=1 // pred_check_branch
      %144 = sbr.rel (0) target = $region49
    $region48: #{tpu_custom_call.1} parent=1 // pred_region
      %145 = dma.done [#allocation3], 3072
    $region49: #{tpu_custom_call.1} parent=1 // pred_fallthru
      _
    // Predicated region
    $region50: #{tpu_custom_call.1} parent=1 // pred_check
      _
    $region51: #{tpu_custom_call.1} parent=1 // pred_check_branch
      %147 = sbr.rel (0) target = $region53
    $region52: #{tpu_custom_call.1} parent=1 // pred_region
      %148 = dma.done [#allocation6], 98304
    $region53: #{tpu_custom_call.1} parent=1 // pred_fallthru
      _
    // Predicated region
    $region54: #{tpu_custom_call.1} parent=1 // pred_check
      _
    $region55: #{tpu_custom_call.1} parent=1 // pred_check_branch
      %150 = sbr.rel (0) target = $region57
    $region56: #{tpu_custom_call.1} parent=1 // pred_region
      %151 = dma.done [#allocation6], 64
    $region57: #{tpu_custom_call.1} parent=1 // pred_fallthru
      _
    // Predicated region
    $region58: #{tpu_custom_call.1} parent=1 // pred_check
      _
    $region59: #{tpu_custom_call.1} parent=1 // pred_check_branch
      %153 = sbr.rel (0) target = $region61
    $region60: #{tpu_custom_call.1} parent=1 // pred_region
      %154 = dma.done [#allocation9], 8192
    $region61: #{tpu_custom_call.1} parent=1 // pred_fallthru
      _
    // Predicated region
    $region62: #{tpu_custom_call.1} parent=1 // pred_check
      _
    $region63: #{tpu_custom_call.1} parent=1 // pred_check_branch
      %156 = sbr.rel (0) target = $region65
    $region64: #{tpu_custom_call.1} parent=1 // pred_region
      %157 = dma.done [#allocation9], 32
    $region65: #{tpu_custom_call.1} parent=1 // pred_fallthru
      _
    // Predicated region
    $region66: #{tpu_custom_call.1} parent=1 // pred_check
      _
    $region67: #{tpu_custom_call.1} parent=1 // pred_check_branch
      %159 = sbr.rel (0) target = $region69
    $region68: #{tpu_custom_call.1} parent=1 // pred_region
      %160 = dma.done [#allocation12], 4096
    $region69: #{tpu_custom_call.1} parent=1 // pred_fallthru
      _
    // Predicated region
    $region70: #{tpu_custom_call.1} parent=1 // pred_check
      _
    $region71: #{tpu_custom_call.1} parent=1 // pred_check_branch
      %162 = sbr.rel (0) target = $region73
    $region72: #{tpu_custom_call.1} parent=1 // pred_region
      %163 = dma.done [#allocation12], 32
    $region73: #{tpu_custom_call.1} parent=1 // pred_fallthru
      _
    // Predicated region
    $region74: #{tpu_custom_call.1} parent=1 // pred_check
      _
    $region75: #{tpu_custom_call.1} parent=1 // pred_check_branch
      %165 = sbr.rel (0) target = $region77
    $region76: #{tpu_custom_call.1} parent=1 // pred_region
      %166 = dma.done [#allocation15], 4096
    $region77: #{tpu_custom_call.1} parent=1 // pred_fallthru
      _
    // Predicated region
    $region78: #{tpu_custom_call.1} parent=1 // pred_check
      _
    $region79: #{tpu_custom_call.1} parent=1 // pred_check_branch
      %168 = sbr.rel (0) target = $region81
    $region80: #{tpu_custom_call.1} parent=1 // pred_region
      %169 = dma.done [#allocation15], 32
    $region81: #{tpu_custom_call.1} parent=1 // pred_fallthru
      _
    // Predicated region
    $region82: #{tpu_custom_call.1} parent=1 // pred_check
      _
    $region83: #{tpu_custom_call.1} parent=1 // pred_check_branch
      %171 = sbr.rel (0) target = $region85
    $region84: #{tpu_custom_call.1} parent=1 // pred_region
      %172 = dma.done [#allocation18], 4096
    $region85: #{tpu_custom_call.1} parent=1 // pred_fallthru
      _
    // Predicated region
    $region86: #{tpu_custom_call.1} parent=1 // pred_check
      _
    $region87: #{tpu_custom_call.1} parent=1 // pred_check_branch
      %174 = sbr.rel (0) target = $region89
    $region88: #{tpu_custom_call.1} parent=1 // pred_region
      %175 = dma.done [#allocation18], 32
    $region89: #{tpu_custom_call.1} parent=1 // pred_fallthru
      _
    %v176 = vld [vmem:[#allocation2] sm:$0xff]
    %v177 = vld [vmem:[#allocation2 + $0x8] sm:$0xff]
    %v178 = vld [vmem:[#allocation2 + $0x10] sm:$0xff]
    %v179 = vld [vmem:[#allocation2 + $0x18] sm:$0xff]
    %v180 = vld [vmem:[#allocation2 + $0x20] sm:$0xff]
    %v181 = vld [vmem:[#allocation2 + $0x28] sm:$0xff]
    %v182 = vld [vmem:[#allocation2 + $0x30] sm:$0xff]
    %v183 = vld [vmem:[#allocation2 + $0x38] sm:$0xff]
    %v184 = vld [vmem:[#allocation2 + $0x40] sm:$0xff]
    %v185 = vld [vmem:[#allocation2 + $0x48] sm:$0xff]
    %v186 = vld [vmem:[#allocation2 + $0x50] sm:$0xff]
    %v187 = vld [vmem:[#allocation2 + $0x58] sm:$0xff]
    %v188 = vld [vmem:[#allocation2 + $0x60] sm:$0xff]
    %v189 = vld [vmem:[#allocation2 + $0x68] sm:$0xff]
    %v190 = vld [vmem:[#allocation2 + $0x70] sm:$0xff]
    %v191 = vld [vmem:[#allocation2 + $0x78] sm:$0xff]
    %v192 = vld [vmem:[#allocation2 + $0x80] sm:$0xff]
    %v193 = vld [vmem:[#allocation2 + $0x88] sm:$0xff]
    %v194 = vld [vmem:[#allocation2 + $0x90] sm:$0xff]
    %v195 = vld [vmem:[#allocation2 + $0x98] sm:$0xff]
    %v196 = vld [vmem:[#allocation2 + $0xa0] sm:$0xff]
    %v197 = vld [vmem:[#allocation2 + $0xa8] sm:$0xff]
    %v198 = vld [vmem:[#allocation2 + $0xb0] sm:$0xff]
    %v199 = vld [vmem:[#allocation2 + $0xb8] sm:$0xff]
    %v200 = vpack.c.bf16 %v176, %v176
    %v201 = vpack.c.bf16 %v177, %v177
    %v202 = vpack.c.bf16 %v178, %v178
    %v203 = vpack.c.bf16 %v179, %v179
    %v204 = vpack.c.bf16 %v180, %v180
    %v205 = vpack.c.bf16 %v181, %v181
    %v206 = vpack.c.bf16 %v182, %v182
    %v207 = vpack.c.bf16 %v183, %v183
    %v208 = vpack.c.bf16 %v184, %v184
    %v209 = vpack.c.bf16 %v185, %v185
    %v210 = vpack.c.bf16 %v186, %v186
    %v211 = vpack.c.bf16 %v187, %v187
    %v212 = vpack.c.bf16 %v188, %v188
    %v213 = vpack.c.bf16 %v189, %v189
    %v214 = vpack.c.bf16 %v190, %v190
    %v215 = vpack.c.bf16 %v191, %v191
    %v216 = vpack.c.bf16 %v192, %v192
    %v217 = vpack.c.bf16 %v193, %v193
    %v218 = vpack.c.bf16 %v194, %v194
    %v219 = vpack.c.bf16 %v195, %v195
    %v220 = vpack.c.bf16 %v196, %v196
    %v221 = vpack.c.bf16 %v197, %v197
    %v222 = vpack.c.bf16 %v198, %v198
    %v223 = vpack.c.bf16 %v199, %v199
    %v224 = vld [vmem:[#allocation5] sm:$0xff]
    %v225 = vld [vmem:[#allocation5 + $0x8] sm:$0xff]
    %v226 = vld [vmem:[#allocation5 + $0x10] sm:$0xff]
    %v227 = vld [vmem:[#allocation5 + $0x18] sm:$0xff]
    %v228 = vld [vmem:[#allocation5 + $0x20] sm:$0xff]
    %v229 = vld [vmem:[#allocation5 + $0x28] sm:$0xff]
    %v230 = vld [vmem:[#allocation5 + $0x30] sm:$0xff]
    %v231 = vld [vmem:[#allocation5 + $0x38] sm:$0xff]
    %v232 = vld [vmem:[#allocation5 + $0x40] sm:$0xff]
    %v233 = vld [vmem:[#allocation5 + $0x48] sm:$0xff]
    %v234 = vld [vmem:[#allocation5 + $0x50] sm:$0xff]
    %v235 = vld [vmem:[#allocation5 + $0x58] sm:$0xff]
    %v236 = vld [vmem:[#allocation5 + $0x60] sm:$0xff]
    %v237 = vld [vmem:[#allocation5 + $0x68] sm:$0xff]
    %v238 = vld [vmem:[#allocation5 + $0x70] sm:$0xff]
    %v239 = vld [vmem:[#allocation5 + $0x78] sm:$0xff]
    %v240 = vld [vmem:[#allocation5 + $0x80] sm:$0xff]
    %v241 = vld [vmem:[#allocation5 + $0x88] sm:$0xff]
    %v242 = vld [vmem:[#allocation5 + $0x90] sm:$0xff]
    %v243 = vld [vmem:[#allocation5 + $0x98] sm:$0xff]
    %v244 = vld [vmem:[#allocation5 + $0xa0] sm:$0xff]
    %v245 = vld [vmem:[#allocation5 + $0xa8] sm:$0xff]
    %v246 = vld [vmem:[#allocation5 + $0xb0] sm:$0xff]
    %v247 = vld [vmem:[#allocation5 + $0xb8] sm:$0xff]
    %v248 = vld [vmem:[#allocation5 + $0xc0] sm:$0xff]
    %v249 = vld [vmem:[#allocation5 + $0xc8] sm:$0xff]
    %v250 = vld [vmem:[#allocation5 + $0xd0] sm:$0xff]
    %v251 = vld [vmem:[#allocation5 + $0xd8] sm:$0xff]
    %v252 = vld [vmem:[#allocation5 + $0xe0] sm:$0xff]
    %v253 = vld [vmem:[#allocation5 + $0xe8] sm:$0xff]
    %v254 = vld [vmem:[#allocation5 + $0xf0] sm:$0xff]
    %v255 = vld [vmem:[#allocation5 + $0xf8] sm:$0xff]
    %v256 = vld [vmem:[#allocation5 + $0x100] sm:$0xff]
    %v257 = vld [vmem:[#allocation5 + $0x108] sm:$0xff]
    %v258 = vld [vmem:[#allocation5 + $0x110] sm:$0xff]
    %v259 = vld [vmem:[#allocation5 + $0x118] sm:$0xff]
    %v260 = vld [vmem:[#allocation5 + $0x120] sm:$0xff]
    %v261 = vld [vmem:[#allocation5 + $0x128] sm:$0xff]
    %v262 = vld [vmem:[#allocation5 + $0x130] sm:$0xff]
    %v263 = vld [vmem:[#allocation5 + $0x138] sm:$0xff]
    %v264 = vld [vmem:[#allocation5 + $0x140] sm:$0xff]
    %v265 = vld [vmem:[#allocation5 + $0x148] sm:$0xff]
    %v266 = vld [vmem:[#allocation5 + $0x150] sm:$0xff]
    %v267 = vld [vmem:[#allocation5 + $0x158] sm:$0xff]
    %v268 = vld [vmem:[#allocation5 + $0x160] sm:$0xff]
    %v269 = vld [vmem:[#allocation5 + $0x168] sm:$0xff]
    %v270 = vld [vmem:[#allocation5 + $0x170] sm:$0xff]
    %v271 = vld [vmem:[#allocation5 + $0x178] sm:$0xff]
    %v272 = vld [vmem:[#allocation5 + $0x180] sm:$0xff]
    %v273 = vld [vmem:[#allocation5 + $0x188] sm:$0xff]
    %v274 = vld [vmem:[#allocation5 + $0x190] sm:$0xff]
    %v275 = vld [vmem:[#allocation5 + $0x198] sm:$0xff]
    %v276 = vld [vmem:[#allocation5 + $0x1a0] sm:$0xff]
    %v277 = vld [vmem:[#allocation5 + $0x1a8] sm:$0xff]
    %v278 = vld [vmem:[#allocation5 + $0x1b0] sm:$0xff]
    %v279 = vld [vmem:[#allocation5 + $0x1b8] sm:$0xff]
    %v280 = vld [vmem:[#allocation5 + $0x1c0] sm:$0xff]
    %v281 = vld [vmem:[#allocation5 + $0x1c8] sm:$0xff]
    %v282 = vld [vmem:[#allocation5 + $0x1d0] sm:$0xff]
    %v283 = vld [vmem:[#allocation5 + $0x1d8] sm:$0xff]
    %v284 = vld [vmem:[#allocation5 + $0x1e0] sm:$0xff]
    %v285 = vld [vmem:[#allocation5 + $0x1e8] sm:$0xff]
    %v286 = vld [vmem:[#allocation5 + $0x1f0] sm:$0xff]
    %v287 = vld [vmem:[#allocation5 + $0x1f8] sm:$0xff]
    %v288 = vld [vmem:[#allocation5 + $0x200] sm:$0xff]
    %v289 = vld [vmem:[#allocation5 + $0x208] sm:$0xff]
    %v290 = vld [vmem:[#allocation5 + $0x210] sm:$0xff]
    %v291 = vld [vmem:[#allocation5 + $0x218] sm:$0xff]
    %v292 = vld [vmem:[#allocation5 + $0x220] sm:$0xff]
    %v293 = vld [vmem:[#allocation5 + $0x228] sm:$0xff]
    %v294 = vld [vmem:[#allocation5 + $0x230] sm:$0xff]
    %v295 = vld [vmem:[#allocation5 + $0x238] sm:$0xff]
    %v296 = vld [vmem:[#allocation5 + $0x240] sm:$0xff]
    %v297 = vld [vmem:[#allocation5 + $0x248] sm:$0xff]
    %v298 = vld [vmem:[#allocation5 + $0x250] sm:$0xff]
    %v299 = vld [vmem:[#allocation5 + $0x258] sm:$0xff]
    %v300 = vld [vmem:[#allocation5 + $0x260] sm:$0xff]
    %v301 = vld [vmem:[#allocation5 + $0x268] sm:$0xff]
    %v302 = vld [vmem:[#allocation5 + $0x270] sm:$0xff]
    %v303 = vld [vmem:[#allocation5 + $0x278] sm:$0xff]
    %v304 = vld [vmem:[#allocation5 + $0x280] sm:$0xff]
    %v305 = vld [vmem:[#allocation5 + $0x288] sm:$0xff]
    %v306 = vld [vmem:[#allocation5 + $0x290] sm:$0xff]
    %v307 = vld [vmem:[#allocation5 + $0x298] sm:$0xff]
    %v308 = vld [vmem:[#allocation5 + $0x2a0] sm:$0xff]
    %v309 = vld [vmem:[#allocation5 + $0x2a8] sm:$0xff]
    %v310 = vld [vmem:[#allocation5 + $0x2b0] sm:$0xff]
    %v311 = vld [vmem:[#allocation5 + $0x2b8] sm:$0xff]
    %v312 = vld [vmem:[#allocation5 + $0x2c0] sm:$0xff]
    %v313 = vld [vmem:[#allocation5 + $0x2c8] sm:$0xff]
    %v314 = vld [vmem:[#allocation5 + $0x2d0] sm:$0xff]
    %v315 = vld [vmem:[#allocation5 + $0x2d8] sm:$0xff]
    %v316 = vld [vmem:[#allocation5 + $0x2e0] sm:$0xff]
    %v317 = vld [vmem:[#allocation5 + $0x2e8] sm:$0xff]
    %v318 = vld [vmem:[#allocation5 + $0x2f0] sm:$0xff]
    %v319 = vld [vmem:[#allocation5 + $0x2f8] sm:$0xff]
    %v320 = vld [vmem:[#allocation5 + $0x300] sm:$0xff]
    %v321 = vld [vmem:[#allocation5 + $0x308] sm:$0xff]
    %v322 = vld [vmem:[#allocation5 + $0x310] sm:$0xff]
    %v323 = vld [vmem:[#allocation5 + $0x318] sm:$0xff]
    %v324 = vld [vmem:[#allocation5 + $0x320] sm:$0xff]
    %v325 = vld [vmem:[#allocation5 + $0x328] sm:$0xff]
    %v326 = vld [vmem:[#allocation5 + $0x330] sm:$0xff]
    %v327 = vld [vmem:[#allocation5 + $0x338] sm:$0xff]
    %v328 = vld [vmem:[#allocation5 + $0x340] sm:$0xff]
    %v329 = vld [vmem:[#allocation5 + $0x348] sm:$0xff]
    %v330 = vld [vmem:[#allocation5 + $0x350] sm:$0xff]
    %v331 = vld [vmem:[#allocation5 + $0x358] sm:$0xff]
    %v332 = vld [vmem:[#allocation5 + $0x360] sm:$0xff]
    %v333 = vld [vmem:[#allocation5 + $0x368] sm:$0xff]
    %v334 = vld [vmem:[#allocation5 + $0x370] sm:$0xff]
    %v335 = vld [vmem:[#allocation5 + $0x378] sm:$0xff]
    %v336 = vld [vmem:[#allocation5 + $0x380] sm:$0xff]
    %v337 = vld [vmem:[#allocation5 + $0x388] sm:$0xff]
    %v338 = vld [vmem:[#allocation5 + $0x390] sm:$0xff]
    %v339 = vld [vmem:[#allocation5 + $0x398] sm:$0xff]
    %v340 = vld [vmem:[#allocation5 + $0x3a0] sm:$0xff]
    %v341 = vld [vmem:[#allocation5 + $0x3a8] sm:$0xff]
    %v342 = vld [vmem:[#allocation5 + $0x3b0] sm:$0xff]
    %v343 = vld [vmem:[#allocation5 + $0x3b8] sm:$0xff]
    %v344 = vld [vmem:[#allocation5 + $0x3c0] sm:$0xff]
    %v345 = vld [vmem:[#allocation5 + $0x3c8] sm:$0xff]
    %v346 = vld [vmem:[#allocation5 + $0x3d0] sm:$0xff]
    %v347 = vld [vmem:[#allocation5 + $0x3d8] sm:$0xff]
    %v348 = vld [vmem:[#allocation5 + $0x3e0] sm:$0xff]
    %v349 = vld [vmem:[#allocation5 + $0x3e8] sm:$0xff]
    %v350 = vld [vmem:[#allocation5 + $0x3f0] sm:$0xff]
    %v351 = vld [vmem:[#allocation5 + $0x3f8] sm:$0xff]
    %v352 = vld [vmem:[#allocation5 + $0x400] sm:$0xff]
    %v353 = vld [vmem:[#allocation5 + $0x408] sm:$0xff]
    %v354 = vld [vmem:[#allocation5 + $0x410] sm:$0xff]
    %v355 = vld [vmem:[#allocation5 + $0x418] sm:$0xff]
    %v356 = vld [vmem:[#allocation5 + $0x420] sm:$0xff]
    %v357 = vld [vmem:[#allocation5 + $0x428] sm:$0xff]
    %v358 = vld [vmem:[#allocation5 + $0x430] sm:$0xff]
    %v359 = vld [vmem:[#allocation5 + $0x438] sm:$0xff]
    %v360 = vld [vmem:[#allocation5 + $0x440] sm:$0xff]
    %v361 = vld [vmem:[#allocation5 + $0x448] sm:$0xff]
    %v362 = vld [vmem:[#allocation5 + $0x450] sm:$0xff]
    %v363 = vld [vmem:[#allocation5 + $0x458] sm:$0xff]
    %v364 = vld [vmem:[#allocation5 + $0x460] sm:$0xff]
    %v365 = vld [vmem:[#allocation5 + $0x468] sm:$0xff]
    %v366 = vld [vmem:[#allocation5 + $0x470] sm:$0xff]
    %v367 = vld [vmem:[#allocation5 + $0x478] sm:$0xff]
    %v368 = vld [vmem:[#allocation5 + $0x480] sm:$0xff]
    %v369 = vld [vmem:[#allocation5 + $0x488] sm:$0xff]
    %v370 = vld [vmem:[#allocation5 + $0x490] sm:$0xff]
    %v371 = vld [vmem:[#allocation5 + $0x498] sm:$0xff]
    %v372 = vld [vmem:[#allocation5 + $0x4a0] sm:$0xff]
    %v373 = vld [vmem:[#allocation5 + $0x4a8] sm:$0xff]
    %v374 = vld [vmem:[#allocation5 + $0x4b0] sm:$0xff]
    %v375 = vld [vmem:[#allocation5 + $0x4b8] sm:$0xff]
    %v376 = vld [vmem:[#allocation5 + $0x4c0] sm:$0xff]
    %v377 = vld [vmem:[#allocation5 + $0x4c8] sm:$0xff]
    %v378 = vld [vmem:[#allocation5 + $0x4d0] sm:$0xff]
    %v379 = vld [vmem:[#allocation5 + $0x4d8] sm:$0xff]
    %v380 = vld [vmem:[#allocation5 + $0x4e0] sm:$0xff]
    %v381 = vld [vmem:[#allocation5 + $0x4e8] sm:$0xff]
    %v382 = vld [vmem:[#allocation5 + $0x4f0] sm:$0xff]
    %v383 = vld [vmem:[#allocation5 + $0x4f8] sm:$0xff]
    %v384 = vld [vmem:[#allocation5 + $0x500] sm:$0xff]
    %v385 = vld [vmem:[#allocation5 + $0x508] sm:$0xff]
    %v386 = vld [vmem:[#allocation5 + $0x510] sm:$0xff]
    %v387 = vld [vmem:[#allocation5 + $0x518] sm:$0xff]
    %v388 = vld [vmem:[#allocation5 + $0x520] sm:$0xff]
    %v389 = vld [vmem:[#allocation5 + $0x528] sm:$0xff]
    %v390 = vld [vmem:[#allocation5 + $0x530] sm:$0xff]
    %v391 = vld [vmem:[#allocation5 + $0x538] sm:$0xff]
    %v392 = vld [vmem:[#allocation5 + $0x540] sm:$0xff]
    %v393 = vld [vmem:[#allocation5 + $0x548] sm:$0xff]
    %v394 = vld [vmem:[#allocation5 + $0x550] sm:$0xff]
    %v395 = vld [vmem:[#allocation5 + $0x558] sm:$0xff]
    %v396 = vld [vmem:[#allocation5 + $0x560] sm:$0xff]
    %v397 = vld [vmem:[#allocation5 + $0x568] sm:$0xff]
    %v398 = vld [vmem:[#allocation5 + $0x570] sm:$0xff]
    %v399 = vld [vmem:[#allocation5 + $0x578] sm:$0xff]
    %v400 = vld [vmem:[#allocation5 + $0x580] sm:$0xff]
    %v401 = vld [vmem:[#allocation5 + $0x588] sm:$0xff]
    %v402 = vld [vmem:[#allocation5 + $0x590] sm:$0xff]
    %v403 = vld [vmem:[#allocation5 + $0x598] sm:$0xff]
    %v404 = vld [vmem:[#allocation5 + $0x5a0] sm:$0xff]
    %v405 = vld [vmem:[#allocation5 + $0x5a8] sm:$0xff]
    %v406 = vld [vmem:[#allocation5 + $0x5b0] sm:$0xff]
    %v407 = vld [vmem:[#allocation5 + $0x5b8] sm:$0xff]
    %v408 = vld [vmem:[#allocation5 + $0x5c0] sm:$0xff]
    %v409 = vld [vmem:[#allocation5 + $0x5c8] sm:$0xff]
    %v410 = vld [vmem:[#allocation5 + $0x5d0] sm:$0xff]
    %v411 = vld [vmem:[#allocation5 + $0x5d8] sm:$0xff]
    %v412 = vld [vmem:[#allocation5 + $0x5e0] sm:$0xff]
    %v413 = vld [vmem:[#allocation5 + $0x5e8] sm:$0xff]
    %v414 = vld [vmem:[#allocation5 + $0x5f0] sm:$0xff]
    %v415 = vld [vmem:[#allocation5 + $0x5f8] sm:$0xff]
    %v416 = vld [vmem:[#allocation5 + $0x600] sm:$0xff]
    %v417 = vld [vmem:[#allocation5 + $0x608] sm:$0xff]
    %v418 = vld [vmem:[#allocation5 + $0x610] sm:$0xff]
    %v419 = vld [vmem:[#allocation5 + $0x618] sm:$0xff]
    %v420 = vld [vmem:[#allocation5 + $0x620] sm:$0xff]
    %v421 = vld [vmem:[#allocation5 + $0x628] sm:$0xff]
    %v422 = vld [vmem:[#allocation5 + $0x630] sm:$0xff]
    %v423 = vld [vmem:[#allocation5 + $0x638] sm:$0xff]
    %v424 = vld [vmem:[#allocation5 + $0x640] sm:$0xff]
    %v425 = vld [vmem:[#allocation5 + $0x648] sm:$0xff]
    %v426 = vld [vmem:[#allocation5 + $0x650] sm:$0xff]
    %v427 = vld [vmem:[#allocation5 + $0x658] sm:$0xff]
    %v428 = vld [vmem:[#allocation5 + $0x660] sm:$0xff]
    %v429 = vld [vmem:[#allocation5 + $0x668] sm:$0xff]
    %v430 = vld [vmem:[#allocation5 + $0x670] sm:$0xff]
    %v431 = vld [vmem:[#allocation5 + $0x678] sm:$0xff]
    %v432 = vld [vmem:[#allocation5 + $0x680] sm:$0xff]
    %v433 = vld [vmem:[#allocation5 + $0x688] sm:$0xff]
    %v434 = vld [vmem:[#allocation5 + $0x690] sm:$0xff]
    %v435 = vld [vmem:[#allocation5 + $0x698] sm:$0xff]
    %v436 = vld [vmem:[#allocation5 + $0x6a0] sm:$0xff]
    %v437 = vld [vmem:[#allocation5 + $0x6a8] sm:$0xff]
    %v438 = vld [vmem:[#allocation5 + $0x6b0] sm:$0xff]
    %v439 = vld [vmem:[#allocation5 + $0x6b8] sm:$0xff]
    %v440 = vld [vmem:[#allocation5 + $0x6c0] sm:$0xff]
    %v441 = vld [vmem:[#allocation5 + $0x6c8] sm:$0xff]
    %v442 = vld [vmem:[#allocation5 + $0x6d0] sm:$0xff]
    %v443 = vld [vmem:[#allocation5 + $0x6d8] sm:$0xff]
    %v444 = vld [vmem:[#allocation5 + $0x6e0] sm:$0xff]
    %v445 = vld [vmem:[#allocation5 + $0x6e8] sm:$0xff]
    %v446 = vld [vmem:[#allocation5 + $0x6f0] sm:$0xff]
    %v447 = vld [vmem:[#allocation5 + $0x6f8] sm:$0xff]
    %v448 = vld [vmem:[#allocation5 + $0x700] sm:$0xff]
    %v449 = vld [vmem:[#allocation5 + $0x708] sm:$0xff]
    %v450 = vld [vmem:[#allocation5 + $0x710] sm:$0xff]
    %v451 = vld [vmem:[#allocation5 + $0x718] sm:$0xff]
    %v452 = vld [vmem:[#allocation5 + $0x720] sm:$0xff]
    %v453 = vld [vmem:[#allocation5 + $0x728] sm:$0xff]
    %v454 = vld [vmem:[#allocation5 + $0x730] sm:$0xff]
    %v455 = vld [vmem:[#allocation5 + $0x738] sm:$0xff]
    %v456 = vld [vmem:[#allocation5 + $0x740] sm:$0xff]
    %v457 = vld [vmem:[#allocation5 + $0x748] sm:$0xff]
    %v458 = vld [vmem:[#allocation5 + $0x750] sm:$0xff]
    %v459 = vld [vmem:[#allocation5 + $0x758] sm:$0xff]
    %v460 = vld [vmem:[#allocation5 + $0x760] sm:$0xff]
    %v461 = vld [vmem:[#allocation5 + $0x768] sm:$0xff]
    %v462 = vld [vmem:[#allocation5 + $0x770] sm:$0xff]
    %v463 = vld [vmem:[#allocation5 + $0x778] sm:$0xff]
    %v464 = vld [vmem:[#allocation5 + $0x780] sm:$0xff]
    %v465 = vld [vmem:[#allocation5 + $0x788] sm:$0xff]
    %v466 = vld [vmem:[#allocation5 + $0x790] sm:$0xff]
    %v467 = vld [vmem:[#allocation5 + $0x798] sm:$0xff]
    %v468 = vld [vmem:[#allocation5 + $0x7a0] sm:$0xff]
    %v469 = vld [vmem:[#allocation5 + $0x7a8] sm:$0xff]
    %v470 = vld [vmem:[#allocation5 + $0x7b0] sm:$0xff]
    %v471 = vld [vmem:[#allocation5 + $0x7b8] sm:$0xff]
    %v472 = vld [vmem:[#allocation5 + $0x7c0] sm:$0xff]
    %v473 = vld [vmem:[#allocation5 + $0x7c8] sm:$0xff]
    %v474 = vld [vmem:[#allocation5 + $0x7d0] sm:$0xff]
    %v475 = vld [vmem:[#allocation5 + $0x7d8] sm:$0xff]
    %v476 = vld [vmem:[#allocation5 + $0x7e0] sm:$0xff]
    %v477 = vld [vmem:[#allocation5 + $0x7e8] sm:$0xff]
    %v478 = vld [vmem:[#allocation5 + $0x7f0] sm:$0xff]
    %v479 = vld [vmem:[#allocation5 + $0x7f8] sm:$0xff]
    %v480 = vld [vmem:[#allocation5 + $0x800] sm:$0xff]
    %v481 = vld [vmem:[#allocation5 + $0x808] sm:$0xff]
    %v482 = vld [vmem:[#allocation5 + $0x810] sm:$0xff]
    %v483 = vld [vmem:[#allocation5 + $0x818] sm:$0xff]
    %v484 = vld [vmem:[#allocation5 + $0x820] sm:$0xff]
    %v485 = vld [vmem:[#allocation5 + $0x828] sm:$0xff]
    %v486 = vld [vmem:[#allocation5 + $0x830] sm:$0xff]
    %v487 = vld [vmem:[#allocation5 + $0x838] sm:$0xff]
    %v488 = vld [vmem:[#allocation5 + $0x840] sm:$0xff]
    %v489 = vld [vmem:[#allocation5 + $0x848] sm:$0xff]
    %v490 = vld [vmem:[#allocation5 + $0x850] sm:$0xff]
    %v491 = vld [vmem:[#allocation5 + $0x858] sm:$0xff]
    %v492 = vld [vmem:[#allocation5 + $0x860] sm:$0xff]
    %v493 = vld [vmem:[#allocation5 + $0x868] sm:$0xff]
    %v494 = vld [vmem:[#allocation5 + $0x870] sm:$0xff]
    %v495 = vld [vmem:[#allocation5 + $0x878] sm:$0xff]
    %v496 = vld [vmem:[#allocation5 + $0x880] sm:$0xff]
    %v497 = vld [vmem:[#allocation5 + $0x888] sm:$0xff]
    %v498 = vld [vmem:[#allocation5 + $0x890] sm:$0xff]
    %v499 = vld [vmem:[#allocation5 + $0x898] sm:$0xff]
    %v500 = vld [vmem:[#allocation5 + $0x8a0] sm:$0xff]
    %v501 = vld [vmem:[#allocation5 + $0x8a8] sm:$0xff]
    %v502 = vld [vmem:[#allocation5 + $0x8b0] sm:$0xff]
    %v503 = vld [vmem:[#allocation5 + $0x8b8] sm:$0xff]
    %v504 = vld [vmem:[#allocation5 + $0x8c0] sm:$0xff]
    %v505 = vld [vmem:[#allocation5 + $0x8c8] sm:$0xff]
    %v506 = vld [vmem:[#allocation5 + $0x8d0] sm:$0xff]
    %v507 = vld [vmem:[#allocation5 + $0x8d8] sm:$0xff]
    %v508 = vld [vmem:[#allocation5 + $0x8e0] sm:$0xff]
    %v509 = vld [vmem:[#allocation5 + $0x8e8] sm:$0xff]
    %v510 = vld [vmem:[#allocation5 + $0x8f0] sm:$0xff]
    %v511 = vld [vmem:[#allocation5 + $0x8f8] sm:$0xff]
    %v512 = vld [vmem:[#allocation5 + $0x900] sm:$0xff]
    %v513 = vld [vmem:[#allocation5 + $0x908] sm:$0xff]
    %v514 = vld [vmem:[#allocation5 + $0x910] sm:$0xff]
    %v515 = vld [vmem:[#allocation5 + $0x918] sm:$0xff]
    %v516 = vld [vmem:[#allocation5 + $0x920] sm:$0xff]
    %v517 = vld [vmem:[#allocation5 + $0x928] sm:$0xff]
    %v518 = vld [vmem:[#allocation5 + $0x930] sm:$0xff]
    %v519 = vld [vmem:[#allocation5 + $0x938] sm:$0xff]
    %v520 = vld [vmem:[#allocation5 + $0x940] sm:$0xff]
    %v521 = vld [vmem:[#allocation5 + $0x948] sm:$0xff]
    %v522 = vld [vmem:[#allocation5 + $0x950] sm:$0xff]
    %v523 = vld [vmem:[#allocation5 + $0x958] sm:$0xff]
    %v524 = vld [vmem:[#allocation5 + $0x960] sm:$0xff]
    %v525 = vld [vmem:[#allocation5 + $0x968] sm:$0xff]
    %v526 = vld [vmem:[#allocation5 + $0x970] sm:$0xff]
    %v527 = vld [vmem:[#allocation5 + $0x978] sm:$0xff]
    %v528 = vld [vmem:[#allocation5 + $0x980] sm:$0xff]
    %v529 = vld [vmem:[#allocation5 + $0x988] sm:$0xff]
    %v530 = vld [vmem:[#allocation5 + $0x990] sm:$0xff]
    %v531 = vld [vmem:[#allocation5 + $0x998] sm:$0xff]
    %v532 = vld [vmem:[#allocation5 + $0x9a0] sm:$0xff]
    %v533 = vld [vmem:[#allocation5 + $0x9a8] sm:$0xff]
    %v534 = vld [vmem:[#allocation5 + $0x9b0] sm:$0xff]
    %v535 = vld [vmem:[#allocation5 + $0x9b8] sm:$0xff]
    %v536 = vld [vmem:[#allocation5 + $0x9c0] sm:$0xff]
    %v537 = vld [vmem:[#allocation5 + $0x9c8] sm:$0xff]
    %v538 = vld [vmem:[#allocation5 + $0x9d0] sm:$0xff]
    %v539 = vld [vmem:[#allocation5 + $0x9d8] sm:$0xff]
    %v540 = vld [vmem:[#allocation5 + $0x9e0] sm:$0xff]
    %v541 = vld [vmem:[#allocation5 + $0x9e8] sm:$0xff]
    %v542 = vld [vmem:[#allocation5 + $0x9f0] sm:$0xff]
    %v543 = vld [vmem:[#allocation5 + $0x9f8] sm:$0xff]
    %v544 = vld [vmem:[#allocation5 + $0xa00] sm:$0xff]
    %v545 = vld [vmem:[#allocation5 + $0xa08] sm:$0xff]
    %v546 = vld [vmem:[#allocation5 + $0xa10] sm:$0xff]
    %v547 = vld [vmem:[#allocation5 + $0xa18] sm:$0xff]
    %v548 = vld [vmem:[#allocation5 + $0xa20] sm:$0xff]
    %v549 = vld [vmem:[#allocation5 + $0xa28] sm:$0xff]
    %v550 = vld [vmem:[#allocation5 + $0xa30] sm:$0xff]
    %v551 = vld [vmem:[#allocation5 + $0xa38] sm:$0xff]
    %v552 = vld [vmem:[#allocation5 + $0xa40] sm:$0xff]
    %v553 = vld [vmem:[#allocation5 + $0xa48] sm:$0xff]
    %v554 = vld [vmem:[#allocation5 + $0xa50] sm:$0xff]
    %v555 = vld [vmem:[#allocation5 + $0xa58] sm:$0xff]
    %v556 = vld [vmem:[#allocation5 + $0xa60] sm:$0xff]
    %v557 = vld [vmem:[#allocation5 + $0xa68] sm:$0xff]
    %v558 = vld [vmem:[#allocation5 + $0xa70] sm:$0xff]
    %v559 = vld [vmem:[#allocation5 + $0xa78] sm:$0xff]
    %v560 = vld [vmem:[#allocation5 + $0xa80] sm:$0xff]
    %v561 = vld [vmem:[#allocation5 + $0xa88] sm:$0xff]
    %v562 = vld [vmem:[#allocation5 + $0xa90] sm:$0xff]
    %v563 = vld [vmem:[#allocation5 + $0xa98] sm:$0xff]
    %v564 = vld [vmem:[#allocation5 + $0xaa0] sm:$0xff]
    %v565 = vld [vmem:[#allocation5 + $0xaa8] sm:$0xff]
    %v566 = vld [vmem:[#allocation5 + $0xab0] sm:$0xff]
    %v567 = vld [vmem:[#allocation5 + $0xab8] sm:$0xff]
    %v568 = vld [vmem:[#allocation5 + $0xac0] sm:$0xff]
    %v569 = vld [vmem:[#allocation5 + $0xac8] sm:$0xff]
    %v570 = vld [vmem:[#allocation5 + $0xad0] sm:$0xff]
    %v571 = vld [vmem:[#allocation5 + $0xad8] sm:$0xff]
    %v572 = vld [vmem:[#allocation5 + $0xae0] sm:$0xff]
    %v573 = vld [vmem:[#allocation5 + $0xae8] sm:$0xff]
    %v574 = vld [vmem:[#allocation5 + $0xaf0] sm:$0xff]
    %v575 = vld [vmem:[#allocation5 + $0xaf8] sm:$0xff]
    %v576 = vld [vmem:[#allocation5 + $0xb00] sm:$0xff]
    %v577 = vld [vmem:[#allocation5 + $0xb08] sm:$0xff]
    %v578 = vld [vmem:[#allocation5 + $0xb10] sm:$0xff]
    %v579 = vld [vmem:[#allocation5 + $0xb18] sm:$0xff]
    %v580 = vld [vmem:[#allocation5 + $0xb20] sm:$0xff]
    %v581 = vld [vmem:[#allocation5 + $0xb28] sm:$0xff]
    %v582 = vld [vmem:[#allocation5 + $0xb30] sm:$0xff]
    %v583 = vld [vmem:[#allocation5 + $0xb38] sm:$0xff]
    %v584 = vld [vmem:[#allocation5 + $0xb40] sm:$0xff]
    %v585 = vld [vmem:[#allocation5 + $0xb48] sm:$0xff]
    %v586 = vld [vmem:[#allocation5 + $0xb50] sm:$0xff]
    %v587 = vld [vmem:[#allocation5 + $0xb58] sm:$0xff]
    %v588 = vld [vmem:[#allocation5 + $0xb60] sm:$0xff]
    %v589 = vld [vmem:[#allocation5 + $0xb68] sm:$0xff]
    %v590 = vld [vmem:[#allocation5 + $0xb70] sm:$0xff]
    %v591 = vld [vmem:[#allocation5 + $0xb78] sm:$0xff]
    %v592 = vld [vmem:[#allocation5 + $0xb80] sm:$0xff]
    %v593 = vld [vmem:[#allocation5 + $0xb88] sm:$0xff]
    %v594 = vld [vmem:[#allocation5 + $0xb90] sm:$0xff]
    %v595 = vld [vmem:[#allocation5 + $0xb98] sm:$0xff]
    %v596 = vld [vmem:[#allocation5 + $0xba0] sm:$0xff]
    %v597 = vld [vmem:[#allocation5 + $0xba8] sm:$0xff]
    %v598 = vld [vmem:[#allocation5 + $0xbb0] sm:$0xff]
    %v599 = vld [vmem:[#allocation5 + $0xbb8] sm:$0xff]
    %v600 = vld [vmem:[#allocation5 + $0xbc0] sm:$0xff]
    %v601 = vld [vmem:[#allocation5 + $0xbc8] sm:$0xff]
    %v602 = vld [vmem:[#allocation5 + $0xbd0] sm:$0xff]
    %v603 = vld [vmem:[#allocation5 + $0xbd8] sm:$0xff]
    %v604 = vld [vmem:[#allocation5 + $0xbe0] sm:$0xff]
    %v605 = vld [vmem:[#allocation5 + $0xbe8] sm:$0xff]
    %v606 = vld [vmem:[#allocation5 + $0xbf0] sm:$0xff]
    %v607 = vld [vmem:[#allocation5 + $0xbf8] sm:$0xff]
    %v608 = vld [vmem:[#allocation5 + $0xc00] sm:$0xff]
    %v609 = vld [vmem:[#allocation5 + $0xc08] sm:$0xff]
    %v610 = vld [vmem:[#allocation5 + $0xc10] sm:$0xff]
    %v611 = vld [vmem:[#allocation5 + $0xc18] sm:$0xff]
    %v612 = vld [vmem:[#allocation5 + $0xc20] sm:$0xff]
    %v613 = vld [vmem:[#allocation5 + $0xc28] sm:$0xff]
    %v614 = vld [vmem:[#allocation5 + $0xc30] sm:$0xff]
    %v615 = vld [vmem:[#allocation5 + $0xc38] sm:$0xff]
    %v616 = vld [vmem:[#allocation5 + $0xc40] sm:$0xff]
    %v617 = vld [vmem:[#allocation5 + $0xc48] sm:$0xff]
    %v618 = vld [vmem:[#allocation5 + $0xc50] sm:$0xff]
    %v619 = vld [vmem:[#allocation5 + $0xc58] sm:$0xff]
    %v620 = vld [vmem:[#allocation5 + $0xc60] sm:$0xff]
    %v621 = vld [vmem:[#allocation5 + $0xc68] sm:$0xff]
    %v622 = vld [vmem:[#allocation5 + $0xc70] sm:$0xff]
    %v623 = vld [vmem:[#allocation5 + $0xc78] sm:$0xff]
    %v624 = vld [vmem:[#allocation5 + $0xc80] sm:$0xff]
    %v625 = vld [vmem:[#allocation5 + $0xc88] sm:$0xff]
    %v626 = vld [vmem:[#allocation5 + $0xc90] sm:$0xff]
    %v627 = vld [vmem:[#allocation5 + $0xc98] sm:$0xff]
    %v628 = vld [vmem:[#allocation5 + $0xca0] sm:$0xff]
    %v629 = vld [vmem:[#allocation5 + $0xca8] sm:$0xff]
    %v630 = vld [vmem:[#allocation5 + $0xcb0] sm:$0xff]
    %v631 = vld [vmem:[#allocation5 + $0xcb8] sm:$0xff]
    %v632 = vld [vmem:[#allocation5 + $0xcc0] sm:$0xff]
    %v633 = vld [vmem:[#allocation5 + $0xcc8] sm:$0xff]
    %v634 = vld [vmem:[#allocation5 + $0xcd0] sm:$0xff]
    %v635 = vld [vmem:[#allocation5 + $0xcd8] sm:$0xff]
    %v636 = vld [vmem:[#allocation5 + $0xce0] sm:$0xff]
    %v637 = vld [vmem:[#allocation5 + $0xce8] sm:$0xff]
    %v638 = vld [vmem:[#allocation5 + $0xcf0] sm:$0xff]
    %v639 = vld [vmem:[#allocation5 + $0xcf8] sm:$0xff]
    %v640 = vld [vmem:[#allocation5 + $0xd00] sm:$0xff]
    %v641 = vld [vmem:[#allocation5 + $0xd08] sm:$0xff]
    %v642 = vld [vmem:[#allocation5 + $0xd10] sm:$0xff]
    %v643 = vld [vmem:[#allocation5 + $0xd18] sm:$0xff]
    %v644 = vld [vmem:[#allocation5 + $0xd20] sm:$0xff]
    %v645 = vld [vmem:[#allocation5 + $0xd28] sm:$0xff]
    %v646 = vld [vmem:[#allocation5 + $0xd30] sm:$0xff]
    %v647 = vld [vmem:[#allocation5 + $0xd38] sm:$0xff]
    %v648 = vld [vmem:[#allocation5 + $0xd40] sm:$0xff]
    %v649 = vld [vmem:[#allocation5 + $0xd48] sm:$0xff]
    %v650 = vld [vmem:[#allocation5 + $0xd50] sm:$0xff]
    %v651 = vld [vmem:[#allocation5 + $0xd58] sm:$0xff]
    %v652 = vld [vmem:[#allocation5 + $0xd60] sm:$0xff]
    %v653 = vld [vmem:[#allocation5 + $0xd68] sm:$0xff]
    %v654 = vld [vmem:[#allocation5 + $0xd70] sm:$0xff]
    %v655 = vld [vmem:[#allocation5 + $0xd78] sm:$0xff]
    %v656 = vld [vmem:[#allocation5 + $0xd80] sm:$0xff]
    %v657 = vld [vmem:[#allocation5 + $0xd88] sm:$0xff]
    %v658 = vld [vmem:[#allocation5 + $0xd90] sm:$0xff]
    %v659 = vld [vmem:[#allocation5 + $0xd98] sm:$0xff]
    %v660 = vld [vmem:[#allocation5 + $0xda0] sm:$0xff]
    %v661 = vld [vmem:[#allocation5 + $0xda8] sm:$0xff]
    %v662 = vld [vmem:[#allocation5 + $0xdb0] sm:$0xff]
    %v663 = vld [vmem:[#allocation5 + $0xdb8] sm:$0xff]
    %v664 = vld [vmem:[#allocation5 + $0xdc0] sm:$0xff]
    %v665 = vld [vmem:[#allocation5 + $0xdc8] sm:$0xff]
    %v666 = vld [vmem:[#allocation5 + $0xdd0] sm:$0xff]
    %v667 = vld [vmem:[#allocation5 + $0xdd8] sm:$0xff]
    %v668 = vld [vmem:[#allocation5 + $0xde0] sm:$0xff]
    %v669 = vld [vmem:[#allocation5 + $0xde8] sm:$0xff]
    %v670 = vld [vmem:[#allocation5 + $0xdf0] sm:$0xff]
    %v671 = vld [vmem:[#allocation5 + $0xdf8] sm:$0xff]
    %v672 = vld [vmem:[#allocation5 + $0xe00] sm:$0xff]
    %v673 = vld [vmem:[#allocation5 + $0xe08] sm:$0xff]
    %v674 = vld [vmem:[#allocation5 + $0xe10] sm:$0xff]
    %v675 = vld [vmem:[#allocation5 + $0xe18] sm:$0xff]
    %v676 = vld [vmem:[#allocation5 + $0xe20] sm:$0xff]
    %v677 = vld [vmem:[#allocation5 + $0xe28] sm:$0xff]
    %v678 = vld [vmem:[#allocation5 + $0xe30] sm:$0xff]
    %v679 = vld [vmem:[#allocation5 + $0xe38] sm:$0xff]
    %v680 = vld [vmem:[#allocation5 + $0xe40] sm:$0xff]
    %v681 = vld [vmem:[#allocation5 + $0xe48] sm:$0xff]
    %v682 = vld [vmem:[#allocation5 + $0xe50] sm:$0xff]
    %v683 = vld [vmem:[#allocation5 + $0xe58] sm:$0xff]
    %v684 = vld [vmem:[#allocation5 + $0xe60] sm:$0xff]
    %v685 = vld [vmem:[#allocation5 + $0xe68] sm:$0xff]
    %v686 = vld [vmem:[#allocation5 + $0xe70] sm:$0xff]
    %v687 = vld [vmem:[#allocation5 + $0xe78] sm:$0xff]
    %v688 = vld [vmem:[#allocation5 + $0xe80] sm:$0xff]
    %v689 = vld [vmem:[#allocation5 + $0xe88] sm:$0xff]
    %v690 = vld [vmem:[#allocation5 + $0xe90] sm:$0xff]
    %v691 = vld [vmem:[#allocation5 + $0xe98] sm:$0xff]
    %v692 = vld [vmem:[#allocation5 + $0xea0] sm:$0xff]
    %v693 = vld [vmem:[#allocation5 + $0xea8] sm:$0xff]
    %v694 = vld [vmem:[#allocation5 + $0xeb0] sm:$0xff]
    %v695 = vld [vmem:[#allocation5 + $0xeb8] sm:$0xff]
    %v696 = vld [vmem:[#allocation5 + $0xec0] sm:$0xff]
    %v697 = vld [vmem:[#allocation5 + $0xec8] sm:$0xff]
    %v698 = vld [vmem:[#allocation5 + $0xed0] sm:$0xff]
    %v699 = vld [vmem:[#allocation5 + $0xed8] sm:$0xff]
    %v700 = vld [vmem:[#allocation5 + $0xee0] sm:$0xff]
    %v701 = vld [vmem:[#allocation5 + $0xee8] sm:$0xff]
    %v702 = vld [vmem:[#allocation5 + $0xef0] sm:$0xff]
    %v703 = vld [vmem:[#allocation5 + $0xef8] sm:$0xff]
    %v704 = vld [vmem:[#allocation5 + $0xf00] sm:$0xff]
    %v705 = vld [vmem:[#allocation5 + $0xf08] sm:$0xff]
    %v706 = vld [vmem:[#allocation5 + $0xf10] sm:$0xff]
    %v707 = vld [vmem:[#allocation5 + $0xf18] sm:$0xff]
    %v708 = vld [vmem:[#allocation5 + $0xf20] sm:$0xff]
    %v709 = vld [vmem:[#allocation5 + $0xf28] sm:$0xff]
    %v710 = vld [vmem:[#allocation5 + $0xf30] sm:$0xff]
    %v711 = vld [vmem:[#allocation5 + $0xf38] sm:$0xff]
    %v712 = vld [vmem:[#allocation5 + $0xf40] sm:$0xff]
    %v713 = vld [vmem:[#allocation5 + $0xf48] sm:$0xff]
    %v714 = vld [vmem:[#allocation5 + $0xf50] sm:$0xff]
    %v715 = vld [vmem:[#allocation5 + $0xf58] sm:$0xff]
    %v716 = vld [vmem:[#allocation5 + $0xf60] sm:$0xff]
    %v717 = vld [vmem:[#allocation5 + $0xf68] sm:$0xff]
    %v718 = vld [vmem:[#allocation5 + $0xf70] sm:$0xff]
    %v719 = vld [vmem:[#allocation5 + $0xf78] sm:$0xff]
    %v720 = vld [vmem:[#allocation5 + $0xf80] sm:$0xff]
    %v721 = vld [vmem:[#allocation5 + $0xf88] sm:$0xff]
    %v722 = vld [vmem:[#allocation5 + $0xf90] sm:$0xff]
    %v723 = vld [vmem:[#allocation5 + $0xf98] sm:$0xff]
    %v724 = vld [vmem:[#allocation5 + $0xfa0] sm:$0xff]
    %v725 = vld [vmem:[#allocation5 + $0xfa8] sm:$0xff]
    %v726 = vld [vmem:[#allocation5 + $0xfb0] sm:$0xff]
    %v727 = vld [vmem:[#allocation5 + $0xfb8] sm:$0xff]
    %v728 = vld [vmem:[#allocation5 + $0xfc0] sm:$0xff]
    %v729 = vld [vmem:[#allocation5 + $0xfc8] sm:$0xff]
    %v730 = vld [vmem:[#allocation5 + $0xfd0] sm:$0xff]
    %v731 = vld [vmem:[#allocation5 + $0xfd8] sm:$0xff]
    %v732 = vld [vmem:[#allocation5 + $0xfe0] sm:$0xff]
    %v733 = vld [vmem:[#allocation5 + $0xfe8] sm:$0xff]
    %v734 = vld [vmem:[#allocation5 + $0xff0] sm:$0xff]
    %v735 = vld [vmem:[#allocation5 + $0xff8] sm:$0xff]
    %v736 = vld [vmem:[#allocation5 + $0x1000] sm:$0xff]
    %v737 = vld [vmem:[#allocation5 + $0x1008] sm:$0xff]
    %v738 = vld [vmem:[#allocation5 + $0x1010] sm:$0xff]
    %v739 = vld [vmem:[#allocation5 + $0x1018] sm:$0xff]
    %v740 = vld [vmem:[#allocation5 + $0x1020] sm:$0xff]
    %v741 = vld [vmem:[#allocation5 + $0x1028] sm:$0xff]
    %v742 = vld [vmem:[#allocation5 + $0x1030] sm:$0xff]
    %v743 = vld [vmem:[#allocation5 + $0x1038] sm:$0xff]
    %v744 = vld [vmem:[#allocation5 + $0x1040] sm:$0xff]
    %v745 = vld [vmem:[#allocation5 + $0x1048] sm:$0xff]
    %v746 = vld [vmem:[#allocation5 + $0x1050] sm:$0xff]
    %v747 = vld [vmem:[#allocation5 + $0x1058] sm:$0xff]
    %v748 = vld [vmem:[#allocation5 + $0x1060] sm:$0xff]
    %v749 = vld [vmem:[#allocation5 + $0x1068] sm:$0xff]
    %v750 = vld [vmem:[#allocation5 + $0x1070] sm:$0xff]
    %v751 = vld [vmem:[#allocation5 + $0x1078] sm:$0xff]
    %v752 = vld [vmem:[#allocation5 + $0x1080] sm:$0xff]
    %v753 = vld [vmem:[#allocation5 + $0x1088] sm:$0xff]
    %v754 = vld [vmem:[#allocation5 + $0x1090] sm:$0xff]
    %v755 = vld [vmem:[#allocation5 + $0x1098] sm:$0xff]
    %v756 = vld [vmem:[#allocation5 + $0x10a0] sm:$0xff]
    %v757 = vld [vmem:[#allocation5 + $0x10a8] sm:$0xff]
    %v758 = vld [vmem:[#allocation5 + $0x10b0] sm:$0xff]
    %v759 = vld [vmem:[#allocation5 + $0x10b8] sm:$0xff]
    %v760 = vld [vmem:[#allocation5 + $0x10c0] sm:$0xff]
    %v761 = vld [vmem:[#allocation5 + $0x10c8] sm:$0xff]
    %v762 = vld [vmem:[#allocation5 + $0x10d0] sm:$0xff]
    %v763 = vld [vmem:[#allocation5 + $0x10d8] sm:$0xff]
    %v764 = vld [vmem:[#allocation5 + $0x10e0] sm:$0xff]
    %v765 = vld [vmem:[#allocation5 + $0x10e8] sm:$0xff]
    %v766 = vld [vmem:[#allocation5 + $0x10f0] sm:$0xff]
    %v767 = vld [vmem:[#allocation5 + $0x10f8] sm:$0xff]
    %v768 = vld [vmem:[#allocation5 + $0x1100] sm:$0xff]
    %v769 = vld [vmem:[#allocation5 + $0x1108] sm:$0xff]
    %v770 = vld [vmem:[#allocation5 + $0x1110] sm:$0xff]
    %v771 = vld [vmem:[#allocation5 + $0x1118] sm:$0xff]
    %v772 = vld [vmem:[#allocation5 + $0x1120] sm:$0xff]
    %v773 = vld [vmem:[#allocation5 + $0x1128] sm:$0xff]
    %v774 = vld [vmem:[#allocation5 + $0x1130] sm:$0xff]
    %v775 = vld [vmem:[#allocation5 + $0x1138] sm:$0xff]
    %v776 = vld [vmem:[#allocation5 + $0x1140] sm:$0xff]
    %v777 = vld [vmem:[#allocation5 + $0x1148] sm:$0xff]
    %v778 = vld [vmem:[#allocation5 + $0x1150] sm:$0xff]
    %v779 = vld [vmem:[#allocation5 + $0x1158] sm:$0xff]
    %v780 = vld [vmem:[#allocation5 + $0x1160] sm:$0xff]
    %v781 = vld [vmem:[#allocation5 + $0x1168] sm:$0xff]
    %v782 = vld [vmem:[#allocation5 + $0x1170] sm:$0xff]
    %v783 = vld [vmem:[#allocation5 + $0x1178] sm:$0xff]
    %v784 = vld [vmem:[#allocation5 + $0x1180] sm:$0xff]
    %v785 = vld [vmem:[#allocation5 + $0x1188] sm:$0xff]
    %v786 = vld [vmem:[#allocation5 + $0x1190] sm:$0xff]
    %v787 = vld [vmem:[#allocation5 + $0x1198] sm:$0xff]
    %v788 = vld [vmem:[#allocation5 + $0x11a0] sm:$0xff]
    %v789 = vld [vmem:[#allocation5 + $0x11a8] sm:$0xff]
    %v790 = vld [vmem:[#allocation5 + $0x11b0] sm:$0xff]
    %v791 = vld [vmem:[#allocation5 + $0x11b8] sm:$0xff]
    %v792 = vld [vmem:[#allocation5 + $0x11c0] sm:$0xff]
    %v793 = vld [vmem:[#allocation5 + $0x11c8] sm:$0xff]
    %v794 = vld [vmem:[#allocation5 + $0x11d0] sm:$0xff]
    %v795 = vld [vmem:[#allocation5 + $0x11d8] sm:$0xff]
    %v796 = vld [vmem:[#allocation5 + $0x11e0] sm:$0xff]
    %v797 = vld [vmem:[#allocation5 + $0x11e8] sm:$0xff]
    %v798 = vld [vmem:[#allocation5 + $0x11f0] sm:$0xff]
    %v799 = vld [vmem:[#allocation5 + $0x11f8] sm:$0xff]
    %v800 = vld [vmem:[#allocation5 + $0x1200] sm:$0xff]
    %v801 = vld [vmem:[#allocation5 + $0x1208] sm:$0xff]
    %v802 = vld [vmem:[#allocation5 + $0x1210] sm:$0xff]
    %v803 = vld [vmem:[#allocation5 + $0x1218] sm:$0xff]
    %v804 = vld [vmem:[#allocation5 + $0x1220] sm:$0xff]
    %v805 = vld [vmem:[#allocation5 + $0x1228] sm:$0xff]
    %v806 = vld [vmem:[#allocation5 + $0x1230] sm:$0xff]
    %v807 = vld [vmem:[#allocation5 + $0x1238] sm:$0xff]
    %v808 = vld [vmem:[#allocation5 + $0x1240] sm:$0xff]
    %v809 = vld [vmem:[#allocation5 + $0x1248] sm:$0xff]
    %v810 = vld [vmem:[#allocation5 + $0x1250] sm:$0xff]
    %v811 = vld [vmem:[#allocation5 + $0x1258] sm:$0xff]
    %v812 = vld [vmem:[#allocation5 + $0x1260] sm:$0xff]
    %v813 = vld [vmem:[#allocation5 + $0x1268] sm:$0xff]
    %v814 = vld [vmem:[#allocation5 + $0x1270] sm:$0xff]
    %v815 = vld [vmem:[#allocation5 + $0x1278] sm:$0xff]
    %v816 = vld [vmem:[#allocation5 + $0x1280] sm:$0xff]
    %v817 = vld [vmem:[#allocation5 + $0x1288] sm:$0xff]
    %v818 = vld [vmem:[#allocation5 + $0x1290] sm:$0xff]
    %v819 = vld [vmem:[#allocation5 + $0x1298] sm:$0xff]
    %v820 = vld [vmem:[#allocation5 + $0x12a0] sm:$0xff]
    %v821 = vld [vmem:[#allocation5 + $0x12a8] sm:$0xff]
    %v822 = vld [vmem:[#allocation5 + $0x12b0] sm:$0xff]
    %v823 = vld [vmem:[#allocation5 + $0x12b8] sm:$0xff]
    %v824 = vld [vmem:[#allocation5 + $0x12c0] sm:$0xff]
    %v825 = vld [vmem:[#allocation5 + $0x12c8] sm:$0xff]
    %v826 = vld [vmem:[#allocation5 + $0x12d0] sm:$0xff]
    %v827 = vld [vmem:[#allocation5 + $0x12d8] sm:$0xff]
    %v828 = vld [vmem:[#allocation5 + $0x12e0] sm:$0xff]
    %v829 = vld [vmem:[#allocation5 + $0x12e8] sm:$0xff]
    %v830 = vld [vmem:[#allocation5 + $0x12f0] sm:$0xff]
    %v831 = vld [vmem:[#allocation5 + $0x12f8] sm:$0xff]
    %v832 = vld [vmem:[#allocation5 + $0x1300] sm:$0xff]
    %v833 = vld [vmem:[#allocation5 + $0x1308] sm:$0xff]
    %v834 = vld [vmem:[#allocation5 + $0x1310] sm:$0xff]
    %v835 = vld [vmem:[#allocation5 + $0x1318] sm:$0xff]
    %v836 = vld [vmem:[#allocation5 + $0x1320] sm:$0xff]
    %v837 = vld [vmem:[#allocation5 + $0x1328] sm:$0xff]
    %v838 = vld [vmem:[#allocation5 + $0x1330] sm:$0xff]
    %v839 = vld [vmem:[#allocation5 + $0x1338] sm:$0xff]
    %v840 = vld [vmem:[#allocation5 + $0x1340] sm:$0xff]
    %v841 = vld [vmem:[#allocation5 + $0x1348] sm:$0xff]
    %v842 = vld [vmem:[#allocation5 + $0x1350] sm:$0xff]
    %v843 = vld [vmem:[#allocation5 + $0x1358] sm:$0xff]
    %v844 = vld [vmem:[#allocation5 + $0x1360] sm:$0xff]
    %v845 = vld [vmem:[#allocation5 + $0x1368] sm:$0xff]
    %v846 = vld [vmem:[#allocation5 + $0x1370] sm:$0xff]
    %v847 = vld [vmem:[#allocation5 + $0x1378] sm:$0xff]
    %v848 = vld [vmem:[#allocation5 + $0x1380] sm:$0xff]
    %v849 = vld [vmem:[#allocation5 + $0x1388] sm:$0xff]
    %v850 = vld [vmem:[#allocation5 + $0x1390] sm:$0xff]
    %v851 = vld [vmem:[#allocation5 + $0x1398] sm:$0xff]
    %v852 = vld [vmem:[#allocation5 + $0x13a0] sm:$0xff]
    %v853 = vld [vmem:[#allocation5 + $0x13a8] sm:$0xff]
    %v854 = vld [vmem:[#allocation5 + $0x13b0] sm:$0xff]
    %v855 = vld [vmem:[#allocation5 + $0x13b8] sm:$0xff]
    %v856 = vld [vmem:[#allocation5 + $0x13c0] sm:$0xff]
    %v857 = vld [vmem:[#allocation5 + $0x13c8] sm:$0xff]
    %v858 = vld [vmem:[#allocation5 + $0x13d0] sm:$0xff]
    %v859 = vld [vmem:[#allocation5 + $0x13d8] sm:$0xff]
    %v860 = vld [vmem:[#allocation5 + $0x13e0] sm:$0xff]
    %v861 = vld [vmem:[#allocation5 + $0x13e8] sm:$0xff]
    %v862 = vld [vmem:[#allocation5 + $0x13f0] sm:$0xff]
    %v863 = vld [vmem:[#allocation5 + $0x13f8] sm:$0xff]
    %v864 = vld [vmem:[#allocation5 + $0x1400] sm:$0xff]
    %v865 = vld [vmem:[#allocation5 + $0x1408] sm:$0xff]
    %v866 = vld [vmem:[#allocation5 + $0x1410] sm:$0xff]
    %v867 = vld [vmem:[#allocation5 + $0x1418] sm:$0xff]
    %v868 = vld [vmem:[#allocation5 + $0x1420] sm:$0xff]
    %v869 = vld [vmem:[#allocation5 + $0x1428] sm:$0xff]
    %v870 = vld [vmem:[#allocation5 + $0x1430] sm:$0xff]
    %v871 = vld [vmem:[#allocation5 + $0x1438] sm:$0xff]
    %v872 = vld [vmem:[#allocation5 + $0x1440] sm:$0xff]
    %v873 = vld [vmem:[#allocation5 + $0x1448] sm:$0xff]
    %v874 = vld [vmem:[#allocation5 + $0x1450] sm:$0xff]
    %v875 = vld [vmem:[#allocation5 + $0x1458] sm:$0xff]
    %v876 = vld [vmem:[#allocation5 + $0x1460] sm:$0xff]
    %v877 = vld [vmem:[#allocation5 + $0x1468] sm:$0xff]
    %v878 = vld [vmem:[#allocation5 + $0x1470] sm:$0xff]
    %v879 = vld [vmem:[#allocation5 + $0x1478] sm:$0xff]
    %v880 = vld [vmem:[#allocation5 + $0x1480] sm:$0xff]
    %v881 = vld [vmem:[#allocation5 + $0x1488] sm:$0xff]
    %v882 = vld [vmem:[#allocation5 + $0x1490] sm:$0xff]
    %v883 = vld [vmem:[#allocation5 + $0x1498] sm:$0xff]
    %v884 = vld [vmem:[#allocation5 + $0x14a0] sm:$0xff]
    %v885 = vld [vmem:[#allocation5 + $0x14a8] sm:$0xff]
    %v886 = vld [vmem:[#allocation5 + $0x14b0] sm:$0xff]
    %v887 = vld [vmem:[#allocation5 + $0x14b8] sm:$0xff]
    %v888 = vld [vmem:[#allocation5 + $0x14c0] sm:$0xff]
    %v889 = vld [vmem:[#allocation5 + $0x14c8] sm:$0xff]
    %v890 = vld [vmem:[#allocation5 + $0x14d0] sm:$0xff]
    %v891 = vld [vmem:[#allocation5 + $0x14d8] sm:$0xff]
    %v892 = vld [vmem:[#allocation5 + $0x14e0] sm:$0xff]
    %v893 = vld [vmem:[#allocation5 + $0x14e8] sm:$0xff]
    %v894 = vld [vmem:[#allocation5 + $0x14f0] sm:$0xff]
    %v895 = vld [vmem:[#allocation5 + $0x14f8] sm:$0xff]
    %v896 = vld [vmem:[#allocation5 + $0x1500] sm:$0xff]
    %v897 = vld [vmem:[#allocation5 + $0x1508] sm:$0xff]
    %v898 = vld [vmem:[#allocation5 + $0x1510] sm:$0xff]
    %v899 = vld [vmem:[#allocation5 + $0x1518] sm:$0xff]
    %v900 = vld [vmem:[#allocation5 + $0x1520] sm:$0xff]
    %v901 = vld [vmem:[#allocation5 + $0x1528] sm:$0xff]
    %v902 = vld [vmem:[#allocation5 + $0x1530] sm:$0xff]
    %v903 = vld [vmem:[#allocation5 + $0x1538] sm:$0xff]
    %v904 = vld [vmem:[#allocation5 + $0x1540] sm:$0xff]
    %v905 = vld [vmem:[#allocation5 + $0x1548] sm:$0xff]
    %v906 = vld [vmem:[#allocation5 + $0x1550] sm:$0xff]
    %v907 = vld [vmem:[#allocation5 + $0x1558] sm:$0xff]
    %v908 = vld [vmem:[#allocation5 + $0x1560] sm:$0xff]
    %v909 = vld [vmem:[#allocation5 + $0x1568] sm:$0xff]
    %v910 = vld [vmem:[#allocation5 + $0x1570] sm:$0xff]
    %v911 = vld [vmem:[#allocation5 + $0x1578] sm:$0xff]
    %v912 = vld [vmem:[#allocation5 + $0x1580] sm:$0xff]
    %v913 = vld [vmem:[#allocation5 + $0x1588] sm:$0xff]
    %v914 = vld [vmem:[#allocation5 + $0x1590] sm:$0xff]
    %v915 = vld [vmem:[#allocation5 + $0x1598] sm:$0xff]
    %v916 = vld [vmem:[#allocation5 + $0x15a0] sm:$0xff]
    %v917 = vld [vmem:[#allocation5 + $0x15a8] sm:$0xff]
    %v918 = vld [vmem:[#allocation5 + $0x15b0] sm:$0xff]
    %v919 = vld [vmem:[#allocation5 + $0x15b8] sm:$0xff]
    %v920 = vld [vmem:[#allocation5 + $0x15c0] sm:$0xff]
    %v921 = vld [vmem:[#allocation5 + $0x15c8] sm:$0xff]
    %v922 = vld [vmem:[#allocation5 + $0x15d0] sm:$0xff]
    %v923 = vld [vmem:[#allocation5 + $0x15d8] sm:$0xff]
    %v924 = vld [vmem:[#allocation5 + $0x15e0] sm:$0xff]
    %v925 = vld [vmem:[#allocation5 + $0x15e8] sm:$0xff]
    %v926 = vld [vmem:[#allocation5 + $0x15f0] sm:$0xff]
    %v927 = vld [vmem:[#allocation5 + $0x15f8] sm:$0xff]
    %v928 = vld [vmem:[#allocation5 + $0x1600] sm:$0xff]
    %v929 = vld [vmem:[#allocation5 + $0x1608] sm:$0xff]
    %v930 = vld [vmem:[#allocation5 + $0x1610] sm:$0xff]
    %v931 = vld [vmem:[#allocation5 + $0x1618] sm:$0xff]
    %v932 = vld [vmem:[#allocation5 + $0x1620] sm:$0xff]
    %v933 = vld [vmem:[#allocation5 + $0x1628] sm:$0xff]
    %v934 = vld [vmem:[#allocation5 + $0x1630] sm:$0xff]
    %v935 = vld [vmem:[#allocation5 + $0x1638] sm:$0xff]
    %v936 = vld [vmem:[#allocation5 + $0x1640] sm:$0xff]
    %v937 = vld [vmem:[#allocation5 + $0x1648] sm:$0xff]
    %v938 = vld [vmem:[#allocation5 + $0x1650] sm:$0xff]
    %v939 = vld [vmem:[#allocation5 + $0x1658] sm:$0xff]
    %v940 = vld [vmem:[#allocation5 + $0x1660] sm:$0xff]
    %v941 = vld [vmem:[#allocation5 + $0x1668] sm:$0xff]
    %v942 = vld [vmem:[#allocation5 + $0x1670] sm:$0xff]
    %v943 = vld [vmem:[#allocation5 + $0x1678] sm:$0xff]
    %v944 = vld [vmem:[#allocation5 + $0x1680] sm:$0xff]
    %v945 = vld [vmem:[#allocation5 + $0x1688] sm:$0xff]
    %v946 = vld [vmem:[#allocation5 + $0x1690] sm:$0xff]
    %v947 = vld [vmem:[#allocation5 + $0x1698] sm:$0xff]
    %v948 = vld [vmem:[#allocation5 + $0x16a0] sm:$0xff]
    %v949 = vld [vmem:[#allocation5 + $0x16a8] sm:$0xff]
    %v950 = vld [vmem:[#allocation5 + $0x16b0] sm:$0xff]
    %v951 = vld [vmem:[#allocation5 + $0x16b8] sm:$0xff]
    %v952 = vld [vmem:[#allocation5 + $0x16c0] sm:$0xff]
    %v953 = vld [vmem:[#allocation5 + $0x16c8] sm:$0xff]
    %v954 = vld [vmem:[#allocation5 + $0x16d0] sm:$0xff]
    %v955 = vld [vmem:[#allocation5 + $0x16d8] sm:$0xff]
    %v956 = vld [vmem:[#allocation5 + $0x16e0] sm:$0xff]
    %v957 = vld [vmem:[#allocation5 + $0x16e8] sm:$0xff]
    %v958 = vld [vmem:[#allocation5 + $0x16f0] sm:$0xff]
    %v959 = vld [vmem:[#allocation5 + $0x16f8] sm:$0xff]
    %v960 = vld [vmem:[#allocation5 + $0x1700] sm:$0xff]
    %v961 = vld [vmem:[#allocation5 + $0x1708] sm:$0xff]
    %v962 = vld [vmem:[#allocation5 + $0x1710] sm:$0xff]
    %v963 = vld [vmem:[#allocation5 + $0x1718] sm:$0xff]
    %v964 = vld [vmem:[#allocation5 + $0x1720] sm:$0xff]
    %v965 = vld [vmem:[#allocation5 + $0x1728] sm:$0xff]
    %v966 = vld [vmem:[#allocation5 + $0x1730] sm:$0xff]
    %v967 = vld [vmem:[#allocation5 + $0x1738] sm:$0xff]
    %v968 = vld [vmem:[#allocation5 + $0x1740] sm:$0xff]
    %v969 = vld [vmem:[#allocation5 + $0x1748] sm:$0xff]
    %v970 = vld [vmem:[#allocation5 + $0x1750] sm:$0xff]
    %v971 = vld [vmem:[#allocation5 + $0x1758] sm:$0xff]
    %v972 = vld [vmem:[#allocation5 + $0x1760] sm:$0xff]
    %v973 = vld [vmem:[#allocation5 + $0x1768] sm:$0xff]
    %v974 = vld [vmem:[#allocation5 + $0x1770] sm:$0xff]
    %v975 = vld [vmem:[#allocation5 + $0x1778] sm:$0xff]
    %v976 = vld [vmem:[#allocation5 + $0x1780] sm:$0xff]
    %v977 = vld [vmem:[#allocation5 + $0x1788] sm:$0xff]
    %v978 = vld [vmem:[#allocation5 + $0x1790] sm:$0xff]
    %v979 = vld [vmem:[#allocation5 + $0x1798] sm:$0xff]
    %v980 = vld [vmem:[#allocation5 + $0x17a0] sm:$0xff]
    %v981 = vld [vmem:[#allocation5 + $0x17a8] sm:$0xff]
    %v982 = vld [vmem:[#allocation5 + $0x17b0] sm:$0xff]
    %v983 = vld [vmem:[#allocation5 + $0x17b8] sm:$0xff]
    %v984 = vld [vmem:[#allocation5 + $0x17c0] sm:$0xff]
    %v985 = vld [vmem:[#allocation5 + $0x17c8] sm:$0xff]
    %v986 = vld [vmem:[#allocation5 + $0x17d0] sm:$0xff]
    %v987 = vld [vmem:[#allocation5 + $0x17d8] sm:$0xff]
    %v988 = vld [vmem:[#allocation5 + $0x17e0] sm:$0xff]
    %v989 = vld [vmem:[#allocation5 + $0x17e8] sm:$0xff]
    %v990 = vld [vmem:[#allocation5 + $0x17f0] sm:$0xff]
    %v991 = vld [vmem:[#allocation5 + $0x17f8] sm:$0xff]
    %v992 = vld [vmem:[#allocation7] sm:$0xf]
    %v994 = vlaneseq
    %v995 = vshrl.u32 %v994, 7
    %v996 = vsub.s32 0, %v995
    %v997 = vrot.slane %v992, %v996
    %v998 = vlaneseq
    %v999 = vshrl.u32 %v998, 7
    %v1000 = vsub.s32 1, %v999
    %v1001 = vrot.slane %v992, %v1000
    %v1002 = vlaneseq
    %v1003 = vshrl.u32 %v1002, 7
    %v1004 = vsub.s32 2, %v1003
    %v1005 = vrot.slane %v992, %v1004
    %v1006 = vlaneseq
    %v1007 = vshrl.u32 %v1006, 7
    %v1008 = vsub.s32 3, %v1007
    %v1009 = vrot.slane %v992, %v1008
    %v1782 = vunpack.c.l.b16 %v224
    %v1783 = vunpack.c.h.b16 %v224
    %v1784 = vunpack.c.l.b16 %v225
    %v1785 = vunpack.c.h.b16 %v225
    %v1786 = vunpack.c.l.b16 %v226
    %v1787 = vunpack.c.h.b16 %v226
    %v1788 = vunpack.c.l.b16 %v227
    %v1789 = vunpack.c.h.b16 %v227
    %v1790 = vunpack.c.l.b16 %v228
    %v1791 = vunpack.c.h.b16 %v228
    %v1792 = vunpack.c.l.b16 %v229
    %v1793 = vunpack.c.h.b16 %v229
    %v1794 = vunpack.c.l.b16 %v230
    %v1795 = vunpack.c.h.b16 %v230
    %v1796 = vunpack.c.l.b16 %v231
    %v1797 = vunpack.c.h.b16 %v231
    %v1798 = vunpack.c.l.b16 %v232
    %v1799 = vunpack.c.h.b16 %v232
    %v1800 = vunpack.c.l.b16 %v233
    %v1801 = vunpack.c.h.b16 %v233
    %v1802 = vunpack.c.l.b16 %v234
    %v1803 = vunpack.c.h.b16 %v234
    %v1804 = vunpack.c.l.b16 %v235
    %v1805 = vunpack.c.h.b16 %v235
    %v1806 = vunpack.c.l.b16 %v236
    %v1807 = vunpack.c.h.b16 %v236
    %v1808 = vunpack.c.l.b16 %v237
    %v1809 = vunpack.c.h.b16 %v237
    %v1810 = vunpack.c.l.b16 %v238
    %v1811 = vunpack.c.h.b16 %v238
    %v1812 = vunpack.c.l.b16 %v239
    %v1813 = vunpack.c.h.b16 %v239
    %v1814 = vunpack.c.l.b16 %v240
    %v1815 = vunpack.c.h.b16 %v240
    %v1816 = vunpack.c.l.b16 %v241
    %v1817 = vunpack.c.h.b16 %v241
    %v1818 = vunpack.c.l.b16 %v242
    %v1819 = vunpack.c.h.b16 %v242
    %v1820 = vunpack.c.l.b16 %v243
    %v1821 = vunpack.c.h.b16 %v243
    %v1822 = vunpack.c.l.b16 %v244
    %v1823 = vunpack.c.h.b16 %v244
    %v1824 = vunpack.c.l.b16 %v245
    %v1825 = vunpack.c.h.b16 %v245
    %v1826 = vunpack.c.l.b16 %v246
    %v1827 = vunpack.c.h.b16 %v246
    %v1828 = vunpack.c.l.b16 %v247
    %v1829 = vunpack.c.h.b16 %v247
    %v1830 = vunpack.c.l.b16 %v248
    %v1831 = vunpack.c.h.b16 %v248
    %v1832 = vunpack.c.l.b16 %v249
    %v1833 = vunpack.c.h.b16 %v249
    %v1834 = vunpack.c.l.b16 %v250
    %v1835 = vunpack.c.h.b16 %v250
    %v1836 = vunpack.c.l.b16 %v251
    %v1837 = vunpack.c.h.b16 %v251
    %v1838 = vunpack.c.l.b16 %v252
    %v1839 = vunpack.c.h.b16 %v252
    %v1840 = vunpack.c.l.b16 %v253
    %v1841 = vunpack.c.h.b16 %v253
    %v1842 = vunpack.c.l.b16 %v254
    %v1843 = vunpack.c.h.b16 %v254
    %v1844 = vunpack.c.l.b16 %v255
    %v1845 = vunpack.c.h.b16 %v255
    %v1846 = vunpack.c.l.b16 %v256
    %v1847 = vunpack.c.h.b16 %v256
    %v1848 = vunpack.c.l.b16 %v257
    %v1849 = vunpack.c.h.b16 %v257
    %v1850 = vunpack.c.l.b16 %v258
    %v1851 = vunpack.c.h.b16 %v258
    %v1852 = vunpack.c.l.b16 %v259
    %v1853 = vunpack.c.h.b16 %v259
    %v1854 = vunpack.c.l.b16 %v260
    %v1855 = vunpack.c.h.b16 %v260
    %v1856 = vunpack.c.l.b16 %v261
    %v1857 = vunpack.c.h.b16 %v261
    %v1858 = vunpack.c.l.b16 %v262
    %v1859 = vunpack.c.h.b16 %v262
    %v1860 = vunpack.c.l.b16 %v263
    %v1861 = vunpack.c.h.b16 %v263
    %v1862 = vunpack.c.l.b16 %v264
    %v1863 = vunpack.c.h.b16 %v264
    %v1864 = vunpack.c.l.b16 %v265
    %v1865 = vunpack.c.h.b16 %v265
    %v1866 = vunpack.c.l.b16 %v266
    %v1867 = vunpack.c.h.b16 %v266
    %v1868 = vunpack.c.l.b16 %v267
    %v1869 = vunpack.c.h.b16 %v267
    %v1870 = vunpack.c.l.b16 %v268
    %v1871 = vunpack.c.h.b16 %v268
    %v1872 = vunpack.c.l.b16 %v269
    %v1873 = vunpack.c.h.b16 %v269
    %v1874 = vunpack.c.l.b16 %v270
    %v1875 = vunpack.c.h.b16 %v270
    %v1876 = vunpack.c.l.b16 %v271
    %v1877 = vunpack.c.h.b16 %v271
    %v1878 = vunpack.c.l.b16 %v272
    %v1879 = vunpack.c.h.b16 %v272
    %v1880 = vunpack.c.l.b16 %v273
    %v1881 = vunpack.c.h.b16 %v273
    %v1882 = vunpack.c.l.b16 %v274
    %v1883 = vunpack.c.h.b16 %v274
    %v1884 = vunpack.c.l.b16 %v275
    %v1885 = vunpack.c.h.b16 %v275
    %v1886 = vunpack.c.l.b16 %v276
    %v1887 = vunpack.c.h.b16 %v276
    %v1888 = vunpack.c.l.b16 %v277
    %v1889 = vunpack.c.h.b16 %v277
    %v1890 = vunpack.c.l.b16 %v278
    %v1891 = vunpack.c.h.b16 %v278
    %v1892 = vunpack.c.l.b16 %v279
    %v1893 = vunpack.c.h.b16 %v279
    %v1894 = vunpack.c.l.b16 %v280
    %v1895 = vunpack.c.h.b16 %v280
    %v1896 = vunpack.c.l.b16 %v281
    %v1897 = vunpack.c.h.b16 %v281
    %v1898 = vunpack.c.l.b16 %v282
    %v1899 = vunpack.c.h.b16 %v282
    %v1900 = vunpack.c.l.b16 %v283
    %v1901 = vunpack.c.h.b16 %v283
    %v1902 = vunpack.c.l.b16 %v284
    %v1903 = vunpack.c.h.b16 %v284
    %v1904 = vunpack.c.l.b16 %v285
    %v1905 = vunpack.c.h.b16 %v285
    %v1906 = vunpack.c.l.b16 %v286
    %v1907 = vunpack.c.h.b16 %v286
    %v1908 = vunpack.c.l.b16 %v287
    %v1909 = vunpack.c.h.b16 %v287
    %v1910 = vunpack.c.l.b16 %v288
    %v1911 = vunpack.c.h.b16 %v288
    %v1912 = vunpack.c.l.b16 %v289
    %v1913 = vunpack.c.h.b16 %v289
    %v1914 = vunpack.c.l.b16 %v290
    %v1915 = vunpack.c.h.b16 %v290
    %v1916 = vunpack.c.l.b16 %v291
    %v1917 = vunpack.c.h.b16 %v291
    %v1918 = vunpack.c.l.b16 %v292
    %v1919 = vunpack.c.h.b16 %v292
    %v1920 = vunpack.c.l.b16 %v293
    %v1921 = vunpack.c.h.b16 %v293
    %v1922 = vunpack.c.l.b16 %v294
    %v1923 = vunpack.c.h.b16 %v294
    %v1924 = vunpack.c.l.b16 %v295
    %v1925 = vunpack.c.h.b16 %v295
    %v1926 = vunpack.c.l.b16 %v296
    %v1927 = vunpack.c.h.b16 %v296
    %v1928 = vunpack.c.l.b16 %v297
    %v1929 = vunpack.c.h.b16 %v297
    %v1930 = vunpack.c.l.b16 %v298
    %v1931 = vunpack.c.h.b16 %v298
    %v1932 = vunpack.c.l.b16 %v299
    %v1933 = vunpack.c.h.b16 %v299
    %v1934 = vunpack.c.l.b16 %v300
    %v1935 = vunpack.c.h.b16 %v300
    %v1936 = vunpack.c.l.b16 %v301
    %v1937 = vunpack.c.h.b16 %v301
    %v1938 = vunpack.c.l.b16 %v302
    %v1939 = vunpack.c.h.b16 %v302
    %v1940 = vunpack.c.l.b16 %v303
    %v1941 = vunpack.c.h.b16 %v303
    %v1942 = vunpack.c.l.b16 %v304
    %v1943 = vunpack.c.h.b16 %v304
    %v1944 = vunpack.c.l.b16 %v305
    %v1945 = vunpack.c.h.b16 %v305
    %v1946 = vunpack.c.l.b16 %v306
    %v1947 = vunpack.c.h.b16 %v306
    %v1948 = vunpack.c.l.b16 %v307
    %v1949 = vunpack.c.h.b16 %v307
    %v1950 = vunpack.c.l.b16 %v308
    %v1951 = vunpack.c.h.b16 %v308
    %v1952 = vunpack.c.l.b16 %v309
    %v1953 = vunpack.c.h.b16 %v309
    %v1954 = vunpack.c.l.b16 %v310
    %v1955 = vunpack.c.h.b16 %v310
    %v1956 = vunpack.c.l.b16 %v311
    %v1957 = vunpack.c.h.b16 %v311
    %v1958 = vunpack.c.l.b16 %v312
    %v1959 = vunpack.c.h.b16 %v312
    %v1960 = vunpack.c.l.b16 %v313
    %v1961 = vunpack.c.h.b16 %v313
    %v1962 = vunpack.c.l.b16 %v314
    %v1963 = vunpack.c.h.b16 %v314
    %v1964 = vunpack.c.l.b16 %v315
    %v1965 = vunpack.c.h.b16 %v315
    %v1966 = vunpack.c.l.b16 %v316
    %v1967 = vunpack.c.h.b16 %v316
    %v1968 = vunpack.c.l.b16 %v317
    %v1969 = vunpack.c.h.b16 %v317
    %v1970 = vunpack.c.l.b16 %v318
    %v1971 = vunpack.c.h.b16 %v318
    %v1972 = vunpack.c.l.b16 %v319
    %v1973 = vunpack.c.h.b16 %v319
    %v1974 = vunpack.c.l.b16 %v320
    %v1975 = vunpack.c.h.b16 %v320
    %v1976 = vunpack.c.l.b16 %v321
    %v1977 = vunpack.c.h.b16 %v321
    %v1978 = vunpack.c.l.b16 %v322
    %v1979 = vunpack.c.h.b16 %v322
    %v1980 = vunpack.c.l.b16 %v323
    %v1981 = vunpack.c.h.b16 %v323
    %v1982 = vunpack.c.l.b16 %v324
    %v1983 = vunpack.c.h.b16 %v324
    %v1984 = vunpack.c.l.b16 %v325
    %v1985 = vunpack.c.h.b16 %v325
    %v1986 = vunpack.c.l.b16 %v326
    %v1987 = vunpack.c.h.b16 %v326
    %v1988 = vunpack.c.l.b16 %v327
    %v1989 = vunpack.c.h.b16 %v327
    %v1990 = vunpack.c.l.b16 %v328
    %v1991 = vunpack.c.h.b16 %v328
    %v1992 = vunpack.c.l.b16 %v329
    %v1993 = vunpack.c.h.b16 %v329
    %v1994 = vunpack.c.l.b16 %v330
    %v1995 = vunpack.c.h.b16 %v330
    %v1996 = vunpack.c.l.b16 %v331
    %v1997 = vunpack.c.h.b16 %v331
    %v1998 = vunpack.c.l.b16 %v332
    %v1999 = vunpack.c.h.b16 %v332
    %v2000 = vunpack.c.l.b16 %v333
    %v2001 = vunpack.c.h.b16 %v333
    %v2002 = vunpack.c.l.b16 %v334
    %v2003 = vunpack.c.h.b16 %v334
    %v2004 = vunpack.c.l.b16 %v335
    %v2005 = vunpack.c.h.b16 %v335
    %v2006 = vunpack.c.l.b16 %v336
    %v2007 = vunpack.c.h.b16 %v336
    %v2008 = vunpack.c.l.b16 %v337
    %v2009 = vunpack.c.h.b16 %v337
    %v2010 = vunpack.c.l.b16 %v338
    %v2011 = vunpack.c.h.b16 %v338
    %v2012 = vunpack.c.l.b16 %v339
    %v2013 = vunpack.c.h.b16 %v339
    %v2014 = vunpack.c.l.b16 %v340
    %v2015 = vunpack.c.h.b16 %v340
    %v2016 = vunpack.c.l.b16 %v341
    %v2017 = vunpack.c.h.b16 %v341
    %v2018 = vunpack.c.l.b16 %v342
    %v2019 = vunpack.c.h.b16 %v342
    %v2020 = vunpack.c.l.b16 %v343
    %v2021 = vunpack.c.h.b16 %v343
    %v2022 = vunpack.c.l.b16 %v344
    %v2023 = vunpack.c.h.b16 %v344
    %v2024 = vunpack.c.l.b16 %v345
    %v2025 = vunpack.c.h.b16 %v345
    %v2026 = vunpack.c.l.b16 %v346
    %v2027 = vunpack.c.h.b16 %v346
    %v2028 = vunpack.c.l.b16 %v347
    %v2029 = vunpack.c.h.b16 %v347
    %v2030 = vunpack.c.l.b16 %v348
    %v2031 = vunpack.c.h.b16 %v348
    %v2032 = vunpack.c.l.b16 %v349
    %v2033 = vunpack.c.h.b16 %v349
    %v2034 = vunpack.c.l.b16 %v350
    %v2035 = vunpack.c.h.b16 %v350
    %v2036 = vunpack.c.l.b16 %v351
    %v2037 = vunpack.c.h.b16 %v351
    %v2038 = vunpack.c.l.b16 %v352
    %v2039 = vunpack.c.h.b16 %v352
    %v2040 = vunpack.c.l.b16 %v353
    %v2041 = vunpack.c.h.b16 %v353
    %v2042 = vunpack.c.l.b16 %v354
    %v2043 = vunpack.c.h.b16 %v354
    %v2044 = vunpack.c.l.b16 %v355
    %v2045 = vunpack.c.h.b16 %v355
    %v2046 = vunpack.c.l.b16 %v356
    %v2047 = vunpack.c.h.b16 %v356
    %v2048 = vunpack.c.l.b16 %v357
    %v2049 = vunpack.c.h.b16 %v357
    %v2050 = vunpack.c.l.b16 %v358
    %v2051 = vunpack.c.h.b16 %v358
    %v2052 = vunpack.c.l.b16 %v359
    %v2053 = vunpack.c.h.b16 %v359
    %v2054 = vunpack.c.l.b16 %v360
    %v2055 = vunpack.c.h.b16 %v360
    %v2056 = vunpack.c.l.b16 %v361
    %v2057 = vunpack.c.h.b16 %v361
    %v2058 = vunpack.c.l.b16 %v362
    %v2059 = vunpack.c.h.b16 %v362
    %v2060 = vunpack.c.l.b16 %v363
    %v2061 = vunpack.c.h.b16 %v363
    %v2062 = vunpack.c.l.b16 %v364
    %v2063 = vunpack.c.h.b16 %v364
    %v2064 = vunpack.c.l.b16 %v365
    %v2065 = vunpack.c.h.b16 %v365
    %v2066 = vunpack.c.l.b16 %v366
    %v2067 = vunpack.c.h.b16 %v366
    %v2068 = vunpack.c.l.b16 %v367
    %v2069 = vunpack.c.h.b16 %v367
    %v2070 = vunpack.c.l.b16 %v368
    %v2071 = vunpack.c.h.b16 %v368
    %v2072 = vunpack.c.l.b16 %v369
    %v2073 = vunpack.c.h.b16 %v369
    %v2074 = vunpack.c.l.b16 %v370
    %v2075 = vunpack.c.h.b16 %v370
    %v2076 = vunpack.c.l.b16 %v371
    %v2077 = vunpack.c.h.b16 %v371
    %v2078 = vunpack.c.l.b16 %v372
    %v2079 = vunpack.c.h.b16 %v372
    %v2080 = vunpack.c.l.b16 %v373
    %v2081 = vunpack.c.h.b16 %v373
    %v2082 = vunpack.c.l.b16 %v374
    %v2083 = vunpack.c.h.b16 %v374
    %v2084 = vunpack.c.l.b16 %v375
    %v2085 = vunpack.c.h.b16 %v375
    %v2086 = vunpack.c.l.b16 %v376
    %v2087 = vunpack.c.h.b16 %v376
    %v2088 = vunpack.c.l.b16 %v377
    %v2089 = vunpack.c.h.b16 %v377
    %v2090 = vunpack.c.l.b16 %v378
    %v2091 = vunpack.c.h.b16 %v378
    %v2092 = vunpack.c.l.b16 %v379
    %v2093 = vunpack.c.h.b16 %v379
    %v2094 = vunpack.c.l.b16 %v380
    %v2095 = vunpack.c.h.b16 %v380
    %v2096 = vunpack.c.l.b16 %v381
    %v2097 = vunpack.c.h.b16 %v381
    %v2098 = vunpack.c.l.b16 %v382
    %v2099 = vunpack.c.h.b16 %v382
    %v2100 = vunpack.c.l.b16 %v383
    %v2101 = vunpack.c.h.b16 %v383
    %v2102 = vunpack.c.l.b16 %v384
    %v2103 = vunpack.c.h.b16 %v384
    %v2104 = vunpack.c.l.b16 %v385
    %v2105 = vunpack.c.h.b16 %v385
    %v2106 = vunpack.c.l.b16 %v386
    %v2107 = vunpack.c.h.b16 %v386
    %v2108 = vunpack.c.l.b16 %v387
    %v2109 = vunpack.c.h.b16 %v387
    %v2110 = vunpack.c.l.b16 %v388
    %v2111 = vunpack.c.h.b16 %v388
    %v2112 = vunpack.c.l.b16 %v389
    %v2113 = vunpack.c.h.b16 %v389
    %v2114 = vunpack.c.l.b16 %v390
    %v2115 = vunpack.c.h.b16 %v390
    %v2116 = vunpack.c.l.b16 %v391
    %v2117 = vunpack.c.h.b16 %v391
    %v2118 = vunpack.c.l.b16 %v392
    %v2119 = vunpack.c.h.b16 %v392
    %v2120 = vunpack.c.l.b16 %v393
    %v2121 = vunpack.c.h.b16 %v393
    %v2122 = vunpack.c.l.b16 %v394
    %v2123 = vunpack.c.h.b16 %v394
    %v2124 = vunpack.c.l.b16 %v395
    %v2125 = vunpack.c.h.b16 %v395
    %v2126 = vunpack.c.l.b16 %v396
    %v2127 = vunpack.c.h.b16 %v396
    %v2128 = vunpack.c.l.b16 %v397
    %v2129 = vunpack.c.h.b16 %v397
    %v2130 = vunpack.c.l.b16 %v398
    %v2131 = vunpack.c.h.b16 %v398
    %v2132 = vunpack.c.l.b16 %v399
    %v2133 = vunpack.c.h.b16 %v399
    %v2134 = vunpack.c.l.b16 %v400
    %v2135 = vunpack.c.h.b16 %v400
    %v2136 = vunpack.c.l.b16 %v401
    %v2137 = vunpack.c.h.b16 %v401
    %v2138 = vunpack.c.l.b16 %v402
    %v2139 = vunpack.c.h.b16 %v402
    %v2140 = vunpack.c.l.b16 %v403
    %v2141 = vunpack.c.h.b16 %v403
    %v2142 = vunpack.c.l.b16 %v404
    %v2143 = vunpack.c.h.b16 %v404
    %v2144 = vunpack.c.l.b16 %v405
    %v2145 = vunpack.c.h.b16 %v405
    %v2146 = vunpack.c.l.b16 %v406
    %v2147 = vunpack.c.h.b16 %v406
    %v2148 = vunpack.c.l.b16 %v407
    %v2149 = vunpack.c.h.b16 %v407
    %v2150 = vunpack.c.l.b16 %v408
    %v2151 = vunpack.c.h.b16 %v408
    %v2152 = vunpack.c.l.b16 %v409
    %v2153 = vunpack.c.h.b16 %v409
    %v2154 = vunpack.c.l.b16 %v410
    %v2155 = vunpack.c.h.b16 %v410
    %v2156 = vunpack.c.l.b16 %v411
    %v2157 = vunpack.c.h.b16 %v411
    %v2158 = vunpack.c.l.b16 %v412
    %v2159 = vunpack.c.h.b16 %v412
    %v2160 = vunpack.c.l.b16 %v413
    %v2161 = vunpack.c.h.b16 %v413
    %v2162 = vunpack.c.l.b16 %v414
    %v2163 = vunpack.c.h.b16 %v414
    %v2164 = vunpack.c.l.b16 %v415
    %v2165 = vunpack.c.h.b16 %v415
    %v2166 = vunpack.c.l.b16 %v416
    %v2167 = vunpack.c.h.b16 %v416
    %v2168 = vunpack.c.l.b16 %v417
    %v2169 = vunpack.c.h.b16 %v417
    %v2170 = vunpack.c.l.b16 %v418
    %v2171 = vunpack.c.h.b16 %v418
    %v2172 = vunpack.c.l.b16 %v419
    %v2173 = vunpack.c.h.b16 %v419
    %v2174 = vunpack.c.l.b16 %v420
    %v2175 = vunpack.c.h.b16 %v420
    %v2176 = vunpack.c.l.b16 %v421
    %v2177 = vunpack.c.h.b16 %v421
    %v2178 = vunpack.c.l.b16 %v422
    %v2179 = vunpack.c.h.b16 %v422
    %v2180 = vunpack.c.l.b16 %v423
    %v2181 = vunpack.c.h.b16 %v423
    %v2182 = vunpack.c.l.b16 %v424
    %v2183 = vunpack.c.h.b16 %v424
    %v2184 = vunpack.c.l.b16 %v425
    %v2185 = vunpack.c.h.b16 %v425
    %v2186 = vunpack.c.l.b16 %v426
    %v2187 = vunpack.c.h.b16 %v426
    %v2188 = vunpack.c.l.b16 %v427
    %v2189 = vunpack.c.h.b16 %v427
    %v2190 = vunpack.c.l.b16 %v428
    %v2191 = vunpack.c.h.b16 %v428
    %v2192 = vunpack.c.l.b16 %v429
    %v2193 = vunpack.c.h.b16 %v429
    %v2194 = vunpack.c.l.b16 %v430
    %v2195 = vunpack.c.h.b16 %v430
    %v2196 = vunpack.c.l.b16 %v431
    %v2197 = vunpack.c.h.b16 %v431
    %v2198 = vunpack.c.l.b16 %v432
    %v2199 = vunpack.c.h.b16 %v432
    %v2200 = vunpack.c.l.b16 %v433
    %v2201 = vunpack.c.h.b16 %v433
    %v2202 = vunpack.c.l.b16 %v434
    %v2203 = vunpack.c.h.b16 %v434
    %v2204 = vunpack.c.l.b16 %v435
    %v2205 = vunpack.c.h.b16 %v435
    %v2206 = vunpack.c.l.b16 %v436
    %v2207 = vunpack.c.h.b16 %v436
    %v2208 = vunpack.c.l.b16 %v437
    %v2209 = vunpack.c.h.b16 %v437
    %v2210 = vunpack.c.l.b16 %v438
    %v2211 = vunpack.c.h.b16 %v438
    %v2212 = vunpack.c.l.b16 %v439
    %v2213 = vunpack.c.h.b16 %v439
    %v2214 = vunpack.c.l.b16 %v440
    %v2215 = vunpack.c.h.b16 %v440
    %v2216 = vunpack.c.l.b16 %v441
    %v2217 = vunpack.c.h.b16 %v441
    %v2218 = vunpack.c.l.b16 %v442
    %v2219 = vunpack.c.h.b16 %v442
    %v2220 = vunpack.c.l.b16 %v443
    %v2221 = vunpack.c.h.b16 %v443
    %v2222 = vunpack.c.l.b16 %v444
    %v2223 = vunpack.c.h.b16 %v444
    %v2224 = vunpack.c.l.b16 %v445
    %v2225 = vunpack.c.h.b16 %v445
    %v2226 = vunpack.c.l.b16 %v446
    %v2227 = vunpack.c.h.b16 %v446
    %v2228 = vunpack.c.l.b16 %v447
    %v2229 = vunpack.c.h.b16 %v447
    %v2230 = vunpack.c.l.b16 %v448
    %v2231 = vunpack.c.h.b16 %v448
    %v2232 = vunpack.c.l.b16 %v449
    %v2233 = vunpack.c.h.b16 %v449
    %v2234 = vunpack.c.l.b16 %v450
    %v2235 = vunpack.c.h.b16 %v450
    %v2236 = vunpack.c.l.b16 %v451
    %v2237 = vunpack.c.h.b16 %v451
    %v2238 = vunpack.c.l.b16 %v452
    %v2239 = vunpack.c.h.b16 %v452
    %v2240 = vunpack.c.l.b16 %v453
    %v2241 = vunpack.c.h.b16 %v453
    %v2242 = vunpack.c.l.b16 %v454
    %v2243 = vunpack.c.h.b16 %v454
    %v2244 = vunpack.c.l.b16 %v455
    %v2245 = vunpack.c.h.b16 %v455
    %v2246 = vunpack.c.l.b16 %v456
    %v2247 = vunpack.c.h.b16 %v456
    %v2248 = vunpack.c.l.b16 %v457
    %v2249 = vunpack.c.h.b16 %v457
    %v2250 = vunpack.c.l.b16 %v458
    %v2251 = vunpack.c.h.b16 %v458
    %v2252 = vunpack.c.l.b16 %v459
    %v2253 = vunpack.c.h.b16 %v459
    %v2254 = vunpack.c.l.b16 %v460
    %v2255 = vunpack.c.h.b16 %v460
    %v2256 = vunpack.c.l.b16 %v461
    %v2257 = vunpack.c.h.b16 %v461
    %v2258 = vunpack.c.l.b16 %v462
    %v2259 = vunpack.c.h.b16 %v462
    %v2260 = vunpack.c.l.b16 %v463
    %v2261 = vunpack.c.h.b16 %v463
    %v2262 = vunpack.c.l.b16 %v464
    %v2263 = vunpack.c.h.b16 %v464
    %v2264 = vunpack.c.l.b16 %v465
    %v2265 = vunpack.c.h.b16 %v465
    %v2266 = vunpack.c.l.b16 %v466
    %v2267 = vunpack.c.h.b16 %v466
    %v2268 = vunpack.c.l.b16 %v467
    %v2269 = vunpack.c.h.b16 %v467
    %v2270 = vunpack.c.l.b16 %v468
    %v2271 = vunpack.c.h.b16 %v468
    %v2272 = vunpack.c.l.b16 %v469
    %v2273 = vunpack.c.h.b16 %v469
    %v2274 = vunpack.c.l.b16 %v470
    %v2275 = vunpack.c.h.b16 %v470
    %v2276 = vunpack.c.l.b16 %v471
    %v2277 = vunpack.c.h.b16 %v471
    %v2278 = vunpack.c.l.b16 %v472
    %v2279 = vunpack.c.h.b16 %v472
    %v2280 = vunpack.c.l.b16 %v473
    %v2281 = vunpack.c.h.b16 %v473
    %v2282 = vunpack.c.l.b16 %v474
    %v2283 = vunpack.c.h.b16 %v474
    %v2284 = vunpack.c.l.b16 %v475
    %v2285 = vunpack.c.h.b16 %v475
    %v2286 = vunpack.c.l.b16 %v476
    %v2287 = vunpack.c.h.b16 %v476
    %v2288 = vunpack.c.l.b16 %v477
    %v2289 = vunpack.c.h.b16 %v477
    %v2290 = vunpack.c.l.b16 %v478
    %v2291 = vunpack.c.h.b16 %v478
    %v2292 = vunpack.c.l.b16 %v479
    %v2293 = vunpack.c.h.b16 %v479
    %v2294 = vunpack.c.l.b16 %v480
    %v2295 = vunpack.c.h.b16 %v480
    %v2296 = vunpack.c.l.b16 %v481
    %v2297 = vunpack.c.h.b16 %v481
    %v2298 = vunpack.c.l.b16 %v482
    %v2299 = vunpack.c.h.b16 %v482
    %v2300 = vunpack.c.l.b16 %v483
    %v2301 = vunpack.c.h.b16 %v483
    %v2302 = vunpack.c.l.b16 %v484
    %v2303 = vunpack.c.h.b16 %v484
    %v2304 = vunpack.c.l.b16 %v485
    %v2305 = vunpack.c.h.b16 %v485
    %v2306 = vunpack.c.l.b16 %v486
    %v2307 = vunpack.c.h.b16 %v486
    %v2308 = vunpack.c.l.b16 %v487
    %v2309 = vunpack.c.h.b16 %v487
    %v2310 = vunpack.c.l.b16 %v488
    %v2311 = vunpack.c.h.b16 %v488
    %v2312 = vunpack.c.l.b16 %v489
    %v2313 = vunpack.c.h.b16 %v489
    %v2314 = vunpack.c.l.b16 %v490
    %v2315 = vunpack.c.h.b16 %v490
    %v2316 = vunpack.c.l.b16 %v491
    %v2317 = vunpack.c.h.b16 %v491
    %v2318 = vunpack.c.l.b16 %v492
    %v2319 = vunpack.c.h.b16 %v492
    %v2320 = vunpack.c.l.b16 %v493
    %v2321 = vunpack.c.h.b16 %v493
    %v2322 = vunpack.c.l.b16 %v494
    %v2323 = vunpack.c.h.b16 %v494
    %v2324 = vunpack.c.l.b16 %v495
    %v2325 = vunpack.c.h.b16 %v495
    %v2326 = vunpack.c.l.b16 %v496
    %v2327 = vunpack.c.h.b16 %v496
    %v2328 = vunpack.c.l.b16 %v497
    %v2329 = vunpack.c.h.b16 %v497
    %v2330 = vunpack.c.l.b16 %v498
    %v2331 = vunpack.c.h.b16 %v498
    %v2332 = vunpack.c.l.b16 %v499
    %v2333 = vunpack.c.h.b16 %v499
    %v2334 = vunpack.c.l.b16 %v500
    %v2335 = vunpack.c.h.b16 %v500
    %v2336 = vunpack.c.l.b16 %v501
    %v2337 = vunpack.c.h.b16 %v501
    %v2338 = vunpack.c.l.b16 %v502
    %v2339 = vunpack.c.h.b16 %v502
    %v2340 = vunpack.c.l.b16 %v503
    %v2341 = vunpack.c.h.b16 %v503
    %v2342 = vunpack.c.l.b16 %v504
    %v2343 = vunpack.c.h.b16 %v504
    %v2344 = vunpack.c.l.b16 %v505
    %v2345 = vunpack.c.h.b16 %v505
    %v2346 = vunpack.c.l.b16 %v506
    %v2347 = vunpack.c.h.b16 %v506
    %v2348 = vunpack.c.l.b16 %v507
    %v2349 = vunpack.c.h.b16 %v507
    %v2350 = vunpack.c.l.b16 %v508
    %v2351 = vunpack.c.h.b16 %v508
    %v2352 = vunpack.c.l.b16 %v509
    %v2353 = vunpack.c.h.b16 %v509
    %v2354 = vunpack.c.l.b16 %v510
    %v2355 = vunpack.c.h.b16 %v510
    %v2356 = vunpack.c.l.b16 %v511
    %v2357 = vunpack.c.h.b16 %v511
    %v2358 = vunpack.c.l.b16 %v512
    %v2359 = vunpack.c.h.b16 %v512
    %v2360 = vunpack.c.l.b16 %v513
    %v2361 = vunpack.c.h.b16 %v513
    %v2362 = vunpack.c.l.b16 %v514
    %v2363 = vunpack.c.h.b16 %v514
    %v2364 = vunpack.c.l.b16 %v515
    %v2365 = vunpack.c.h.b16 %v515
    %v2366 = vunpack.c.l.b16 %v516
    %v2367 = vunpack.c.h.b16 %v516
    %v2368 = vunpack.c.l.b16 %v517
    %v2369 = vunpack.c.h.b16 %v517
    %v2370 = vunpack.c.l.b16 %v518
    %v2371 = vunpack.c.h.b16 %v518
    %v2372 = vunpack.c.l.b16 %v519
    %v2373 = vunpack.c.h.b16 %v519
    %v2374 = vunpack.c.l.b16 %v520
    %v2375 = vunpack.c.h.b16 %v520
    %v2376 = vunpack.c.l.b16 %v521
    %v2377 = vunpack.c.h.b16 %v521
    %v2378 = vunpack.c.l.b16 %v522
    %v2379 = vunpack.c.h.b16 %v522
    %v2380 = vunpack.c.l.b16 %v523
    %v2381 = vunpack.c.h.b16 %v523
    %v2382 = vunpack.c.l.b16 %v524
    %v2383 = vunpack.c.h.b16 %v524
    %v2384 = vunpack.c.l.b16 %v525
    %v2385 = vunpack.c.h.b16 %v525
    %v2386 = vunpack.c.l.b16 %v526
    %v2387 = vunpack.c.h.b16 %v526
    %v2388 = vunpack.c.l.b16 %v527
    %v2389 = vunpack.c.h.b16 %v527
    %v2390 = vunpack.c.l.b16 %v528
    %v2391 = vunpack.c.h.b16 %v528
    %v2392 = vunpack.c.l.b16 %v529
    %v2393 = vunpack.c.h.b16 %v529
    %v2394 = vunpack.c.l.b16 %v530
    %v2395 = vunpack.c.h.b16 %v530
    %v2396 = vunpack.c.l.b16 %v531
    %v2397 = vunpack.c.h.b16 %v531
    %v2398 = vunpack.c.l.b16 %v532
    %v2399 = vunpack.c.h.b16 %v532
    %v2400 = vunpack.c.l.b16 %v533
    %v2401 = vunpack.c.h.b16 %v533
    %v2402 = vunpack.c.l.b16 %v534
    %v2403 = vunpack.c.h.b16 %v534
    %v2404 = vunpack.c.l.b16 %v535
    %v2405 = vunpack.c.h.b16 %v535
    %v2406 = vunpack.c.l.b16 %v536
    %v2407 = vunpack.c.h.b16 %v536
    %v2408 = vunpack.c.l.b16 %v537
    %v2409 = vunpack.c.h.b16 %v537
    %v2410 = vunpack.c.l.b16 %v538
    %v2411 = vunpack.c.h.b16 %v538
    %v2412 = vunpack.c.l.b16 %v539
    %v2413 = vunpack.c.h.b16 %v539
    %v2414 = vunpack.c.l.b16 %v540
    %v2415 = vunpack.c.h.b16 %v540
    %v2416 = vunpack.c.l.b16 %v541
    %v2417 = vunpack.c.h.b16 %v541
    %v2418 = vunpack.c.l.b16 %v542
    %v2419 = vunpack.c.h.b16 %v542
    %v2420 = vunpack.c.l.b16 %v543
    %v2421 = vunpack.c.h.b16 %v543
    %v2422 = vunpack.c.l.b16 %v544
    %v2423 = vunpack.c.h.b16 %v544
    %v2424 = vunpack.c.l.b16 %v545
    %v2425 = vunpack.c.h.b16 %v545
    %v2426 = vunpack.c.l.b16 %v546
    %v2427 = vunpack.c.h.b16 %v546
    %v2428 = vunpack.c.l.b16 %v547
    %v2429 = vunpack.c.h.b16 %v547
    %v2430 = vunpack.c.l.b16 %v548
    %v2431 = vunpack.c.h.b16 %v548
    %v2432 = vunpack.c.l.b16 %v549
    %v2433 = vunpack.c.h.b16 %v549
    %v2434 = vunpack.c.l.b16 %v550
    %v2435 = vunpack.c.h.b16 %v550
    %v2436 = vunpack.c.l.b16 %v551
    %v2437 = vunpack.c.h.b16 %v551
    %v2438 = vunpack.c.l.b16 %v552
    %v2439 = vunpack.c.h.b16 %v552
    %v2440 = vunpack.c.l.b16 %v553
    %v2441 = vunpack.c.h.b16 %v553
    %v2442 = vunpack.c.l.b16 %v554
    %v2443 = vunpack.c.h.b16 %v554
    %v2444 = vunpack.c.l.b16 %v555
    %v2445 = vunpack.c.h.b16 %v555
    %v2446 = vunpack.c.l.b16 %v556
    %v2447 = vunpack.c.h.b16 %v556
    %v2448 = vunpack.c.l.b16 %v557
    %v2449 = vunpack.c.h.b16 %v557
    %v2450 = vunpack.c.l.b16 %v558
    %v2451 = vunpack.c.h.b16 %v558
    %v2452 = vunpack.c.l.b16 %v559
    %v2453 = vunpack.c.h.b16 %v559
    %v2454 = vunpack.c.l.b16 %v560
    %v2455 = vunpack.c.h.b16 %v560
    %v2456 = vunpack.c.l.b16 %v561
    %v2457 = vunpack.c.h.b16 %v561
    %v2458 = vunpack.c.l.b16 %v562
    %v2459 = vunpack.c.h.b16 %v562
    %v2460 = vunpack.c.l.b16 %v563
    %v2461 = vunpack.c.h.b16 %v563
    %v2462 = vunpack.c.l.b16 %v564
    %v2463 = vunpack.c.h.b16 %v564
    %v2464 = vunpack.c.l.b16 %v565
    %v2465 = vunpack.c.h.b16 %v565
    %v2466 = vunpack.c.l.b16 %v566
    %v2467 = vunpack.c.h.b16 %v566
    %v2468 = vunpack.c.l.b16 %v567
    %v2469 = vunpack.c.h.b16 %v567
    %v2470 = vunpack.c.l.b16 %v568
    %v2471 = vunpack.c.h.b16 %v568
    %v2472 = vunpack.c.l.b16 %v569
    %v2473 = vunpack.c.h.b16 %v569
    %v2474 = vunpack.c.l.b16 %v570
    %v2475 = vunpack.c.h.b16 %v570
    %v2476 = vunpack.c.l.b16 %v571
    %v2477 = vunpack.c.h.b16 %v571
    %v2478 = vunpack.c.l.b16 %v572
    %v2479 = vunpack.c.h.b16 %v572
    %v2480 = vunpack.c.l.b16 %v573
    %v2481 = vunpack.c.h.b16 %v573
    %v2482 = vunpack.c.l.b16 %v574
    %v2483 = vunpack.c.h.b16 %v574
    %v2484 = vunpack.c.l.b16 %v575
    %v2485 = vunpack.c.h.b16 %v575
    %v2486 = vunpack.c.l.b16 %v576
    %v2487 = vunpack.c.h.b16 %v576
    %v2488 = vunpack.c.l.b16 %v577
    %v2489 = vunpack.c.h.b16 %v577
    %v2490 = vunpack.c.l.b16 %v578
    %v2491 = vunpack.c.h.b16 %v578
    %v2492 = vunpack.c.l.b16 %v579
    %v2493 = vunpack.c.h.b16 %v579
    %v2494 = vunpack.c.l.b16 %v580
    %v2495 = vunpack.c.h.b16 %v580
    %v2496 = vunpack.c.l.b16 %v581
    %v2497 = vunpack.c.h.b16 %v581
    %v2498 = vunpack.c.l.b16 %v582
    %v2499 = vunpack.c.h.b16 %v582
    %v2500 = vunpack.c.l.b16 %v583
    %v2501 = vunpack.c.h.b16 %v583
    %v2502 = vunpack.c.l.b16 %v584
    %v2503 = vunpack.c.h.b16 %v584
    %v2504 = vunpack.c.l.b16 %v585
    %v2505 = vunpack.c.h.b16 %v585
    %v2506 = vunpack.c.l.b16 %v586
    %v2507 = vunpack.c.h.b16 %v586
    %v2508 = vunpack.c.l.b16 %v587
    %v2509 = vunpack.c.h.b16 %v587
    %v2510 = vunpack.c.l.b16 %v588
    %v2511 = vunpack.c.h.b16 %v588
    %v2512 = vunpack.c.l.b16 %v589
    %v2513 = vunpack.c.h.b16 %v589
    %v2514 = vunpack.c.l.b16 %v590
    %v2515 = vunpack.c.h.b16 %v590
    %v2516 = vunpack.c.l.b16 %v591
    %v2517 = vunpack.c.h.b16 %v591
    %v2518 = vunpack.c.l.b16 %v592
    %v2519 = vunpack.c.h.b16 %v592
    %v2520 = vunpack.c.l.b16 %v593
    %v2521 = vunpack.c.h.b16 %v593
    %v2522 = vunpack.c.l.b16 %v594
    %v2523 = vunpack.c.h.b16 %v594
    %v2524 = vunpack.c.l.b16 %v595
    %v2525 = vunpack.c.h.b16 %v595
    %v2526 = vunpack.c.l.b16 %v596
    %v2527 = vunpack.c.h.b16 %v596
    %v2528 = vunpack.c.l.b16 %v597
    %v2529 = vunpack.c.h.b16 %v597
    %v2530 = vunpack.c.l.b16 %v598
    %v2531 = vunpack.c.h.b16 %v598
    %v2532 = vunpack.c.l.b16 %v599
    %v2533 = vunpack.c.h.b16 %v599
    %v2534 = vunpack.c.l.b16 %v600
    %v2535 = vunpack.c.h.b16 %v600
    %v2536 = vunpack.c.l.b16 %v601
    %v2537 = vunpack.c.h.b16 %v601
    %v2538 = vunpack.c.l.b16 %v602
    %v2539 = vunpack.c.h.b16 %v602
    %v2540 = vunpack.c.l.b16 %v603
    %v2541 = vunpack.c.h.b16 %v603
    %v2542 = vunpack.c.l.b16 %v604
    %v2543 = vunpack.c.h.b16 %v604
    %v2544 = vunpack.c.l.b16 %v605
    %v2545 = vunpack.c.h.b16 %v605
    %v2546 = vunpack.c.l.b16 %v606
    %v2547 = vunpack.c.h.b16 %v606
    %v2548 = vunpack.c.l.b16 %v607
    %v2549 = vunpack.c.h.b16 %v607
    %v2550 = vunpack.c.l.b16 %v608
    %v2551 = vunpack.c.h.b16 %v608
    %v2552 = vunpack.c.l.b16 %v609
    %v2553 = vunpack.c.h.b16 %v609
    %v2554 = vunpack.c.l.b16 %v610
    %v2555 = vunpack.c.h.b16 %v610
    %v2556 = vunpack.c.l.b16 %v611
    %v2557 = vunpack.c.h.b16 %v611
    %v2558 = vunpack.c.l.b16 %v612
    %v2559 = vunpack.c.h.b16 %v612
    %v2560 = vunpack.c.l.b16 %v613
    %v2561 = vunpack.c.h.b16 %v613
    %v2562 = vunpack.c.l.b16 %v614
    %v2563 = vunpack.c.h.b16 %v614
    %v2564 = vunpack.c.l.b16 %v615
    %v2565 = vunpack.c.h.b16 %v615
    %v2566 = vunpack.c.l.b16 %v616
    %v2567 = vunpack.c.h.b16 %v616
    %v2568 = vunpack.c.l.b16 %v617
    %v2569 = vunpack.c.h.b16 %v617
    %v2570 = vunpack.c.l.b16 %v618
    %v2571 = vunpack.c.h.b16 %v618
    %v2572 = vunpack.c.l.b16 %v619
    %v2573 = vunpack.c.h.b16 %v619
    %v2574 = vunpack.c.l.b16 %v620
    %v2575 = vunpack.c.h.b16 %v620
    %v2576 = vunpack.c.l.b16 %v621
    %v2577 = vunpack.c.h.b16 %v621
    %v2578 = vunpack.c.l.b16 %v622
    %v2579 = vunpack.c.h.b16 %v622
    %v2580 = vunpack.c.l.b16 %v623
    %v2581 = vunpack.c.h.b16 %v623
    %v2582 = vunpack.c.l.b16 %v624
    %v2583 = vunpack.c.h.b16 %v624
    %v2584 = vunpack.c.l.b16 %v625
    %v2585 = vunpack.c.h.b16 %v625
    %v2586 = vunpack.c.l.b16 %v626
    %v2587 = vunpack.c.h.b16 %v626
    %v2588 = vunpack.c.l.b16 %v627
    %v2589 = vunpack.c.h.b16 %v627
    %v2590 = vunpack.c.l.b16 %v628
    %v2591 = vunpack.c.h.b16 %v628
    %v2592 = vunpack.c.l.b16 %v629
    %v2593 = vunpack.c.h.b16 %v629
    %v2594 = vunpack.c.l.b16 %v630
    %v2595 = vunpack.c.h.b16 %v630
    %v2596 = vunpack.c.l.b16 %v631
    %v2597 = vunpack.c.h.b16 %v631
    %v2598 = vunpack.c.l.b16 %v632
    %v2599 = vunpack.c.h.b16 %v632
    %v2600 = vunpack.c.l.b16 %v633
    %v2601 = vunpack.c.h.b16 %v633
    %v2602 = vunpack.c.l.b16 %v634
    %v2603 = vunpack.c.h.b16 %v634
    %v2604 = vunpack.c.l.b16 %v635
    %v2605 = vunpack.c.h.b16 %v635
    %v2606 = vunpack.c.l.b16 %v636
    %v2607 = vunpack.c.h.b16 %v636
    %v2608 = vunpack.c.l.b16 %v637
    %v2609 = vunpack.c.h.b16 %v637
    %v2610 = vunpack.c.l.b16 %v638
    %v2611 = vunpack.c.h.b16 %v638
    %v2612 = vunpack.c.l.b16 %v639
    %v2613 = vunpack.c.h.b16 %v639
    %v2614 = vunpack.c.l.b16 %v640
    %v2615 = vunpack.c.h.b16 %v640
    %v2616 = vunpack.c.l.b16 %v641
    %v2617 = vunpack.c.h.b16 %v641
    %v2618 = vunpack.c.l.b16 %v642
    %v2619 = vunpack.c.h.b16 %v642
    %v2620 = vunpack.c.l.b16 %v643
    %v2621 = vunpack.c.h.b16 %v643
    %v2622 = vunpack.c.l.b16 %v644
    %v2623 = vunpack.c.h.b16 %v644
    %v2624 = vunpack.c.l.b16 %v645
    %v2625 = vunpack.c.h.b16 %v645
    %v2626 = vunpack.c.l.b16 %v646
    %v2627 = vunpack.c.h.b16 %v646
    %v2628 = vunpack.c.l.b16 %v647
    %v2629 = vunpack.c.h.b16 %v647
    %v2630 = vunpack.c.l.b16 %v648
    %v2631 = vunpack.c.h.b16 %v648
    %v2632 = vunpack.c.l.b16 %v649
    %v2633 = vunpack.c.h.b16 %v649
    %v2634 = vunpack.c.l.b16 %v650
    %v2635 = vunpack.c.h.b16 %v650
    %v2636 = vunpack.c.l.b16 %v651
    %v2637 = vunpack.c.h.b16 %v651
    %v2638 = vunpack.c.l.b16 %v652
    %v2639 = vunpack.c.h.b16 %v652
    %v2640 = vunpack.c.l.b16 %v653
    %v2641 = vunpack.c.h.b16 %v653
    %v2642 = vunpack.c.l.b16 %v654
    %v2643 = vunpack.c.h.b16 %v654
    %v2644 = vunpack.c.l.b16 %v655
    %v2645 = vunpack.c.h.b16 %v655
    %v2646 = vunpack.c.l.b16 %v656
    %v2647 = vunpack.c.h.b16 %v656
    %v2648 = vunpack.c.l.b16 %v657
    %v2649 = vunpack.c.h.b16 %v657
    %v2650 = vunpack.c.l.b16 %v658
    %v2651 = vunpack.c.h.b16 %v658
    %v2652 = vunpack.c.l.b16 %v659
    %v2653 = vunpack.c.h.b16 %v659
    %v2654 = vunpack.c.l.b16 %v660
    %v2655 = vunpack.c.h.b16 %v660
    %v2656 = vunpack.c.l.b16 %v661
    %v2657 = vunpack.c.h.b16 %v661
    %v2658 = vunpack.c.l.b16 %v662
    %v2659 = vunpack.c.h.b16 %v662
    %v2660 = vunpack.c.l.b16 %v663
    %v2661 = vunpack.c.h.b16 %v663
    %v2662 = vunpack.c.l.b16 %v664
    %v2663 = vunpack.c.h.b16 %v664
    %v2664 = vunpack.c.l.b16 %v665
    %v2665 = vunpack.c.h.b16 %v665
    %v2666 = vunpack.c.l.b16 %v666
    %v2667 = vunpack.c.h.b16 %v666
    %v2668 = vunpack.c.l.b16 %v667
    %v2669 = vunpack.c.h.b16 %v667
    %v2670 = vunpack.c.l.b16 %v668
    %v2671 = vunpack.c.h.b16 %v668
    %v2672 = vunpack.c.l.b16 %v669
    %v2673 = vunpack.c.h.b16 %v669
    %v2674 = vunpack.c.l.b16 %v670
    %v2675 = vunpack.c.h.b16 %v670
    %v2676 = vunpack.c.l.b16 %v671
    %v2677 = vunpack.c.h.b16 %v671
    %v2678 = vunpack.c.l.b16 %v672
    %v2679 = vunpack.c.h.b16 %v672
    %v2680 = vunpack.c.l.b16 %v673
    %v2681 = vunpack.c.h.b16 %v673
    %v2682 = vunpack.c.l.b16 %v674
    %v2683 = vunpack.c.h.b16 %v674
    %v2684 = vunpack.c.l.b16 %v675
    %v2685 = vunpack.c.h.b16 %v675
    %v2686 = vunpack.c.l.b16 %v676
    %v2687 = vunpack.c.h.b16 %v676
    %v2688 = vunpack.c.l.b16 %v677
    %v2689 = vunpack.c.h.b16 %v677
    %v2690 = vunpack.c.l.b16 %v678
    %v2691 = vunpack.c.h.b16 %v678
    %v2692 = vunpack.c.l.b16 %v679
    %v2693 = vunpack.c.h.b16 %v679
    %v2694 = vunpack.c.l.b16 %v680
    %v2695 = vunpack.c.h.b16 %v680
    %v2696 = vunpack.c.l.b16 %v681
    %v2697 = vunpack.c.h.b16 %v681
    %v2698 = vunpack.c.l.b16 %v682
    %v2699 = vunpack.c.h.b16 %v682
    %v2700 = vunpack.c.l.b16 %v683
    %v2701 = vunpack.c.h.b16 %v683
    %v2702 = vunpack.c.l.b16 %v684
    %v2703 = vunpack.c.h.b16 %v684
    %v2704 = vunpack.c.l.b16 %v685
    %v2705 = vunpack.c.h.b16 %v685
    %v2706 = vunpack.c.l.b16 %v686
    %v2707 = vunpack.c.h.b16 %v686
    %v2708 = vunpack.c.l.b16 %v687
    %v2709 = vunpack.c.h.b16 %v687
    %v2710 = vunpack.c.l.b16 %v688
    %v2711 = vunpack.c.h.b16 %v688
    %v2712 = vunpack.c.l.b16 %v689
    %v2713 = vunpack.c.h.b16 %v689
    %v2714 = vunpack.c.l.b16 %v690
    %v2715 = vunpack.c.h.b16 %v690
    %v2716 = vunpack.c.l.b16 %v691
    %v2717 = vunpack.c.h.b16 %v691
    %v2718 = vunpack.c.l.b16 %v692
    %v2719 = vunpack.c.h.b16 %v692
    %v2720 = vunpack.c.l.b16 %v693
    %v2721 = vunpack.c.h.b16 %v693
    %v2722 = vunpack.c.l.b16 %v694
    %v2723 = vunpack.c.h.b16 %v694
    %v2724 = vunpack.c.l.b16 %v695
    %v2725 = vunpack.c.h.b16 %v695
    %v2726 = vunpack.c.l.b16 %v696
    %v2727 = vunpack.c.h.b16 %v696
    %v2728 = vunpack.c.l.b16 %v697
    %v2729 = vunpack.c.h.b16 %v697
    %v2730 = vunpack.c.l.b16 %v698
    %v2731 = vunpack.c.h.b16 %v698
    %v2732 = vunpack.c.l.b16 %v699
    %v2733 = vunpack.c.h.b16 %v699
    %v2734 = vunpack.c.l.b16 %v700
    %v2735 = vunpack.c.h.b16 %v700
    %v2736 = vunpack.c.l.b16 %v701
    %v2737 = vunpack.c.h.b16 %v701
    %v2738 = vunpack.c.l.b16 %v702
    %v2739 = vunpack.c.h.b16 %v702
    %v2740 = vunpack.c.l.b16 %v703
    %v2741 = vunpack.c.h.b16 %v703
    %v2742 = vunpack.c.l.b16 %v704
    %v2743 = vunpack.c.h.b16 %v704
    %v2744 = vunpack.c.l.b16 %v705
    %v2745 = vunpack.c.h.b16 %v705
    %v2746 = vunpack.c.l.b16 %v706
    %v2747 = vunpack.c.h.b16 %v706
    %v2748 = vunpack.c.l.b16 %v707
    %v2749 = vunpack.c.h.b16 %v707
    %v2750 = vunpack.c.l.b16 %v708
    %v2751 = vunpack.c.h.b16 %v708
    %v2752 = vunpack.c.l.b16 %v709
    %v2753 = vunpack.c.h.b16 %v709
    %v2754 = vunpack.c.l.b16 %v710
    %v2755 = vunpack.c.h.b16 %v710
    %v2756 = vunpack.c.l.b16 %v711
    %v2757 = vunpack.c.h.b16 %v711
    %v2758 = vunpack.c.l.b16 %v712
    %v2759 = vunpack.c.h.b16 %v712
    %v2760 = vunpack.c.l.b16 %v713
    %v2761 = vunpack.c.h.b16 %v713
    %v2762 = vunpack.c.l.b16 %v714
    %v2763 = vunpack.c.h.b16 %v714
    %v2764 = vunpack.c.l.b16 %v715
    %v2765 = vunpack.c.h.b16 %v715
    %v2766 = vunpack.c.l.b16 %v716
    %v2767 = vunpack.c.h.b16 %v716
    %v2768 = vunpack.c.l.b16 %v717
    %v2769 = vunpack.c.h.b16 %v717
    %v2770 = vunpack.c.l.b16 %v718
    %v2771 = vunpack.c.h.b16 %v718
    %v2772 = vunpack.c.l.b16 %v719
    %v2773 = vunpack.c.h.b16 %v719
    %v2774 = vunpack.c.l.b16 %v720
    %v2775 = vunpack.c.h.b16 %v720
    %v2776 = vunpack.c.l.b16 %v721
    %v2777 = vunpack.c.h.b16 %v721
    %v2778 = vunpack.c.l.b16 %v722
    %v2779 = vunpack.c.h.b16 %v722
    %v2780 = vunpack.c.l.b16 %v723
    %v2781 = vunpack.c.h.b16 %v723
    %v2782 = vunpack.c.l.b16 %v724
    %v2783 = vunpack.c.h.b16 %v724
    %v2784 = vunpack.c.l.b16 %v725
    %v2785 = vunpack.c.h.b16 %v725
    %v2786 = vunpack.c.l.b16 %v726
    %v2787 = vunpack.c.h.b16 %v726
    %v2788 = vunpack.c.l.b16 %v727
    %v2789 = vunpack.c.h.b16 %v727
    %v2790 = vunpack.c.l.b16 %v728
    %v2791 = vunpack.c.h.b16 %v728
    %v2792 = vunpack.c.l.b16 %v729
    %v2793 = vunpack.c.h.b16 %v729
    %v2794 = vunpack.c.l.b16 %v730
    %v2795 = vunpack.c.h.b16 %v730
    %v2796 = vunpack.c.l.b16 %v731
    %v2797 = vunpack.c.h.b16 %v731
    %v2798 = vunpack.c.l.b16 %v732
    %v2799 = vunpack.c.h.b16 %v732
    %v2800 = vunpack.c.l.b16 %v733
    %v2801 = vunpack.c.h.b16 %v733
    %v2802 = vunpack.c.l.b16 %v734
    %v2803 = vunpack.c.h.b16 %v734
    %v2804 = vunpack.c.l.b16 %v735
    %v2805 = vunpack.c.h.b16 %v735
    %v2806 = vunpack.c.l.b16 %v736
    %v2807 = vunpack.c.h.b16 %v736
    %v2808 = vunpack.c.l.b16 %v737
    %v2809 = vunpack.c.h.b16 %v737
    %v2810 = vunpack.c.l.b16 %v738
    %v2811 = vunpack.c.h.b16 %v738
    %v2812 = vunpack.c.l.b16 %v739
    %v2813 = vunpack.c.h.b16 %v739
    %v2814 = vunpack.c.l.b16 %v740
    %v2815 = vunpack.c.h.b16 %v740
    %v2816 = vunpack.c.l.b16 %v741
    %v2817 = vunpack.c.h.b16 %v741
    %v2818 = vunpack.c.l.b16 %v742
    %v2819 = vunpack.c.h.b16 %v742
    %v2820 = vunpack.c.l.b16 %v743
    %v2821 = vunpack.c.h.b16 %v743
    %v2822 = vunpack.c.l.b16 %v744
    %v2823 = vunpack.c.h.b16 %v744
    %v2824 = vunpack.c.l.b16 %v745
    %v2825 = vunpack.c.h.b16 %v745
    %v2826 = vunpack.c.l.b16 %v746
    %v2827 = vunpack.c.h.b16 %v746
    %v2828 = vunpack.c.l.b16 %v747
    %v2829 = vunpack.c.h.b16 %v747
    %v2830 = vunpack.c.l.b16 %v748
    %v2831 = vunpack.c.h.b16 %v748
    %v2832 = vunpack.c.l.b16 %v749
    %v2833 = vunpack.c.h.b16 %v749
    %v2834 = vunpack.c.l.b16 %v750
    %v2835 = vunpack.c.h.b16 %v750
    %v2836 = vunpack.c.l.b16 %v751
    %v2837 = vunpack.c.h.b16 %v751
    %v2838 = vunpack.c.l.b16 %v752
    %v2839 = vunpack.c.h.b16 %v752
    %v2840 = vunpack.c.l.b16 %v753
    %v2841 = vunpack.c.h.b16 %v753
    %v2842 = vunpack.c.l.b16 %v754
    %v2843 = vunpack.c.h.b16 %v754
    %v2844 = vunpack.c.l.b16 %v755
    %v2845 = vunpack.c.h.b16 %v755
    %v2846 = vunpack.c.l.b16 %v756
    %v2847 = vunpack.c.h.b16 %v756
    %v2848 = vunpack.c.l.b16 %v757
    %v2849 = vunpack.c.h.b16 %v757
    %v2850 = vunpack.c.l.b16 %v758
    %v2851 = vunpack.c.h.b16 %v758
    %v2852 = vunpack.c.l.b16 %v759
    %v2853 = vunpack.c.h.b16 %v759
    %v2854 = vunpack.c.l.b16 %v760
    %v2855 = vunpack.c.h.b16 %v760
    %v2856 = vunpack.c.l.b16 %v761
    %v2857 = vunpack.c.h.b16 %v761
    %v2858 = vunpack.c.l.b16 %v762
    %v2859 = vunpack.c.h.b16 %v762
    %v2860 = vunpack.c.l.b16 %v763
    %v2861 = vunpack.c.h.b16 %v763
    %v2862 = vunpack.c.l.b16 %v764
    %v2863 = vunpack.c.h.b16 %v764
    %v2864 = vunpack.c.l.b16 %v765
    %v2865 = vunpack.c.h.b16 %v765
    %v2866 = vunpack.c.l.b16 %v766
    %v2867 = vunpack.c.h.b16 %v766
    %v2868 = vunpack.c.l.b16 %v767
    %v2869 = vunpack.c.h.b16 %v767
    %v2870 = vunpack.c.l.b16 %v768
    %v2871 = vunpack.c.h.b16 %v768
    %v2872 = vunpack.c.l.b16 %v769
    %v2873 = vunpack.c.h.b16 %v769
    %v2874 = vunpack.c.l.b16 %v770
    %v2875 = vunpack.c.h.b16 %v770
    %v2876 = vunpack.c.l.b16 %v771
    %v2877 = vunpack.c.h.b16 %v771
    %v2878 = vunpack.c.l.b16 %v772
    %v2879 = vunpack.c.h.b16 %v772
    %v2880 = vunpack.c.l.b16 %v773
    %v2881 = vunpack.c.h.b16 %v773
    %v2882 = vunpack.c.l.b16 %v774
    %v2883 = vunpack.c.h.b16 %v774
    %v2884 = vunpack.c.l.b16 %v775
    %v2885 = vunpack.c.h.b16 %v775
    %v2886 = vunpack.c.l.b16 %v776
    %v2887 = vunpack.c.h.b16 %v776
    %v2888 = vunpack.c.l.b16 %v777
    %v2889 = vunpack.c.h.b16 %v777
    %v2890 = vunpack.c.l.b16 %v778
    %v2891 = vunpack.c.h.b16 %v778
    %v2892 = vunpack.c.l.b16 %v779
    %v2893 = vunpack.c.h.b16 %v779
    %v2894 = vunpack.c.l.b16 %v780
    %v2895 = vunpack.c.h.b16 %v780
    %v2896 = vunpack.c.l.b16 %v781
    %v2897 = vunpack.c.h.b16 %v781
    %v2898 = vunpack.c.l.b16 %v782
    %v2899 = vunpack.c.h.b16 %v782
    %v2900 = vunpack.c.l.b16 %v783
    %v2901 = vunpack.c.h.b16 %v783
    %v2902 = vunpack.c.l.b16 %v784
    %v2903 = vunpack.c.h.b16 %v784
    %v2904 = vunpack.c.l.b16 %v785
    %v2905 = vunpack.c.h.b16 %v785
    %v2906 = vunpack.c.l.b16 %v786
    %v2907 = vunpack.c.h.b16 %v786
    %v2908 = vunpack.c.l.b16 %v787
    %v2909 = vunpack.c.h.b16 %v787
    %v2910 = vunpack.c.l.b16 %v788
    %v2911 = vunpack.c.h.b16 %v788
    %v2912 = vunpack.c.l.b16 %v789
    %v2913 = vunpack.c.h.b16 %v789
    %v2914 = vunpack.c.l.b16 %v790
    %v2915 = vunpack.c.h.b16 %v790
    %v2916 = vunpack.c.l.b16 %v791
    %v2917 = vunpack.c.h.b16 %v791
    %v2918 = vunpack.c.l.b16 %v792
    %v2919 = vunpack.c.h.b16 %v792
    %v2920 = vunpack.c.l.b16 %v793
    %v2921 = vunpack.c.h.b16 %v793
    %v2922 = vunpack.c.l.b16 %v794
    %v2923 = vunpack.c.h.b16 %v794
    %v2924 = vunpack.c.l.b16 %v795
    %v2925 = vunpack.c.h.b16 %v795
    %v2926 = vunpack.c.l.b16 %v796
    %v2927 = vunpack.c.h.b16 %v796
    %v2928 = vunpack.c.l.b16 %v797
    %v2929 = vunpack.c.h.b16 %v797
    %v2930 = vunpack.c.l.b16 %v798
    %v2931 = vunpack.c.h.b16 %v798
    %v2932 = vunpack.c.l.b16 %v799
    %v2933 = vunpack.c.h.b16 %v799
    %v2934 = vunpack.c.l.b16 %v800
    %v2935 = vunpack.c.h.b16 %v800
    %v2936 = vunpack.c.l.b16 %v801
    %v2937 = vunpack.c.h.b16 %v801
    %v2938 = vunpack.c.l.b16 %v802
    %v2939 = vunpack.c.h.b16 %v802
    %v2940 = vunpack.c.l.b16 %v803
    %v2941 = vunpack.c.h.b16 %v803
    %v2942 = vunpack.c.l.b16 %v804
    %v2943 = vunpack.c.h.b16 %v804
    %v2944 = vunpack.c.l.b16 %v805
    %v2945 = vunpack.c.h.b16 %v805
    %v2946 = vunpack.c.l.b16 %v806
    %v2947 = vunpack.c.h.b16 %v806
    %v2948 = vunpack.c.l.b16 %v807
    %v2949 = vunpack.c.h.b16 %v807
    %v2950 = vunpack.c.l.b16 %v808
    %v2951 = vunpack.c.h.b16 %v808
    %v2952 = vunpack.c.l.b16 %v809
    %v2953 = vunpack.c.h.b16 %v809
    %v2954 = vunpack.c.l.b16 %v810
    %v2955 = vunpack.c.h.b16 %v810
    %v2956 = vunpack.c.l.b16 %v811
    %v2957 = vunpack.c.h.b16 %v811
    %v2958 = vunpack.c.l.b16 %v812
    %v2959 = vunpack.c.h.b16 %v812
    %v2960 = vunpack.c.l.b16 %v813
    %v2961 = vunpack.c.h.b16 %v813
    %v2962 = vunpack.c.l.b16 %v814
    %v2963 = vunpack.c.h.b16 %v814
    %v2964 = vunpack.c.l.b16 %v815
    %v2965 = vunpack.c.h.b16 %v815
    %v2966 = vunpack.c.l.b16 %v816
    %v2967 = vunpack.c.h.b16 %v816
    %v2968 = vunpack.c.l.b16 %v817
    %v2969 = vunpack.c.h.b16 %v817
    %v2970 = vunpack.c.l.b16 %v818
    %v2971 = vunpack.c.h.b16 %v818
    %v2972 = vunpack.c.l.b16 %v819
    %v2973 = vunpack.c.h.b16 %v819
    %v2974 = vunpack.c.l.b16 %v820
    %v2975 = vunpack.c.h.b16 %v820
    %v2976 = vunpack.c.l.b16 %v821
    %v2977 = vunpack.c.h.b16 %v821
    %v2978 = vunpack.c.l.b16 %v822
    %v2979 = vunpack.c.h.b16 %v822
    %v2980 = vunpack.c.l.b16 %v823
    %v2981 = vunpack.c.h.b16 %v823
    %v2982 = vunpack.c.l.b16 %v824
    %v2983 = vunpack.c.h.b16 %v824
    %v2984 = vunpack.c.l.b16 %v825
    %v2985 = vunpack.c.h.b16 %v825
    %v2986 = vunpack.c.l.b16 %v826
    %v2987 = vunpack.c.h.b16 %v826
    %v2988 = vunpack.c.l.b16 %v827
    %v2989 = vunpack.c.h.b16 %v827
    %v2990 = vunpack.c.l.b16 %v828
    %v2991 = vunpack.c.h.b16 %v828
    %v2992 = vunpack.c.l.b16 %v829
    %v2993 = vunpack.c.h.b16 %v829
    %v2994 = vunpack.c.l.b16 %v830
    %v2995 = vunpack.c.h.b16 %v830
    %v2996 = vunpack.c.l.b16 %v831
    %v2997 = vunpack.c.h.b16 %v831
    %v2998 = vunpack.c.l.b16 %v832
    %v2999 = vunpack.c.h.b16 %v832
    %v3000 = vunpack.c.l.b16 %v833
    %v3001 = vunpack.c.h.b16 %v833
    %v3002 = vunpack.c.l.b16 %v834
    %v3003 = vunpack.c.h.b16 %v834
    %v3004 = vunpack.c.l.b16 %v835
    %v3005 = vunpack.c.h.b16 %v835
    %v3006 = vunpack.c.l.b16 %v836
    %v3007 = vunpack.c.h.b16 %v836
    %v3008 = vunpack.c.l.b16 %v837
    %v3009 = vunpack.c.h.b16 %v837
    %v3010 = vunpack.c.l.b16 %v838
    %v3011 = vunpack.c.h.b16 %v838
    %v3012 = vunpack.c.l.b16 %v839
    %v3013 = vunpack.c.h.b16 %v839
    %v3014 = vunpack.c.l.b16 %v840
    %v3015 = vunpack.c.h.b16 %v840
    %v3016 = vunpack.c.l.b16 %v841
    %v3017 = vunpack.c.h.b16 %v841
    %v3018 = vunpack.c.l.b16 %v842
    %v3019 = vunpack.c.h.b16 %v842
    %v3020 = vunpack.c.l.b16 %v843
    %v3021 = vunpack.c.h.b16 %v843
    %v3022 = vunpack.c.l.b16 %v844
    %v3023 = vunpack.c.h.b16 %v844
    %v3024 = vunpack.c.l.b16 %v845
    %v3025 = vunpack.c.h.b16 %v845
    %v3026 = vunpack.c.l.b16 %v846
    %v3027 = vunpack.c.h.b16 %v846
    %v3028 = vunpack.c.l.b16 %v847
    %v3029 = vunpack.c.h.b16 %v847
    %v3030 = vunpack.c.l.b16 %v848
    %v3031 = vunpack.c.h.b16 %v848
    %v3032 = vunpack.c.l.b16 %v849
    %v3033 = vunpack.c.h.b16 %v849
    %v3034 = vunpack.c.l.b16 %v850
    %v3035 = vunpack.c.h.b16 %v850
    %v3036 = vunpack.c.l.b16 %v851
    %v3037 = vunpack.c.h.b16 %v851
    %v3038 = vunpack.c.l.b16 %v852
    %v3039 = vunpack.c.h.b16 %v852
    %v3040 = vunpack.c.l.b16 %v853
    %v3041 = vunpack.c.h.b16 %v853
    %v3042 = vunpack.c.l.b16 %v854
    %v3043 = vunpack.c.h.b16 %v854
    %v3044 = vunpack.c.l.b16 %v855
    %v3045 = vunpack.c.h.b16 %v855
    %v3046 = vunpack.c.l.b16 %v856
    %v3047 = vunpack.c.h.b16 %v856
    %v3048 = vunpack.c.l.b16 %v857
    %v3049 = vunpack.c.h.b16 %v857
    %v3050 = vunpack.c.l.b16 %v858
    %v3051 = vunpack.c.h.b16 %v858
    %v3052 = vunpack.c.l.b16 %v859
    %v3053 = vunpack.c.h.b16 %v859
    %v3054 = vunpack.c.l.b16 %v860
    %v3055 = vunpack.c.h.b16 %v860
    %v3056 = vunpack.c.l.b16 %v861
    %v3057 = vunpack.c.h.b16 %v861
    %v3058 = vunpack.c.l.b16 %v862
    %v3059 = vunpack.c.h.b16 %v862
    %v3060 = vunpack.c.l.b16 %v863
    %v3061 = vunpack.c.h.b16 %v863
    %v3062 = vunpack.c.l.b16 %v864
    %v3063 = vunpack.c.h.b16 %v864
    %v3064 = vunpack.c.l.b16 %v865
    %v3065 = vunpack.c.h.b16 %v865
    %v3066 = vunpack.c.l.b16 %v866
    %v3067 = vunpack.c.h.b16 %v866
    %v3068 = vunpack.c.l.b16 %v867
    %v3069 = vunpack.c.h.b16 %v867
    %v3070 = vunpack.c.l.b16 %v868
    %v3071 = vunpack.c.h.b16 %v868
    %v3072 = vunpack.c.l.b16 %v869
    %v3073 = vunpack.c.h.b16 %v869
    %v3074 = vunpack.c.l.b16 %v870
    %v3075 = vunpack.c.h.b16 %v870
    %v3076 = vunpack.c.l.b16 %v871
    %v3077 = vunpack.c.h.b16 %v871
    %v3078 = vunpack.c.l.b16 %v872
    %v3079 = vunpack.c.h.b16 %v872
    %v3080 = vunpack.c.l.b16 %v873
    %v3081 = vunpack.c.h.b16 %v873
    %v3082 = vunpack.c.l.b16 %v874
    %v3083 = vunpack.c.h.b16 %v874
    %v3084 = vunpack.c.l.b16 %v875
    %v3085 = vunpack.c.h.b16 %v875
    %v3086 = vunpack.c.l.b16 %v876
    %v3087 = vunpack.c.h.b16 %v876
    %v3088 = vunpack.c.l.b16 %v877
    %v3089 = vunpack.c.h.b16 %v877
    %v3090 = vunpack.c.l.b16 %v878
    %v3091 = vunpack.c.h.b16 %v878
    %v3092 = vunpack.c.l.b16 %v879
    %v3093 = vunpack.c.h.b16 %v879
    %v3094 = vunpack.c.l.b16 %v880
    %v3095 = vunpack.c.h.b16 %v880
    %v3096 = vunpack.c.l.b16 %v881
    %v3097 = vunpack.c.h.b16 %v881
    %v3098 = vunpack.c.l.b16 %v882
    %v3099 = vunpack.c.h.b16 %v882
    %v3100 = vunpack.c.l.b16 %v883
    %v3101 = vunpack.c.h.b16 %v883
    %v3102 = vunpack.c.l.b16 %v884
    %v3103 = vunpack.c.h.b16 %v884
    %v3104 = vunpack.c.l.b16 %v885
    %v3105 = vunpack.c.h.b16 %v885
    %v3106 = vunpack.c.l.b16 %v886
    %v3107 = vunpack.c.h.b16 %v886
    %v3108 = vunpack.c.l.b16 %v887
    %v3109 = vunpack.c.h.b16 %v887
    %v3110 = vunpack.c.l.b16 %v888
    %v3111 = vunpack.c.h.b16 %v888
    %v3112 = vunpack.c.l.b16 %v889
    %v3113 = vunpack.c.h.b16 %v889
    %v3114 = vunpack.c.l.b16 %v890
    %v3115 = vunpack.c.h.b16 %v890
    %v3116 = vunpack.c.l.b16 %v891
    %v3117 = vunpack.c.h.b16 %v891
    %v3118 = vunpack.c.l.b16 %v892
    %v3119 = vunpack.c.h.b16 %v892
    %v3120 = vunpack.c.l.b16 %v893
    %v3121 = vunpack.c.h.b16 %v893
    %v3122 = vunpack.c.l.b16 %v894
    %v3123 = vunpack.c.h.b16 %v894
    %v3124 = vunpack.c.l.b16 %v895
    %v3125 = vunpack.c.h.b16 %v895
    %v3126 = vunpack.c.l.b16 %v896
    %v3127 = vunpack.c.h.b16 %v896
    %v3128 = vunpack.c.l.b16 %v897
    %v3129 = vunpack.c.h.b16 %v897
    %v3130 = vunpack.c.l.b16 %v898
    %v3131 = vunpack.c.h.b16 %v898
    %v3132 = vunpack.c.l.b16 %v899
    %v3133 = vunpack.c.h.b16 %v899
    %v3134 = vunpack.c.l.b16 %v900
    %v3135 = vunpack.c.h.b16 %v900
    %v3136 = vunpack.c.l.b16 %v901
    %v3137 = vunpack.c.h.b16 %v901
    %v3138 = vunpack.c.l.b16 %v902
    %v3139 = vunpack.c.h.b16 %v902
    %v3140 = vunpack.c.l.b16 %v903
    %v3141 = vunpack.c.h.b16 %v903
    %v3142 = vunpack.c.l.b16 %v904
    %v3143 = vunpack.c.h.b16 %v904
    %v3144 = vunpack.c.l.b16 %v905
    %v3145 = vunpack.c.h.b16 %v905
    %v3146 = vunpack.c.l.b16 %v906
    %v3147 = vunpack.c.h.b16 %v906
    %v3148 = vunpack.c.l.b16 %v907
    %v3149 = vunpack.c.h.b16 %v907
    %v3150 = vunpack.c.l.b16 %v908
    %v3151 = vunpack.c.h.b16 %v908
    %v3152 = vunpack.c.l.b16 %v909
    %v3153 = vunpack.c.h.b16 %v909
    %v3154 = vunpack.c.l.b16 %v910
    %v3155 = vunpack.c.h.b16 %v910
    %v3156 = vunpack.c.l.b16 %v911
    %v3157 = vunpack.c.h.b16 %v911
    %v3158 = vunpack.c.l.b16 %v912
    %v3159 = vunpack.c.h.b16 %v912
    %v3160 = vunpack.c.l.b16 %v913
    %v3161 = vunpack.c.h.b16 %v913
    %v3162 = vunpack.c.l.b16 %v914
    %v3163 = vunpack.c.h.b16 %v914
    %v3164 = vunpack.c.l.b16 %v915
    %v3165 = vunpack.c.h.b16 %v915
    %v3166 = vunpack.c.l.b16 %v916
    %v3167 = vunpack.c.h.b16 %v916
    %v3168 = vunpack.c.l.b16 %v917
    %v3169 = vunpack.c.h.b16 %v917
    %v3170 = vunpack.c.l.b16 %v918
    %v3171 = vunpack.c.h.b16 %v918
    %v3172 = vunpack.c.l.b16 %v919
    %v3173 = vunpack.c.h.b16 %v919
    %v3174 = vunpack.c.l.b16 %v920
    %v3175 = vunpack.c.h.b16 %v920
    %v3176 = vunpack.c.l.b16 %v921
    %v3177 = vunpack.c.h.b16 %v921
    %v3178 = vunpack.c.l.b16 %v922
    %v3179 = vunpack.c.h.b16 %v922
    %v3180 = vunpack.c.l.b16 %v923
    %v3181 = vunpack.c.h.b16 %v923
    %v3182 = vunpack.c.l.b16 %v924
    %v3183 = vunpack.c.h.b16 %v924
    %v3184 = vunpack.c.l.b16 %v925
    %v3185 = vunpack.c.h.b16 %v925
    %v3186 = vunpack.c.l.b16 %v926
    %v3187 = vunpack.c.h.b16 %v926
    %v3188 = vunpack.c.l.b16 %v927
    %v3189 = vunpack.c.h.b16 %v927
    %v3190 = vunpack.c.l.b16 %v928
    %v3191 = vunpack.c.h.b16 %v928
    %v3192 = vunpack.c.l.b16 %v929
    %v3193 = vunpack.c.h.b16 %v929
    %v3194 = vunpack.c.l.b16 %v930
    %v3195 = vunpack.c.h.b16 %v930
    %v3196 = vunpack.c.l.b16 %v931
    %v3197 = vunpack.c.h.b16 %v931
    %v3198 = vunpack.c.l.b16 %v932
    %v3199 = vunpack.c.h.b16 %v932
    %v3200 = vunpack.c.l.b16 %v933
    %v3201 = vunpack.c.h.b16 %v933
    %v3202 = vunpack.c.l.b16 %v934
    %v3203 = vunpack.c.h.b16 %v934
    %v3204 = vunpack.c.l.b16 %v935
    %v3205 = vunpack.c.h.b16 %v935
    %v3206 = vunpack.c.l.b16 %v936
    %v3207 = vunpack.c.h.b16 %v936
    %v3208 = vunpack.c.l.b16 %v937
    %v3209 = vunpack.c.h.b16 %v937
    %v3210 = vunpack.c.l.b16 %v938
    %v3211 = vunpack.c.h.b16 %v938
    %v3212 = vunpack.c.l.b16 %v939
    %v3213 = vunpack.c.h.b16 %v939
    %v3214 = vunpack.c.l.b16 %v940
    %v3215 = vunpack.c.h.b16 %v940
    %v3216 = vunpack.c.l.b16 %v941
    %v3217 = vunpack.c.h.b16 %v941
    %v3218 = vunpack.c.l.b16 %v942
    %v3219 = vunpack.c.h.b16 %v942
    %v3220 = vunpack.c.l.b16 %v943
    %v3221 = vunpack.c.h.b16 %v943
    %v3222 = vunpack.c.l.b16 %v944
    %v3223 = vunpack.c.h.b16 %v944
    %v3224 = vunpack.c.l.b16 %v945
    %v3225 = vunpack.c.h.b16 %v945
    %v3226 = vunpack.c.l.b16 %v946
    %v3227 = vunpack.c.h.b16 %v946
    %v3228 = vunpack.c.l.b16 %v947
    %v3229 = vunpack.c.h.b16 %v947
    %v3230 = vunpack.c.l.b16 %v948
    %v3231 = vunpack.c.h.b16 %v948
    %v3232 = vunpack.c.l.b16 %v949
    %v3233 = vunpack.c.h.b16 %v949
    %v3234 = vunpack.c.l.b16 %v950
    %v3235 = vunpack.c.h.b16 %v950
    %v3236 = vunpack.c.l.b16 %v951
    %v3237 = vunpack.c.h.b16 %v951
    %v3238 = vunpack.c.l.b16 %v952
    %v3239 = vunpack.c.h.b16 %v952
    %v3240 = vunpack.c.l.b16 %v953
    %v3241 = vunpack.c.h.b16 %v953
    %v3242 = vunpack.c.l.b16 %v954
    %v3243 = vunpack.c.h.b16 %v954
    %v3244 = vunpack.c.l.b16 %v955
    %v3245 = vunpack.c.h.b16 %v955
    %v3246 = vunpack.c.l.b16 %v956
    %v3247 = vunpack.c.h.b16 %v956
    %v3248 = vunpack.c.l.b16 %v957
    %v3249 = vunpack.c.h.b16 %v957
    %v3250 = vunpack.c.l.b16 %v958
    %v3251 = vunpack.c.h.b16 %v958
    %v3252 = vunpack.c.l.b16 %v959
    %v3253 = vunpack.c.h.b16 %v959
    %v3254 = vunpack.c.l.b16 %v960
    %v3255 = vunpack.c.h.b16 %v960
    %v3256 = vunpack.c.l.b16 %v961
    %v3257 = vunpack.c.h.b16 %v961
    %v3258 = vunpack.c.l.b16 %v962
    %v3259 = vunpack.c.h.b16 %v962
    %v3260 = vunpack.c.l.b16 %v963
    %v3261 = vunpack.c.h.b16 %v963
    %v3262 = vunpack.c.l.b16 %v964
    %v3263 = vunpack.c.h.b16 %v964
    %v3264 = vunpack.c.l.b16 %v965
    %v3265 = vunpack.c.h.b16 %v965
    %v3266 = vunpack.c.l.b16 %v966
    %v3267 = vunpack.c.h.b16 %v966
    %v3268 = vunpack.c.l.b16 %v967
    %v3269 = vunpack.c.h.b16 %v967
    %v3270 = vunpack.c.l.b16 %v968
    %v3271 = vunpack.c.h.b16 %v968
    %v3272 = vunpack.c.l.b16 %v969
    %v3273 = vunpack.c.h.b16 %v969
    %v3274 = vunpack.c.l.b16 %v970
    %v3275 = vunpack.c.h.b16 %v970
    %v3276 = vunpack.c.l.b16 %v971
    %v3277 = vunpack.c.h.b16 %v971
    %v3278 = vunpack.c.l.b16 %v972
    %v3279 = vunpack.c.h.b16 %v972
    %v3280 = vunpack.c.l.b16 %v973
    %v3281 = vunpack.c.h.b16 %v973
    %v3282 = vunpack.c.l.b16 %v974
    %v3283 = vunpack.c.h.b16 %v974
    %v3284 = vunpack.c.l.b16 %v975
    %v3285 = vunpack.c.h.b16 %v975
    %v3286 = vunpack.c.l.b16 %v976
    %v3287 = vunpack.c.h.b16 %v976
    %v3288 = vunpack.c.l.b16 %v977
    %v3289 = vunpack.c.h.b16 %v977
    %v3290 = vunpack.c.l.b16 %v978
    %v3291 = vunpack.c.h.b16 %v978
    %v3292 = vunpack.c.l.b16 %v979
    %v3293 = vunpack.c.h.b16 %v979
    %v3294 = vunpack.c.l.b16 %v980
    %v3295 = vunpack.c.h.b16 %v980
    %v3296 = vunpack.c.l.b16 %v981
    %v3297 = vunpack.c.h.b16 %v981
    %v3298 = vunpack.c.l.b16 %v982
    %v3299 = vunpack.c.h.b16 %v982
    %v3300 = vunpack.c.l.b16 %v983
    %v3301 = vunpack.c.h.b16 %v983
    %v3302 = vunpack.c.l.b16 %v984
    %v3303 = vunpack.c.h.b16 %v984
    %v3304 = vunpack.c.l.b16 %v985
    %v3305 = vunpack.c.h.b16 %v985
    %v3306 = vunpack.c.l.b16 %v986
    %v3307 = vunpack.c.h.b16 %v986
    %v3308 = vunpack.c.l.b16 %v987
    %v3309 = vunpack.c.h.b16 %v987
    %v3310 = vunpack.c.l.b16 %v988
    %v3311 = vunpack.c.h.b16 %v988
    %v3312 = vunpack.c.l.b16 %v989
    %v3313 = vunpack.c.h.b16 %v989
    %v3314 = vunpack.c.l.b16 %v990
    %v3315 = vunpack.c.h.b16 %v990
    %v3316 = vunpack.c.l.b16 %v991
    %v3317 = vunpack.c.h.b16 %v991
    %v3318 = vpack.c.b16 %v1786, %v1782
    %v3319 = vpack.c.b16 %v1787, %v1783
    %v3320 = vpack.c.b16 %v1788, %v1784
    %v3321 = vpack.c.b16 %v1789, %v1785
    %v3322 = vpack.c.b16 %v1794, %v1790
    %v3323 = vpack.c.b16 %v1795, %v1791
    %v3324 = vpack.c.b16 %v1796, %v1792
    %v3325 = vpack.c.b16 %v1797, %v1793
    %v3326 = vpack.c.b16 %v1802, %v1798
    %v3327 = vpack.c.b16 %v1803, %v1799
    %v3328 = vpack.c.b16 %v1804, %v1800
    %v3329 = vpack.c.b16 %v1805, %v1801
    %v3330 = vpack.c.b16 %v1810, %v1806
    %v3331 = vpack.c.b16 %v1811, %v1807
    %v3332 = vpack.c.b16 %v1812, %v1808
    %v3333 = vpack.c.b16 %v1813, %v1809
    %v3334 = vpack.c.b16 %v1818, %v1814
    %v3335 = vpack.c.b16 %v1819, %v1815
    %v3336 = vpack.c.b16 %v1820, %v1816
    %v3337 = vpack.c.b16 %v1821, %v1817
    %v3338 = vpack.c.b16 %v1826, %v1822
    %v3339 = vpack.c.b16 %v1827, %v1823
    %v3340 = vpack.c.b16 %v1828, %v1824
    %v3341 = vpack.c.b16 %v1829, %v1825
    %v3342 = vpack.c.b16 %v1834, %v1830
    %v3343 = vpack.c.b16 %v1835, %v1831
    %v3344 = vpack.c.b16 %v1836, %v1832
    %v3345 = vpack.c.b16 %v1837, %v1833
    %v3346 = vpack.c.b16 %v1842, %v1838
    %v3347 = vpack.c.b16 %v1843, %v1839
    %v3348 = vpack.c.b16 %v1844, %v1840
    %v3349 = vpack.c.b16 %v1845, %v1841
    %v3350 = vpack.c.b16 %v1850, %v1846
    %v3351 = vpack.c.b16 %v1851, %v1847
    %v3352 = vpack.c.b16 %v1852, %v1848
    %v3353 = vpack.c.b16 %v1853, %v1849
    %v3354 = vpack.c.b16 %v1858, %v1854
    %v3355 = vpack.c.b16 %v1859, %v1855
    %v3356 = vpack.c.b16 %v1860, %v1856
    %v3357 = vpack.c.b16 %v1861, %v1857
    %v3358 = vpack.c.b16 %v1866, %v1862
    %v3359 = vpack.c.b16 %v1867, %v1863
    %v3360 = vpack.c.b16 %v1868, %v1864
    %v3361 = vpack.c.b16 %v1869, %v1865
    %v3362 = vpack.c.b16 %v1874, %v1870
    %v3363 = vpack.c.b16 %v1875, %v1871
    %v3364 = vpack.c.b16 %v1876, %v1872
    %v3365 = vpack.c.b16 %v1877, %v1873
    %v3366 = vpack.c.b16 %v1882, %v1878
    %v3367 = vpack.c.b16 %v1883, %v1879
    %v3368 = vpack.c.b16 %v1884, %v1880
    %v3369 = vpack.c.b16 %v1885, %v1881
    %v3370 = vpack.c.b16 %v1890, %v1886
    %v3371 = vpack.c.b16 %v1891, %v1887
    %v3372 = vpack.c.b16 %v1892, %v1888
    %v3373 = vpack.c.b16 %v1893, %v1889
    %v3374 = vpack.c.b16 %v1898, %v1894
    %v3375 = vpack.c.b16 %v1899, %v1895
    %v3376 = vpack.c.b16 %v1900, %v1896
    %v3377 = vpack.c.b16 %v1901, %v1897
    %v3378 = vpack.c.b16 %v1906, %v1902
    %v3379 = vpack.c.b16 %v1907, %v1903
    %v3380 = vpack.c.b16 %v1908, %v1904
    %v3381 = vpack.c.b16 %v1909, %v1905
    %v3382 = vpack.c.b16 %v1914, %v1910
    %v3383 = vpack.c.b16 %v1915, %v1911
    %v3384 = vpack.c.b16 %v1916, %v1912
    %v3385 = vpack.c.b16 %v1917, %v1913
    %v3386 = vpack.c.b16 %v1922, %v1918
    %v3387 = vpack.c.b16 %v1923, %v1919
    %v3388 = vpack.c.b16 %v1924, %v1920
    %v3389 = vpack.c.b16 %v1925, %v1921
    %v3390 = vpack.c.b16 %v1930, %v1926
    %v3391 = vpack.c.b16 %v1931, %v1927
    %v3392 = vpack.c.b16 %v1932, %v1928
    %v3393 = vpack.c.b16 %v1933, %v1929
    %v3394 = vpack.c.b16 %v1938, %v1934
    %v3395 = vpack.c.b16 %v1939, %v1935
    %v3396 = vpack.c.b16 %v1940, %v1936
    %v3397 = vpack.c.b16 %v1941, %v1937
    %v3398 = vpack.c.b16 %v1946, %v1942
    %v3399 = vpack.c.b16 %v1947, %v1943
    %v3400 = vpack.c.b16 %v1948, %v1944
    %v3401 = vpack.c.b16 %v1949, %v1945
    %v3402 = vpack.c.b16 %v1954, %v1950
    %v3403 = vpack.c.b16 %v1955, %v1951
    %v3404 = vpack.c.b16 %v1956, %v1952
    %v3405 = vpack.c.b16 %v1957, %v1953
    %v3406 = vpack.c.b16 %v1962, %v1958
    %v3407 = vpack.c.b16 %v1963, %v1959
    %v3408 = vpack.c.b16 %v1964, %v1960
    %v3409 = vpack.c.b16 %v1965, %v1961
    %v3410 = vpack.c.b16 %v1970, %v1966
    %v3411 = vpack.c.b16 %v1971, %v1967
    %v3412 = vpack.c.b16 %v1972, %v1968
    %v3413 = vpack.c.b16 %v1973, %v1969
    %v3414 = vpack.c.b16 %v1978, %v1974
    %v3415 = vpack.c.b16 %v1979, %v1975
    %v3416 = vpack.c.b16 %v1980, %v1976
    %v3417 = vpack.c.b16 %v1981, %v1977
    %v3418 = vpack.c.b16 %v1986, %v1982
    %v3419 = vpack.c.b16 %v1987, %v1983
    %v3420 = vpack.c.b16 %v1988, %v1984
    %v3421 = vpack.c.b16 %v1989, %v1985
    %v3422 = vpack.c.b16 %v1994, %v1990
    %v3423 = vpack.c.b16 %v1995, %v1991
    %v3424 = vpack.c.b16 %v1996, %v1992
    %v3425 = vpack.c.b16 %v1997, %v1993
    %v3426 = vpack.c.b16 %v2002, %v1998
    %v3427 = vpack.c.b16 %v2003, %v1999
    %v3428 = vpack.c.b16 %v2004, %v2000
    %v3429 = vpack.c.b16 %v2005, %v2001
    %v3430 = vpack.c.b16 %v2010, %v2006
    %v3431 = vpack.c.b16 %v2011, %v2007
    %v3432 = vpack.c.b16 %v2012, %v2008
    %v3433 = vpack.c.b16 %v2013, %v2009
    %v3434 = vpack.c.b16 %v2018, %v2014
    %v3435 = vpack.c.b16 %v2019, %v2015
    %v3436 = vpack.c.b16 %v2020, %v2016
    %v3437 = vpack.c.b16 %v2021, %v2017
    %v3438 = vpack.c.b16 %v2026, %v2022
    %v3439 = vpack.c.b16 %v2027, %v2023
    %v3440 = vpack.c.b16 %v2028, %v2024
    %v3441 = vpack.c.b16 %v2029, %v2025
    %v3442 = vpack.c.b16 %v2034, %v2030
    %v3443 = vpack.c.b16 %v2035, %v2031
    %v3444 = vpack.c.b16 %v2036, %v2032
    %v3445 = vpack.c.b16 %v2037, %v2033
    %v3446 = vpack.c.b16 %v2042, %v2038
    %v3447 = vpack.c.b16 %v2043, %v2039
    %v3448 = vpack.c.b16 %v2044, %v2040
    %v3449 = vpack.c.b16 %v2045, %v2041
    %v3450 = vpack.c.b16 %v2050, %v2046
    %v3451 = vpack.c.b16 %v2051, %v2047
    %v3452 = vpack.c.b16 %v2052, %v2048
    %v3453 = vpack.c.b16 %v2053, %v2049
    %v3454 = vpack.c.b16 %v2058, %v2054
    %v3455 = vpack.c.b16 %v2059, %v2055
    %v3456 = vpack.c.b16 %v2060, %v2056
    %v3457 = vpack.c.b16 %v2061, %v2057
    %v3458 = vpack.c.b16 %v2066, %v2062
    %v3459 = vpack.c.b16 %v2067, %v2063
    %v3460 = vpack.c.b16 %v2068, %v2064
    %v3461 = vpack.c.b16 %v2069, %v2065
    %v3462 = vpack.c.b16 %v2074, %v2070
    %v3463 = vpack.c.b16 %v2075, %v2071
    %v3464 = vpack.c.b16 %v2076, %v2072
    %v3465 = vpack.c.b16 %v2077, %v2073
    %v3466 = vpack.c.b16 %v2082, %v2078
    %v3467 = vpack.c.b16 %v2083, %v2079
    %v3468 = vpack.c.b16 %v2084, %v2080
    %v3469 = vpack.c.b16 %v2085, %v2081
    %v3470 = vpack.c.b16 %v2090, %v2086
    %v3471 = vpack.c.b16 %v2091, %v2087
    %v3472 = vpack.c.b16 %v2092, %v2088
    %v3473 = vpack.c.b16 %v2093, %v2089
    %v3474 = vpack.c.b16 %v2098, %v2094
    %v3475 = vpack.c.b16 %v2099, %v2095
    %v3476 = vpack.c.b16 %v2100, %v2096
    %v3477 = vpack.c.b16 %v2101, %v2097
    %v3478 = vpack.c.b16 %v2106, %v2102
    %v3479 = vpack.c.b16 %v2107, %v2103
    %v3480 = vpack.c.b16 %v2108, %v2104
    %v3481 = vpack.c.b16 %v2109, %v2105
    %v3482 = vpack.c.b16 %v2114, %v2110
    %v3483 = vpack.c.b16 %v2115, %v2111
    %v3484 = vpack.c.b16 %v2116, %v2112
    %v3485 = vpack.c.b16 %v2117, %v2113
    %v3486 = vpack.c.b16 %v2122, %v2118
    %v3487 = vpack.c.b16 %v2123, %v2119
    %v3488 = vpack.c.b16 %v2124, %v2120
    %v3489 = vpack.c.b16 %v2125, %v2121
    %v3490 = vpack.c.b16 %v2130, %v2126
    %v3491 = vpack.c.b16 %v2131, %v2127
    %v3492 = vpack.c.b16 %v2132, %v2128
    %v3493 = vpack.c.b16 %v2133, %v2129
    %v3494 = vpack.c.b16 %v2138, %v2134
    %v3495 = vpack.c.b16 %v2139, %v2135
    %v3496 = vpack.c.b16 %v2140, %v2136
    %v3497 = vpack.c.b16 %v2141, %v2137
    %v3498 = vpack.c.b16 %v2146, %v2142
    %v3499 = vpack.c.b16 %v2147, %v2143
    %v3500 = vpack.c.b16 %v2148, %v2144
    %v3501 = vpack.c.b16 %v2149, %v2145
    %v3502 = vpack.c.b16 %v2154, %v2150
    %v3503 = vpack.c.b16 %v2155, %v2151
    %v3504 = vpack.c.b16 %v2156, %v2152
    %v3505 = vpack.c.b16 %v2157, %v2153
    %v3506 = vpack.c.b16 %v2162, %v2158
    %v3507 = vpack.c.b16 %v2163, %v2159
    %v3508 = vpack.c.b16 %v2164, %v2160
    %v3509 = vpack.c.b16 %v2165, %v2161
    %v3510 = vpack.c.b16 %v2170, %v2166
    %v3511 = vpack.c.b16 %v2171, %v2167
    %v3512 = vpack.c.b16 %v2172, %v2168
    %v3513 = vpack.c.b16 %v2173, %v2169
    %v3514 = vpack.c.b16 %v2178, %v2174
    %v3515 = vpack.c.b16 %v2179, %v2175
    %v3516 = vpack.c.b16 %v2180, %v2176
    %v3517 = vpack.c.b16 %v2181, %v2177
    %v3518 = vpack.c.b16 %v2186, %v2182
    %v3519 = vpack.c.b16 %v2187, %v2183
    %v3520 = vpack.c.b16 %v2188, %v2184
    %v3521 = vpack.c.b16 %v2189, %v2185
    %v3522 = vpack.c.b16 %v2194, %v2190
    %v3523 = vpack.c.b16 %v2195, %v2191
    %v3524 = vpack.c.b16 %v2196, %v2192
    %v3525 = vpack.c.b16 %v2197, %v2193
    %v3526 = vpack.c.b16 %v2202, %v2198
    %v3527 = vpack.c.b16 %v2203, %v2199
    %v3528 = vpack.c.b16 %v2204, %v2200
    %v3529 = vpack.c.b16 %v2205, %v2201
    %v3530 = vpack.c.b16 %v2210, %v2206
    %v3531 = vpack.c.b16 %v2211, %v2207
    %v3532 = vpack.c.b16 %v2212, %v2208
    %v3533 = vpack.c.b16 %v2213, %v2209
    %v3534 = vpack.c.b16 %v2218, %v2214
    %v3535 = vpack.c.b16 %v2219, %v2215
    %v3536 = vpack.c.b16 %v2220, %v2216
    %v3537 = vpack.c.b16 %v2221, %v2217
    %v3538 = vpack.c.b16 %v2226, %v2222
    %v3539 = vpack.c.b16 %v2227, %v2223
    %v3540 = vpack.c.b16 %v2228, %v2224
    %v3541 = vpack.c.b16 %v2229, %v2225
    %v3542 = vpack.c.b16 %v2234, %v2230
    %v3543 = vpack.c.b16 %v2235, %v2231
    %v3544 = vpack.c.b16 %v2236, %v2232
    %v3545 = vpack.c.b16 %v2237, %v2233
    %v3546 = vpack.c.b16 %v2242, %v2238
    %v3547 = vpack.c.b16 %v2243, %v2239
    %v3548 = vpack.c.b16 %v2244, %v2240
    %v3549 = vpack.c.b16 %v2245, %v2241
    %v3550 = vpack.c.b16 %v2250, %v2246
    %v3551 = vpack.c.b16 %v2251, %v2247
    %v3552 = vpack.c.b16 %v2252, %v2248
    %v3553 = vpack.c.b16 %v2253, %v2249
    %v3554 = vpack.c.b16 %v2258, %v2254
    %v3555 = vpack.c.b16 %v2259, %v2255
    %v3556 = vpack.c.b16 %v2260, %v2256
    %v3557 = vpack.c.b16 %v2261, %v2257
    %v3558 = vpack.c.b16 %v2266, %v2262
    %v3559 = vpack.c.b16 %v2267, %v2263
    %v3560 = vpack.c.b16 %v2268, %v2264
    %v3561 = vpack.c.b16 %v2269, %v2265
    %v3562 = vpack.c.b16 %v2274, %v2270
    %v3563 = vpack.c.b16 %v2275, %v2271
    %v3564 = vpack.c.b16 %v2276, %v2272
    %v3565 = vpack.c.b16 %v2277, %v2273
    %v3566 = vpack.c.b16 %v2282, %v2278
    %v3567 = vpack.c.b16 %v2283, %v2279
    %v3568 = vpack.c.b16 %v2284, %v2280
    %v3569 = vpack.c.b16 %v2285, %v2281
    %v3570 = vpack.c.b16 %v2290, %v2286
    %v3571 = vpack.c.b16 %v2291, %v2287
    %v3572 = vpack.c.b16 %v2292, %v2288
    %v3573 = vpack.c.b16 %v2293, %v2289
    %v3574 = vpack.c.b16 %v2298, %v2294
    %v3575 = vpack.c.b16 %v2299, %v2295
    %v3576 = vpack.c.b16 %v2300, %v2296
    %v3577 = vpack.c.b16 %v2301, %v2297
    %v3578 = vpack.c.b16 %v2306, %v2302
    %v3579 = vpack.c.b16 %v2307, %v2303
    %v3580 = vpack.c.b16 %v2308, %v2304
    %v3581 = vpack.c.b16 %v2309, %v2305
    %v3582 = vpack.c.b16 %v2314, %v2310
    %v3583 = vpack.c.b16 %v2315, %v2311
    %v3584 = vpack.c.b16 %v2316, %v2312
    %v3585 = vpack.c.b16 %v2317, %v2313
    %v3586 = vpack.c.b16 %v2322, %v2318
    %v3587 = vpack.c.b16 %v2323, %v2319
    %v3588 = vpack.c.b16 %v2324, %v2320
    %v3589 = vpack.c.b16 %v2325, %v2321
    %v3590 = vpack.c.b16 %v2330, %v2326
    %v3591 = vpack.c.b16 %v2331, %v2327
    %v3592 = vpack.c.b16 %v2332, %v2328
    %v3593 = vpack.c.b16 %v2333, %v2329
    %v3594 = vpack.c.b16 %v2338, %v2334
    %v3595 = vpack.c.b16 %v2339, %v2335
    %v3596 = vpack.c.b16 %v2340, %v2336
    %v3597 = vpack.c.b16 %v2341, %v2337
    %v3598 = vpack.c.b16 %v2346, %v2342
    %v3599 = vpack.c.b16 %v2347, %v2343
    %v3600 = vpack.c.b16 %v2348, %v2344
    %v3601 = vpack.c.b16 %v2349, %v2345
    %v3602 = vpack.c.b16 %v2354, %v2350
    %v3603 = vpack.c.b16 %v2355, %v2351
    %v3604 = vpack.c.b16 %v2356, %v2352
    %v3605 = vpack.c.b16 %v2357, %v2353
    %v3606 = vpack.c.b16 %v2362, %v2358
    %v3607 = vpack.c.b16 %v2363, %v2359
    %v3608 = vpack.c.b16 %v2364, %v2360
    %v3609 = vpack.c.b16 %v2365, %v2361
    %v3610 = vpack.c.b16 %v2370, %v2366
    %v3611 = vpack.c.b16 %v2371, %v2367
    %v3612 = vpack.c.b16 %v2372, %v2368
    %v3613 = vpack.c.b16 %v2373, %v2369
    %v3614 = vpack.c.b16 %v2378, %v2374
    %v3615 = vpack.c.b16 %v2379, %v2375
    %v3616 = vpack.c.b16 %v2380, %v2376
    %v3617 = vpack.c.b16 %v2381, %v2377
    %v3618 = vpack.c.b16 %v2386, %v2382
    %v3619 = vpack.c.b16 %v2387, %v2383
    %v3620 = vpack.c.b16 %v2388, %v2384
    %v3621 = vpack.c.b16 %v2389, %v2385
    %v3622 = vpack.c.b16 %v2394, %v2390
    %v3623 = vpack.c.b16 %v2395, %v2391
    %v3624 = vpack.c.b16 %v2396, %v2392
    %v3625 = vpack.c.b16 %v2397, %v2393
    %v3626 = vpack.c.b16 %v2402, %v2398
    %v3627 = vpack.c.b16 %v2403, %v2399
    %v3628 = vpack.c.b16 %v2404, %v2400
    %v3629 = vpack.c.b16 %v2405, %v2401
    %v3630 = vpack.c.b16 %v2410, %v2406
    %v3631 = vpack.c.b16 %v2411, %v2407
    %v3632 = vpack.c.b16 %v2412, %v2408
    %v3633 = vpack.c.b16 %v2413, %v2409
    %v3634 = vpack.c.b16 %v2418, %v2414
    %v3635 = vpack.c.b16 %v2419, %v2415
    %v3636 = vpack.c.b16 %v2420, %v2416
    %v3637 = vpack.c.b16 %v2421, %v2417
    %v3638 = vpack.c.b16 %v2426, %v2422
    %v3639 = vpack.c.b16 %v2427, %v2423
    %v3640 = vpack.c.b16 %v2428, %v2424
    %v3641 = vpack.c.b16 %v2429, %v2425
    %v3642 = vpack.c.b16 %v2434, %v2430
    %v3643 = vpack.c.b16 %v2435, %v2431
    %v3644 = vpack.c.b16 %v2436, %v2432
    %v3645 = vpack.c.b16 %v2437, %v2433
    %v3646 = vpack.c.b16 %v2442, %v2438
    %v3647 = vpack.c.b16 %v2443, %v2439
    %v3648 = vpack.c.b16 %v2444, %v2440
    %v3649 = vpack.c.b16 %v2445, %v2441
    %v3650 = vpack.c.b16 %v2450, %v2446
    %v3651 = vpack.c.b16 %v2451, %v2447
    %v3652 = vpack.c.b16 %v2452, %v2448
    %v3653 = vpack.c.b16 %v2453, %v2449
    %v3654 = vpack.c.b16 %v2458, %v2454
    %v3655 = vpack.c.b16 %v2459, %v2455
    %v3656 = vpack.c.b16 %v2460, %v2456
    %v3657 = vpack.c.b16 %v2461, %v2457
    %v3658 = vpack.c.b16 %v2466, %v2462
    %v3659 = vpack.c.b16 %v2467, %v2463
    %v3660 = vpack.c.b16 %v2468, %v2464
    %v3661 = vpack.c.b16 %v2469, %v2465
    %v3662 = vpack.c.b16 %v2474, %v2470
    %v3663 = vpack.c.b16 %v2475, %v2471
    %v3664 = vpack.c.b16 %v2476, %v2472
    %v3665 = vpack.c.b16 %v2477, %v2473
    %v3666 = vpack.c.b16 %v2482, %v2478
    %v3667 = vpack.c.b16 %v2483, %v2479
    %v3668 = vpack.c.b16 %v2484, %v2480
    %v3669 = vpack.c.b16 %v2485, %v2481
    %v3670 = vpack.c.b16 %v2490, %v2486
    %v3671 = vpack.c.b16 %v2491, %v2487
    %v3672 = vpack.c.b16 %v2492, %v2488
    %v3673 = vpack.c.b16 %v2493, %v2489
    %v3674 = vpack.c.b16 %v2498, %v2494
    %v3675 = vpack.c.b16 %v2499, %v2495
    %v3676 = vpack.c.b16 %v2500, %v2496
    %v3677 = vpack.c.b16 %v2501, %v2497
    %v3678 = vpack.c.b16 %v2506, %v2502
    %v3679 = vpack.c.b16 %v2507, %v2503
    %v3680 = vpack.c.b16 %v2508, %v2504
    %v3681 = vpack.c.b16 %v2509, %v2505
    %v3682 = vpack.c.b16 %v2514, %v2510
    %v3683 = vpack.c.b16 %v2515, %v2511
    %v3684 = vpack.c.b16 %v2516, %v2512
    %v3685 = vpack.c.b16 %v2517, %v2513
    %v3686 = vpack.c.b16 %v2522, %v2518
    %v3687 = vpack.c.b16 %v2523, %v2519
    %v3688 = vpack.c.b16 %v2524, %v2520
    %v3689 = vpack.c.b16 %v2525, %v2521
    %v3690 = vpack.c.b16 %v2530, %v2526
    %v3691 = vpack.c.b16 %v2531, %v2527
    %v3692 = vpack.c.b16 %v2532, %v2528
    %v3693 = vpack.c.b16 %v2533, %v2529
    %v3694 = vpack.c.b16 %v2538, %v2534
    %v3695 = vpack.c.b16 %v2539, %v2535
    %v3696 = vpack.c.b16 %v2540, %v2536
    %v3697 = vpack.c.b16 %v2541, %v2537
    %v3698 = vpack.c.b16 %v2546, %v2542
    %v3699 = vpack.c.b16 %v2547, %v2543
    %v3700 = vpack.c.b16 %v2548, %v2544
    %v3701 = vpack.c.b16 %v2549, %v2545
    %v3702 = vpack.c.b16 %v2554, %v2550
    %v3703 = vpack.c.b16 %v2555, %v2551
    %v3704 = vpack.c.b16 %v2556, %v2552
    %v3705 = vpack.c.b16 %v2557, %v2553
    %v3706 = vpack.c.b16 %v2562, %v2558
    %v3707 = vpack.c.b16 %v2563, %v2559
    %v3708 = vpack.c.b16 %v2564, %v2560
    %v3709 = vpack.c.b16 %v2565, %v2561
    %v3710 = vpack.c.b16 %v2570, %v2566
    %v3711 = vpack.c.b16 %v2571, %v2567
    %v3712 = vpack.c.b16 %v2572, %v2568
    %v3713 = vpack.c.b16 %v2573, %v2569
    %v3714 = vpack.c.b16 %v2578, %v2574
    %v3715 = vpack.c.b16 %v2579, %v2575
    %v3716 = vpack.c.b16 %v2580, %v2576
    %v3717 = vpack.c.b16 %v2581, %v2577
    %v3718 = vpack.c.b16 %v2586, %v2582
    %v3719 = vpack.c.b16 %v2587, %v2583
    %v3720 = vpack.c.b16 %v2588, %v2584
    %v3721 = vpack.c.b16 %v2589, %v2585
    %v3722 = vpack.c.b16 %v2594, %v2590
    %v3723 = vpack.c.b16 %v2595, %v2591
    %v3724 = vpack.c.b16 %v2596, %v2592
    %v3725 = vpack.c.b16 %v2597, %v2593
    %v3726 = vpack.c.b16 %v2602, %v2598
    %v3727 = vpack.c.b16 %v2603, %v2599
    %v3728 = vpack.c.b16 %v2604, %v2600
    %v3729 = vpack.c.b16 %v2605, %v2601
    %v3730 = vpack.c.b16 %v2610, %v2606
    %v3731 = vpack.c.b16 %v2611, %v2607
    %v3732 = vpack.c.b16 %v2612, %v2608
    %v3733 = vpack.c.b16 %v2613, %v2609
    %v3734 = vpack.c.b16 %v2618, %v2614
    %v3735 = vpack.c.b16 %v2619, %v2615
    %v3736 = vpack.c.b16 %v2620, %v2616
    %v3737 = vpack.c.b16 %v2621, %v2617
    %v3738 = vpack.c.b16 %v2626, %v2622
    %v3739 = vpack.c.b16 %v2627, %v2623
    %v3740 = vpack.c.b16 %v2628, %v2624
    %v3741 = vpack.c.b16 %v2629, %v2625
    %v3742 = vpack.c.b16 %v2634, %v2630
    %v3743 = vpack.c.b16 %v2635, %v2631
    %v3744 = vpack.c.b16 %v2636, %v2632
    %v3745 = vpack.c.b16 %v2637, %v2633
    %v3746 = vpack.c.b16 %v2642, %v2638
    %v3747 = vpack.c.b16 %v2643, %v2639
    %v3748 = vpack.c.b16 %v2644, %v2640
    %v3749 = vpack.c.b16 %v2645, %v2641
    %v3750 = vpack.c.b16 %v2650, %v2646
    %v3751 = vpack.c.b16 %v2651, %v2647
    %v3752 = vpack.c.b16 %v2652, %v2648
    %v3753 = vpack.c.b16 %v2653, %v2649
    %v3754 = vpack.c.b16 %v2658, %v2654
    %v3755 = vpack.c.b16 %v2659, %v2655
    %v3756 = vpack.c.b16 %v2660, %v2656
    %v3757 = vpack.c.b16 %v2661, %v2657
    %v3758 = vpack.c.b16 %v2666, %v2662
    %v3759 = vpack.c.b16 %v2667, %v2663
    %v3760 = vpack.c.b16 %v2668, %v2664
    %v3761 = vpack.c.b16 %v2669, %v2665
    %v3762 = vpack.c.b16 %v2674, %v2670
    %v3763 = vpack.c.b16 %v2675, %v2671
    %v3764 = vpack.c.b16 %v2676, %v2672
    %v3765 = vpack.c.b16 %v2677, %v2673
    %v3766 = vpack.c.b16 %v2682, %v2678
    %v3767 = vpack.c.b16 %v2683, %v2679
    %v3768 = vpack.c.b16 %v2684, %v2680
    %v3769 = vpack.c.b16 %v2685, %v2681
    %v3770 = vpack.c.b16 %v2690, %v2686
    %v3771 = vpack.c.b16 %v2691, %v2687
    %v3772 = vpack.c.b16 %v2692, %v2688
    %v3773 = vpack.c.b16 %v2693, %v2689
    %v3774 = vpack.c.b16 %v2698, %v2694
    %v3775 = vpack.c.b16 %v2699, %v2695
    %v3776 = vpack.c.b16 %v2700, %v2696
    %v3777 = vpack.c.b16 %v2701, %v2697
    %v3778 = vpack.c.b16 %v2706, %v2702
    %v3779 = vpack.c.b16 %v2707, %v2703
    %v3780 = vpack.c.b16 %v2708, %v2704
    %v3781 = vpack.c.b16 %v2709, %v2705
    %v3782 = vpack.c.b16 %v2714, %v2710
    %v3783 = vpack.c.b16 %v2715, %v2711
    %v3784 = vpack.c.b16 %v2716, %v2712
    %v3785 = vpack.c.b16 %v2717, %v2713
    %v3786 = vpack.c.b16 %v2722, %v2718
    %v3787 = vpack.c.b16 %v2723, %v2719
    %v3788 = vpack.c.b16 %v2724, %v2720
    %v3789 = vpack.c.b16 %v2725, %v2721
    %v3790 = vpack.c.b16 %v2730, %v2726
    %v3791 = vpack.c.b16 %v2731, %v2727
    %v3792 = vpack.c.b16 %v2732, %v2728
    %v3793 = vpack.c.b16 %v2733, %v2729
    %v3794 = vpack.c.b16 %v2738, %v2734
    %v3795 = vpack.c.b16 %v2739, %v2735
    %v3796 = vpack.c.b16 %v2740, %v2736
    %v3797 = vpack.c.b16 %v2741, %v2737
    %v3798 = vpack.c.b16 %v2746, %v2742
    %v3799 = vpack.c.b16 %v2747, %v2743
    %v3800 = vpack.c.b16 %v2748, %v2744
    %v3801 = vpack.c.b16 %v2749, %v2745
    %v3802 = vpack.c.b16 %v2754, %v2750
    %v3803 = vpack.c.b16 %v2755, %v2751
    %v3804 = vpack.c.b16 %v2756, %v2752
    %v3805 = vpack.c.b16 %v2757, %v2753
    %v3806 = vpack.c.b16 %v2762, %v2758
    %v3807 = vpack.c.b16 %v2763, %v2759
    %v3808 = vpack.c.b16 %v2764, %v2760
    %v3809 = vpack.c.b16 %v2765, %v2761
    %v3810 = vpack.c.b16 %v2770, %v2766
    %v3811 = vpack.c.b16 %v2771, %v2767
    %v3812 = vpack.c.b16 %v2772, %v2768
    %v3813 = vpack.c.b16 %v2773, %v2769
    %v3814 = vpack.c.b16 %v2778, %v2774
    %v3815 = vpack.c.b16 %v2779, %v2775
    %v3816 = vpack.c.b16 %v2780, %v2776
    %v3817 = vpack.c.b16 %v2781, %v2777
    %v3818 = vpack.c.b16 %v2786, %v2782
    %v3819 = vpack.c.b16 %v2787, %v2783
    %v3820 = vpack.c.b16 %v2788, %v2784
    %v3821 = vpack.c.b16 %v2789, %v2785
    %v3822 = vpack.c.b16 %v2794, %v2790
    %v3823 = vpack.c.b16 %v2795, %v2791
    %v3824 = vpack.c.b16 %v2796, %v2792
    %v3825 = vpack.c.b16 %v2797, %v2793
    %v3826 = vpack.c.b16 %v2802, %v2798
    %v3827 = vpack.c.b16 %v2803, %v2799
    %v3828 = vpack.c.b16 %v2804, %v2800
    %v3829 = vpack.c.b16 %v2805, %v2801
    %v3830 = vpack.c.b16 %v2810, %v2806
    %v3831 = vpack.c.b16 %v2811, %v2807
    %v3832 = vpack.c.b16 %v2812, %v2808
    %v3833 = vpack.c.b16 %v2813, %v2809
    %v3834 = vpack.c.b16 %v2818, %v2814
    %v3835 = vpack.c.b16 %v2819, %v2815
    %v3836 = vpack.c.b16 %v2820, %v2816
    %v3837 = vpack.c.b16 %v2821, %v2817
    %v3838 = vpack.c.b16 %v2826, %v2822
    %v3839 = vpack.c.b16 %v2827, %v2823
    %v3840 = vpack.c.b16 %v2828, %v2824
    %v3841 = vpack.c.b16 %v2829, %v2825
    %v3842 = vpack.c.b16 %v2834, %v2830
    %v3843 = vpack.c.b16 %v2835, %v2831
    %v3844 = vpack.c.b16 %v2836, %v2832
    %v3845 = vpack.c.b16 %v2837, %v2833
    %v3846 = vpack.c.b16 %v2842, %v2838
    %v3847 = vpack.c.b16 %v2843, %v2839
    %v3848 = vpack.c.b16 %v2844, %v2840
    %v3849 = vpack.c.b16 %v2845, %v2841
    %v3850 = vpack.c.b16 %v2850, %v2846
    %v3851 = vpack.c.b16 %v2851, %v2847
    %v3852 = vpack.c.b16 %v2852, %v2848
    %v3853 = vpack.c.b16 %v2853, %v2849
    %v3854 = vpack.c.b16 %v2858, %v2854
    %v3855 = vpack.c.b16 %v2859, %v2855
    %v3856 = vpack.c.b16 %v2860, %v2856
    %v3857 = vpack.c.b16 %v2861, %v2857
    %v3858 = vpack.c.b16 %v2866, %v2862
    %v3859 = vpack.c.b16 %v2867, %v2863
    %v3860 = vpack.c.b16 %v2868, %v2864
    %v3861 = vpack.c.b16 %v2869, %v2865
    %v3862 = vpack.c.b16 %v2874, %v2870
    %v3863 = vpack.c.b16 %v2875, %v2871
    %v3864 = vpack.c.b16 %v2876, %v2872
    %v3865 = vpack.c.b16 %v2877, %v2873
    %v3866 = vpack.c.b16 %v2882, %v2878
    %v3867 = vpack.c.b16 %v2883, %v2879
    %v3868 = vpack.c.b16 %v2884, %v2880
    %v3869 = vpack.c.b16 %v2885, %v2881
    %v3870 = vpack.c.b16 %v2890, %v2886
    %v3871 = vpack.c.b16 %v2891, %v2887
    %v3872 = vpack.c.b16 %v2892, %v2888
    %v3873 = vpack.c.b16 %v2893, %v2889
    %v3874 = vpack.c.b16 %v2898, %v2894
    %v3875 = vpack.c.b16 %v2899, %v2895
    %v3876 = vpack.c.b16 %v2900, %v2896
    %v3877 = vpack.c.b16 %v2901, %v2897
    %v3878 = vpack.c.b16 %v2906, %v2902
    %v3879 = vpack.c.b16 %v2907, %v2903
    %v3880 = vpack.c.b16 %v2908, %v2904
    %v3881 = vpack.c.b16 %v2909, %v2905
    %v3882 = vpack.c.b16 %v2914, %v2910
    %v3883 = vpack.c.b16 %v2915, %v2911
    %v3884 = vpack.c.b16 %v2916, %v2912
    %v3885 = vpack.c.b16 %v2917, %v2913
    %v3886 = vpack.c.b16 %v2922, %v2918
    %v3887 = vpack.c.b16 %v2923, %v2919
    %v3888 = vpack.c.b16 %v2924, %v2920
    %v3889 = vpack.c.b16 %v2925, %v2921
    %v3890 = vpack.c.b16 %v2930, %v2926
    %v3891 = vpack.c.b16 %v2931, %v2927
    %v3892 = vpack.c.b16 %v2932, %v2928
    %v3893 = vpack.c.b16 %v2933, %v2929
    %v3894 = vpack.c.b16 %v2938, %v2934
    %v3895 = vpack.c.b16 %v2939, %v2935
    %v3896 = vpack.c.b16 %v2940, %v2936
    %v3897 = vpack.c.b16 %v2941, %v2937
    %v3898 = vpack.c.b16 %v2946, %v2942
    %v3899 = vpack.c.b16 %v2947, %v2943
    %v3900 = vpack.c.b16 %v2948, %v2944
    %v3901 = vpack.c.b16 %v2949, %v2945
    %v3902 = vpack.c.b16 %v2954, %v2950
    %v3903 = vpack.c.b16 %v2955, %v2951
    %v3904 = vpack.c.b16 %v2956, %v2952
    %v3905 = vpack.c.b16 %v2957, %v2953
    %v3906 = vpack.c.b16 %v2962, %v2958
    %v3907 = vpack.c.b16 %v2963, %v2959
    %v3908 = vpack.c.b16 %v2964, %v2960
    %v3909 = vpack.c.b16 %v2965, %v2961
    %v3910 = vpack.c.b16 %v2970, %v2966
    %v3911 = vpack.c.b16 %v2971, %v2967
    %v3912 = vpack.c.b16 %v2972, %v2968
    %v3913 = vpack.c.b16 %v2973, %v2969
    %v3914 = vpack.c.b16 %v2978, %v2974
    %v3915 = vpack.c.b16 %v2979, %v2975
    %v3916 = vpack.c.b16 %v2980, %v2976
    %v3917 = vpack.c.b16 %v2981, %v2977
    %v3918 = vpack.c.b16 %v2986, %v2982
    %v3919 = vpack.c.b16 %v2987, %v2983
    %v3920 = vpack.c.b16 %v2988, %v2984
    %v3921 = vpack.c.b16 %v2989, %v2985
    %v3922 = vpack.c.b16 %v2994, %v2990
    %v3923 = vpack.c.b16 %v2995, %v2991
    %v3924 = vpack.c.b16 %v2996, %v2992
    %v3925 = vpack.c.b16 %v2997, %v2993
    %v3926 = vpack.c.b16 %v3002, %v2998
    %v3927 = vpack.c.b16 %v3003, %v2999
    %v3928 = vpack.c.b16 %v3004, %v3000
    %v3929 = vpack.c.b16 %v3005, %v3001
    %v3930 = vpack.c.b16 %v3010, %v3006
    %v3931 = vpack.c.b16 %v3011, %v3007
    %v3932 = vpack.c.b16 %v3012, %v3008
    %v3933 = vpack.c.b16 %v3013, %v3009
    %v3934 = vpack.c.b16 %v3018, %v3014
    %v3935 = vpack.c.b16 %v3019, %v3015
    %v3936 = vpack.c.b16 %v3020, %v3016
    %v3937 = vpack.c.b16 %v3021, %v3017
    %v3938 = vpack.c.b16 %v3026, %v3022
    %v3939 = vpack.c.b16 %v3027, %v3023
    %v3940 = vpack.c.b16 %v3028, %v3024
    %v3941 = vpack.c.b16 %v3029, %v3025
    %v3942 = vpack.c.b16 %v3034, %v3030
    %v3943 = vpack.c.b16 %v3035, %v3031
    %v3944 = vpack.c.b16 %v3036, %v3032
    %v3945 = vpack.c.b16 %v3037, %v3033
    %v3946 = vpack.c.b16 %v3042, %v3038
    %v3947 = vpack.c.b16 %v3043, %v3039
    %v3948 = vpack.c.b16 %v3044, %v3040
    %v3949 = vpack.c.b16 %v3045, %v3041
    %v3950 = vpack.c.b16 %v3050, %v3046
    %v3951 = vpack.c.b16 %v3051, %v3047
    %v3952 = vpack.c.b16 %v3052, %v3048
    %v3953 = vpack.c.b16 %v3053, %v3049
    %v3954 = vpack.c.b16 %v3058, %v3054
    %v3955 = vpack.c.b16 %v3059, %v3055
    %v3956 = vpack.c.b16 %v3060, %v3056
    %v3957 = vpack.c.b16 %v3061, %v3057
    %v3958 = vpack.c.b16 %v3066, %v3062
    %v3959 = vpack.c.b16 %v3067, %v3063
    %v3960 = vpack.c.b16 %v3068, %v3064
    %v3961 = vpack.c.b16 %v3069, %v3065
    %v3962 = vpack.c.b16 %v3074, %v3070
    %v3963 = vpack.c.b16 %v3075, %v3071
    %v3964 = vpack.c.b16 %v3076, %v3072
    %v3965 = vpack.c.b16 %v3077, %v3073
    %v3966 = vpack.c.b16 %v3082, %v3078
    %v3967 = vpack.c.b16 %v3083, %v3079
    %v3968 = vpack.c.b16 %v3084, %v3080
    %v3969 = vpack.c.b16 %v3085, %v3081
    %v3970 = vpack.c.b16 %v3090, %v3086
    %v3971 = vpack.c.b16 %v3091, %v3087
    %v3972 = vpack.c.b16 %v3092, %v3088
    %v3973 = vpack.c.b16 %v3093, %v3089
    %v3974 = vpack.c.b16 %v3098, %v3094
    %v3975 = vpack.c.b16 %v3099, %v3095
    %v3976 = vpack.c.b16 %v3100, %v3096
    %v3977 = vpack.c.b16 %v3101, %v3097
    %v3978 = vpack.c.b16 %v3106, %v3102
    %v3979 = vpack.c.b16 %v3107, %v3103
    %v3980 = vpack.c.b16 %v3108, %v3104
    %v3981 = vpack.c.b16 %v3109, %v3105
    %v3982 = vpack.c.b16 %v3114, %v3110
    %v3983 = vpack.c.b16 %v3115, %v3111
    %v3984 = vpack.c.b16 %v3116, %v3112
    %v3985 = vpack.c.b16 %v3117, %v3113
    %v3986 = vpack.c.b16 %v3122, %v3118
    %v3987 = vpack.c.b16 %v3123, %v3119
    %v3988 = vpack.c.b16 %v3124, %v3120
    %v3989 = vpack.c.b16 %v3125, %v3121
    %v3990 = vpack.c.b16 %v3130, %v3126
    %v3991 = vpack.c.b16 %v3131, %v3127
    %v3992 = vpack.c.b16 %v3132, %v3128
    %v3993 = vpack.c.b16 %v3133, %v3129
    %v3994 = vpack.c.b16 %v3138, %v3134
    %v3995 = vpack.c.b16 %v3139, %v3135
    %v3996 = vpack.c.b16 %v3140, %v3136
    %v3997 = vpack.c.b16 %v3141, %v3137
    %v3998 = vpack.c.b16 %v3146, %v3142
    %v3999 = vpack.c.b16 %v3147, %v3143
    %v4000 = vpack.c.b16 %v3148, %v3144
    %v4001 = vpack.c.b16 %v3149, %v3145
    %v4002 = vpack.c.b16 %v3154, %v3150
    %v4003 = vpack.c.b16 %v3155, %v3151
    %v4004 = vpack.c.b16 %v3156, %v3152
    %v4005 = vpack.c.b16 %v3157, %v3153
    %v4006 = vpack.c.b16 %v3162, %v3158
    %v4007 = vpack.c.b16 %v3163, %v3159
    %v4008 = vpack.c.b16 %v3164, %v3160
    %v4009 = vpack.c.b16 %v3165, %v3161
    %v4010 = vpack.c.b16 %v3170, %v3166
    %v4011 = vpack.c.b16 %v3171, %v3167
    %v4012 = vpack.c.b16 %v3172, %v3168
    %v4013 = vpack.c.b16 %v3173, %v3169
    %v4014 = vpack.c.b16 %v3178, %v3174
    %v4015 = vpack.c.b16 %v3179, %v3175
    %v4016 = vpack.c.b16 %v3180, %v3176
    %v4017 = vpack.c.b16 %v3181, %v3177
    %v4018 = vpack.c.b16 %v3186, %v3182
    %v4019 = vpack.c.b16 %v3187, %v3183
    %v4020 = vpack.c.b16 %v3188, %v3184
    %v4021 = vpack.c.b16 %v3189, %v3185
    %v4022 = vpack.c.b16 %v3194, %v3190
    %v4023 = vpack.c.b16 %v3195, %v3191
    %v4024 = vpack.c.b16 %v3196, %v3192
    %v4025 = vpack.c.b16 %v3197, %v3193
    %v4026 = vpack.c.b16 %v3202, %v3198
    %v4027 = vpack.c.b16 %v3203, %v3199
    %v4028 = vpack.c.b16 %v3204, %v3200
    %v4029 = vpack.c.b16 %v3205, %v3201
    %v4030 = vpack.c.b16 %v3210, %v3206
    %v4031 = vpack.c.b16 %v3211, %v3207
    %v4032 = vpack.c.b16 %v3212, %v3208
    %v4033 = vpack.c.b16 %v3213, %v3209
    %v4034 = vpack.c.b16 %v3218, %v3214
    %v4035 = vpack.c.b16 %v3219, %v3215
    %v4036 = vpack.c.b16 %v3220, %v3216
    %v4037 = vpack.c.b16 %v3221, %v3217
    %v4038 = vpack.c.b16 %v3226, %v3222
    %v4039 = vpack.c.b16 %v3227, %v3223
    %v4040 = vpack.c.b16 %v3228, %v3224
    %v4041 = vpack.c.b16 %v3229, %v3225
    %v4042 = vpack.c.b16 %v3234, %v3230
    %v4043 = vpack.c.b16 %v3235, %v3231
    %v4044 = vpack.c.b16 %v3236, %v3232
    %v4045 = vpack.c.b16 %v3237, %v3233
    %v4046 = vpack.c.b16 %v3242, %v3238
    %v4047 = vpack.c.b16 %v3243, %v3239
    %v4048 = vpack.c.b16 %v3244, %v3240
    %v4049 = vpack.c.b16 %v3245, %v3241
    %v4050 = vpack.c.b16 %v3250, %v3246
    %v4051 = vpack.c.b16 %v3251, %v3247
    %v4052 = vpack.c.b16 %v3252, %v3248
    %v4053 = vpack.c.b16 %v3253, %v3249
    %v4054 = vpack.c.b16 %v3258, %v3254
    %v4055 = vpack.c.b16 %v3259, %v3255
    %v4056 = vpack.c.b16 %v3260, %v3256
    %v4057 = vpack.c.b16 %v3261, %v3257
    %v4058 = vpack.c.b16 %v3266, %v3262
    %v4059 = vpack.c.b16 %v3267, %v3263
    %v4060 = vpack.c.b16 %v3268, %v3264
    %v4061 = vpack.c.b16 %v3269, %v3265
    %v4062 = vpack.c.b16 %v3274, %v3270
    %v4063 = vpack.c.b16 %v3275, %v3271
    %v4064 = vpack.c.b16 %v3276, %v3272
    %v4065 = vpack.c.b16 %v3277, %v3273
    %v4066 = vpack.c.b16 %v3282, %v3278
    %v4067 = vpack.c.b16 %v3283, %v3279
    %v4068 = vpack.c.b16 %v3284, %v3280
    %v4069 = vpack.c.b16 %v3285, %v3281
    %v4070 = vpack.c.b16 %v3290, %v3286
    %v4071 = vpack.c.b16 %v3291, %v3287
    %v4072 = vpack.c.b16 %v3292, %v3288
    %v4073 = vpack.c.b16 %v3293, %v3289
    %v4074 = vpack.c.b16 %v3298, %v3294
    %v4075 = vpack.c.b16 %v3299, %v3295
    %v4076 = vpack.c.b16 %v3300, %v3296
    %v4077 = vpack.c.b16 %v3301, %v3297
    %v4078 = vpack.c.b16 %v3306, %v3302
    %v4079 = vpack.c.b16 %v3307, %v3303
    %v4080 = vpack.c.b16 %v3308, %v3304
    %v4081 = vpack.c.b16 %v3309, %v3305
    %v4082 = vpack.c.b16 %v3314, %v3310
    %v4083 = vpack.c.b16 %v3315, %v3311
    %v4084 = vpack.c.b16 %v3316, %v3312
    %v4085 = vpack.c.b16 %v3317, %v3313
    %4854 = vmatprep.subr.bf16.mxu0 %v3347
    %4855 = vmatpush1.bf16.msra.mxu0 %v3346
    %4856 = vmatprep.subr.bf16.mxu0 %v3343
    %4857 = vmatpush1.bf16.msra.mxu0 %v3342
    %4858 = vmatprep.subr.bf16.mxu0 %v3339
    %4859 = vmatpush1.bf16.msra.mxu0 %v3338
    %4860 = vmatprep.subr.bf16.mxu0 %v3335
    %4861 = vmatpush1.bf16.msra.mxu0 %v3334
    %4862 = vmatprep.subr.bf16.mxu0 %v3331
    %4863 = vmatpush1.bf16.msra.mxu0 %v3330
    %4864 = vmatprep.subr.bf16.mxu0 %v3327
    %4865 = vmatpush1.bf16.msra.mxu0 %v3326
    %4866 = vmatprep.subr.bf16.mxu0 %v3323
    %4867 = vmatpush1.bf16.msra.mxu0 %v3322
    %4868 = vmatprep.subr.bf16.mxu0 %v3319
    %4869 = vmatpush1.bf16.msra.mxu0 %v3318
    %4870 = vmatprep.subr.bf16.mxu0 %v3379
    %4871 = vmatpush2.bf16.msra.mxu0 %v3378
    %4872 = vmatprep.subr.bf16.mxu0 %v3375
    %4873 = vmatpush2.bf16.msra.mxu0 %v3374
    %4874 = vmatprep.subr.bf16.mxu0 %v3371
    %4875 = vmatpush2.bf16.msra.mxu0 %v3370
    %4876 = vmatprep.subr.bf16.mxu0 %v3367
    %4877 = vmatpush2.bf16.msra.mxu0 %v3366
    %4878 = vmatprep.subr.bf16.mxu0 %v3363
    %4879 = vmatpush2.bf16.msra.mxu0 %v3362
    %4880 = vmatprep.subr.bf16.mxu0 %v3359
    %4881 = vmatpush2.bf16.msra.mxu0 %v3358
    %4882 = vmatprep.subr.bf16.mxu0 %v3355
    %4883 = vmatpush2.bf16.msra.mxu0 %v3354
    %4884 = vmatprep.subr.bf16.mxu0 %v3351
    %4885 = vmatpush2.bf16.msra.mxu0 %v3350
    %4886 = vmatprep.mubr.bf16.mxu0 %v201
    %4887 = vmatmul.mubr.bf16.gmra.mxu0 %v200
    %v4888 = vpop.f32.mrf.mxu0
    %v4889 = vadd.f32 %v997, %v4888
    %v4890 = vpop.f32.mrf.mxu0
    %v4891 = vadd.f32 %v1001, %v4890
    %v4892 = vpop.f32.mrf.mxu0
    %v4893 = vpop.f32.mrf.mxu0
    %4894 = vdwg.mxu0
    %4895 = vmatprep.subr.bf16.mxu0 %v3411
    %4896 = vmatpush1.bf16.msra.mxu0 %v3410
    %4897 = vmatprep.subr.bf16.mxu0 %v3407
    %4898 = vmatpush1.bf16.msra.mxu0 %v3406
    %4899 = vmatprep.subr.bf16.mxu0 %v3403
    %4900 = vmatpush1.bf16.msra.mxu0 %v3402
    %4901 = vmatprep.subr.bf16.mxu0 %v3399
    %4902 = vmatpush1.bf16.msra.mxu0 %v3398
    %4903 = vmatprep.subr.bf16.mxu0 %v3395
    %4904 = vmatpush1.bf16.msra.mxu0 %v3394
    %4905 = vmatprep.subr.bf16.mxu0 %v3391
    %4906 = vmatpush1.bf16.msra.mxu0 %v3390
    %4907 = vmatprep.subr.bf16.mxu0 %v3387
    %4908 = vmatpush1.bf16.msra.mxu0 %v3386
    %4909 = vmatprep.subr.bf16.mxu0 %v3383
    %4910 = vmatpush1.bf16.msra.mxu0 %v3382
    %4911 = vmatprep.subr.bf16.mxu0 %v3443
    %4912 = vmatpush2.bf16.msra.mxu0 %v3442
    %4913 = vmatprep.subr.bf16.mxu0 %v3439
    %4914 = vmatpush2.bf16.msra.mxu0 %v3438
    %4915 = vmatprep.subr.bf16.mxu0 %v3435
    %4916 = vmatpush2.bf16.msra.mxu0 %v3434
    %4917 = vmatprep.subr.bf16.mxu0 %v3431
    %4918 = vmatpush2.bf16.msra.mxu0 %v3430
    %4919 = vmatprep.subr.bf16.mxu0 %v3427
    %4920 = vmatpush2.bf16.msra.mxu0 %v3426
    %4921 = vmatprep.subr.bf16.mxu0 %v3423
    %4922 = vmatpush2.bf16.msra.mxu0 %v3422
    %4923 = vmatprep.subr.bf16.mxu0 %v3419
    %4924 = vmatpush2.bf16.msra.mxu0 %v3418
    %4925 = vmatprep.subr.bf16.mxu0 %v3415
    %4926 = vmatpush2.bf16.msra.mxu0 %v3414
    %4927 = vmatprep.mubr.bf16.mxu0 %v203
    %4928 = vmatmul.mubr.bf16.gmra.mxu0 %v202
    %v4929 = vpop.f32.mrf.mxu0
    %v4930 = vadd.f32 %v4889, %v4929
    %v4931 = vpop.f32.mrf.mxu0
    %v4932 = vadd.f32 %v4891, %v4931
    %v4933 = vpop.f32.mrf.mxu0
    %v4934 = vpop.f32.mrf.mxu0
    %4935 = vdwg.mxu0
    %4936 = vmatprep.subr.bf16.mxu0 %v3475
    %4937 = vmatpush1.bf16.msra.mxu0 %v3474
    %4938 = vmatprep.subr.bf16.mxu0 %v3471
    %4939 = vmatpush1.bf16.msra.mxu0 %v3470
    %4940 = vmatprep.subr.bf16.mxu0 %v3467
    %4941 = vmatpush1.bf16.msra.mxu0 %v3466
    %4942 = vmatprep.subr.bf16.mxu0 %v3463
    %4943 = vmatpush1.bf16.msra.mxu0 %v3462
    %4944 = vmatprep.subr.bf16.mxu0 %v3459
    %4945 = vmatpush1.bf16.msra.mxu0 %v3458
    %4946 = vmatprep.subr.bf16.mxu0 %v3455
    %4947 = vmatpush1.bf16.msra.mxu0 %v3454
    %4948 = vmatprep.subr.bf16.mxu0 %v3451
    %4949 = vmatpush1.bf16.msra.mxu0 %v3450
    %4950 = vmatprep.subr.bf16.mxu0 %v3447
    %4951 = vmatpush1.bf16.msra.mxu0 %v3446
    %4952 = vmatprep.subr.bf16.mxu0 %v3507
    %4953 = vmatpush2.bf16.msra.mxu0 %v3506
    %4954 = vmatprep.subr.bf16.mxu0 %v3503
    %4955 = vmatpush2.bf16.msra.mxu0 %v3502
    %4956 = vmatprep.subr.bf16.mxu0 %v3499
    %4957 = vmatpush2.bf16.msra.mxu0 %v3498
    %4958 = vmatprep.subr.bf16.mxu0 %v3495
    %4959 = vmatpush2.bf16.msra.mxu0 %v3494
    %4960 = vmatprep.subr.bf16.mxu0 %v3491
    %4961 = vmatpush2.bf16.msra.mxu0 %v3490
    %4962 = vmatprep.subr.bf16.mxu0 %v3487
    %4963 = vmatpush2.bf16.msra.mxu0 %v3486
    %4964 = vmatprep.subr.bf16.mxu0 %v3483
    %4965 = vmatpush2.bf16.msra.mxu0 %v3482
    %4966 = vmatprep.subr.bf16.mxu0 %v3479
    %4967 = vmatpush2.bf16.msra.mxu0 %v3478
    %4968 = vmatprep.mubr.bf16.mxu0 %v205
    %4969 = vmatmul.mubr.bf16.gmra.mxu0 %v204
    %v4970 = vpop.f32.mrf.mxu0
    %v4971 = vadd.f32 %v4930, %v4970
    %v4972 = vpop.f32.mrf.mxu0
    %v4973 = vadd.f32 %v4932, %v4972
    %v4974 = vpop.f32.mrf.mxu0
    %v4975 = vpop.f32.mrf.mxu0
    %4976 = vdwg.mxu0
    %4977 = vmatprep.subr.bf16.mxu0 %v3539
    %4978 = vmatpush1.bf16.msra.mxu0 %v3538
    %4979 = vmatprep.subr.bf16.mxu0 %v3535
    %4980 = vmatpush1.bf16.msra.mxu0 %v3534
    %4981 = vmatprep.subr.bf16.mxu0 %v3531
    %4982 = vmatpush1.bf16.msra.mxu0 %v3530
    %4983 = vmatprep.subr.bf16.mxu0 %v3527
    %4984 = vmatpush1.bf16.msra.mxu0 %v3526
    %4985 = vmatprep.subr.bf16.mxu0 %v3523
    %4986 = vmatpush1.bf16.msra.mxu0 %v3522
    %4987 = vmatprep.subr.bf16.mxu0 %v3519
    %4988 = vmatpush1.bf16.msra.mxu0 %v3518
    %4989 = vmatprep.subr.bf16.mxu0 %v3515
    %4990 = vmatpush1.bf16.msra.mxu0 %v3514
    %4991 = vmatprep.subr.bf16.mxu0 %v3511
    %4992 = vmatpush1.bf16.msra.mxu0 %v3510
    %4993 = vmatprep.subr.bf16.mxu0 %v3571
    %4994 = vmatpush2.bf16.msra.mxu0 %v3570
    %4995 = vmatprep.subr.bf16.mxu0 %v3567
    %4996 = vmatpush2.bf16.msra.mxu0 %v3566
    %4997 = vmatprep.subr.bf16.mxu0 %v3563
    %4998 = vmatpush2.bf16.msra.mxu0 %v3562
    %4999 = vmatprep.subr.bf16.mxu0 %v3559
    %5000 = vmatpush2.bf16.msra.mxu0 %v3558
    %5001 = vmatprep.subr.bf16.mxu0 %v3555
    %5002 = vmatpush2.bf16.msra.mxu0 %v3554
    %5003 = vmatprep.subr.bf16.mxu0 %v3551
    %5004 = vmatpush2.bf16.msra.mxu0 %v3550
    %5005 = vmatprep.subr.bf16.mxu0 %v3547
    %5006 = vmatpush2.bf16.msra.mxu0 %v3546
    %5007 = vmatprep.subr.bf16.mxu0 %v3543
    %5008 = vmatpush2.bf16.msra.mxu0 %v3542
    %5009 = vmatprep.mubr.bf16.mxu0 %v207
    %5010 = vmatmul.mubr.bf16.gmra.mxu0 %v206
    %v5011 = vpop.f32.mrf.mxu0
    %v5012 = vadd.f32 %v4971, %v5011
    %v5013 = vpop.f32.mrf.mxu0
    %v5014 = vadd.f32 %v4973, %v5013
    %v5015 = vpop.f32.mrf.mxu0
    %v5016 = vpop.f32.mrf.mxu0
    %5017 = vdwg.mxu0
    %5018 = vmatprep.subr.bf16.mxu0 %v3603
    %5019 = vmatpush1.bf16.msra.mxu0 %v3602
    %5020 = vmatprep.subr.bf16.mxu0 %v3599
    %5021 = vmatpush1.bf16.msra.mxu0 %v3598
    %5022 = vmatprep.subr.bf16.mxu0 %v3595
    %5023 = vmatpush1.bf16.msra.mxu0 %v3594
    %5024 = vmatprep.subr.bf16.mxu0 %v3591
    %5025 = vmatpush1.bf16.msra.mxu0 %v3590
    %5026 = vmatprep.subr.bf16.mxu0 %v3587
    %5027 = vmatpush1.bf16.msra.mxu0 %v3586
    %5028 = vmatprep.subr.bf16.mxu0 %v3583
    %5029 = vmatpush1.bf16.msra.mxu0 %v3582
    %5030 = vmatprep.subr.bf16.mxu0 %v3579
    %5031 = vmatpush1.bf16.msra.mxu0 %v3578
    %5032 = vmatprep.subr.bf16.mxu0 %v3575
    %5033 = vmatpush1.bf16.msra.mxu0 %v3574
    %5034 = vmatprep.subr.bf16.mxu0 %v3635
    %5035 = vmatpush2.bf16.msra.mxu0 %v3634
    %5036 = vmatprep.subr.bf16.mxu0 %v3631
    %5037 = vmatpush2.bf16.msra.mxu0 %v3630
    %5038 = vmatprep.subr.bf16.mxu0 %v3627
    %5039 = vmatpush2.bf16.msra.mxu0 %v3626
    %5040 = vmatprep.subr.bf16.mxu0 %v3623
    %5041 = vmatpush2.bf16.msra.mxu0 %v3622
    %5042 = vmatprep.subr.bf16.mxu0 %v3619
    %5043 = vmatpush2.bf16.msra.mxu0 %v3618
    %5044 = vmatprep.subr.bf16.mxu0 %v3615
    %5045 = vmatpush2.bf16.msra.mxu0 %v3614
    %5046 = vmatprep.subr.bf16.mxu0 %v3611
    %5047 = vmatpush2.bf16.msra.mxu0 %v3610
    %5048 = vmatprep.subr.bf16.mxu0 %v3607
    %5049 = vmatpush2.bf16.msra.mxu0 %v3606
    %5050 = vmatprep.mubr.bf16.mxu0 %v209
    %5051 = vmatmul.mubr.bf16.gmra.mxu0 %v208
    %v5052 = vpop.f32.mrf.mxu0
    %v5053 = vadd.f32 %v5012, %v5052
    %v5054 = vpop.f32.mrf.mxu0
    %v5055 = vadd.f32 %v5014, %v5054
    %v5056 = vpop.f32.mrf.mxu0
    %v5057 = vpop.f32.mrf.mxu0
    %5058 = vdwg.mxu0
    %5059 = vmatprep.subr.bf16.mxu0 %v3667
    %5060 = vmatpush1.bf16.msra.mxu0 %v3666
    %5061 = vmatprep.subr.bf16.mxu0 %v3663
    %5062 = vmatpush1.bf16.msra.mxu0 %v3662
    %5063 = vmatprep.subr.bf16.mxu0 %v3659
    %5064 = vmatpush1.bf16.msra.mxu0 %v3658
    %5065 = vmatprep.subr.bf16.mxu0 %v3655
    %5066 = vmatpush1.bf16.msra.mxu0 %v3654
    %5067 = vmatprep.subr.bf16.mxu0 %v3651
    %5068 = vmatpush1.bf16.msra.mxu0 %v3650
    %5069 = vmatprep.subr.bf16.mxu0 %v3647
    %5070 = vmatpush1.bf16.msra.mxu0 %v3646
    %5071 = vmatprep.subr.bf16.mxu0 %v3643
    %5072 = vmatpush1.bf16.msra.mxu0 %v3642
    %5073 = vmatprep.subr.bf16.mxu0 %v3639
    %5074 = vmatpush1.bf16.msra.mxu0 %v3638
    %5075 = vmatprep.subr.bf16.mxu0 %v3699
    %5076 = vmatpush2.bf16.msra.mxu0 %v3698
    %5077 = vmatprep.subr.bf16.mxu0 %v3695
    %5078 = vmatpush2.bf16.msra.mxu0 %v3694
    %5079 = vmatprep.subr.bf16.mxu0 %v3691
    %5080 = vmatpush2.bf16.msra.mxu0 %v3690
    %5081 = vmatprep.subr.bf16.mxu0 %v3687
    %5082 = vmatpush2.bf16.msra.mxu0 %v3686
    %5083 = vmatprep.subr.bf16.mxu0 %v3683
    %5084 = vmatpush2.bf16.msra.mxu0 %v3682
    %5085 = vmatprep.subr.bf16.mxu0 %v3679
    %5086 = vmatpush2.bf16.msra.mxu0 %v3678
    %5087 = vmatprep.subr.bf16.mxu0 %v3675
    %5088 = vmatpush2.bf16.msra.mxu0 %v3674
    %5089 = vmatprep.subr.bf16.mxu0 %v3671
    %5090 = vmatpush2.bf16.msra.mxu0 %v3670
    %5091 = vmatprep.mubr.bf16.mxu0 %v211
    %5092 = vmatmul.mubr.bf16.gmra.mxu0 %v210
    %v5093 = vpop.f32.mrf.mxu0
    %v5094 = vadd.f32 %v5053, %v5093
    %v5095 = vpop.f32.mrf.mxu0
    %v5096 = vadd.f32 %v5055, %v5095
    %v5097 = vpop.f32.mrf.mxu0
    %v5098 = vpop.f32.mrf.mxu0
    %5099 = vdwg.mxu0
    %5100 = vmatprep.subr.bf16.mxu0 %v3731
    %5101 = vmatpush1.bf16.msra.mxu0 %v3730
    %5102 = vmatprep.subr.bf16.mxu0 %v3727
    %5103 = vmatpush1.bf16.msra.mxu0 %v3726
    %5104 = vmatprep.subr.bf16.mxu0 %v3723
    %5105 = vmatpush1.bf16.msra.mxu0 %v3722
    %5106 = vmatprep.subr.bf16.mxu0 %v3719
    %5107 = vmatpush1.bf16.msra.mxu0 %v3718
    %5108 = vmatprep.subr.bf16.mxu0 %v3715
    %5109 = vmatpush1.bf16.msra.mxu0 %v3714
    %5110 = vmatprep.subr.bf16.mxu0 %v3711
    %5111 = vmatpush1.bf16.msra.mxu0 %v3710
    %5112 = vmatprep.subr.bf16.mxu0 %v3707
    %5113 = vmatpush1.bf16.msra.mxu0 %v3706
    %5114 = vmatprep.subr.bf16.mxu0 %v3703
    %5115 = vmatpush1.bf16.msra.mxu0 %v3702
    %5116 = vmatprep.subr.bf16.mxu0 %v3763
    %5117 = vmatpush2.bf16.msra.mxu0 %v3762
    %5118 = vmatprep.subr.bf16.mxu0 %v3759
    %5119 = vmatpush2.bf16.msra.mxu0 %v3758
    %5120 = vmatprep.subr.bf16.mxu0 %v3755
    %5121 = vmatpush2.bf16.msra.mxu0 %v3754
    %5122 = vmatprep.subr.bf16.mxu0 %v3751
    %5123 = vmatpush2.bf16.msra.mxu0 %v3750
    %5124 = vmatprep.subr.bf16.mxu0 %v3747
    %5125 = vmatpush2.bf16.msra.mxu0 %v3746
    %5126 = vmatprep.subr.bf16.mxu0 %v3743
    %5127 = vmatpush2.bf16.msra.mxu0 %v3742
    %5128 = vmatprep.subr.bf16.mxu0 %v3739
    %5129 = vmatpush2.bf16.msra.mxu0 %v3738
    %5130 = vmatprep.subr.bf16.mxu0 %v3735
    %5131 = vmatpush2.bf16.msra.mxu0 %v3734
    %5132 = vmatprep.mubr.bf16.mxu0 %v213
    %5133 = vmatmul.mubr.bf16.gmra.mxu0 %v212
    %v5134 = vpop.f32.mrf.mxu0
    %v5135 = vadd.f32 %v5094, %v5134
    %v5136 = vpop.f32.mrf.mxu0
    %v5137 = vadd.f32 %v5096, %v5136
    %v5138 = vpop.f32.mrf.mxu0
    %v5139 = vpop.f32.mrf.mxu0
    %5140 = vdwg.mxu0
    %5141 = vmatprep.subr.bf16.mxu0 %v3795
    %5142 = vmatpush1.bf16.msra.mxu0 %v3794
    %5143 = vmatprep.subr.bf16.mxu0 %v3791
    %5144 = vmatpush1.bf16.msra.mxu0 %v3790
    %5145 = vmatprep.subr.bf16.mxu0 %v3787
    %5146 = vmatpush1.bf16.msra.mxu0 %v3786
    %5147 = vmatprep.subr.bf16.mxu0 %v3783
    %5148 = vmatpush1.bf16.msra.mxu0 %v3782
    %5149 = vmatprep.subr.bf16.mxu0 %v3779
    %5150 = vmatpush1.bf16.msra.mxu0 %v3778
    %5151 = vmatprep.subr.bf16.mxu0 %v3775
    %5152 = vmatpush1.bf16.msra.mxu0 %v3774
    %5153 = vmatprep.subr.bf16.mxu0 %v3771
    %5154 = vmatpush1.bf16.msra.mxu0 %v3770
    %5155 = vmatprep.subr.bf16.mxu0 %v3767
    %5156 = vmatpush1.bf16.msra.mxu0 %v3766
    %5157 = vmatprep.subr.bf16.mxu0 %v3827
    %5158 = vmatpush2.bf16.msra.mxu0 %v3826
    %5159 = vmatprep.subr.bf16.mxu0 %v3823
    %5160 = vmatpush2.bf16.msra.mxu0 %v3822
    %5161 = vmatprep.subr.bf16.mxu0 %v3819
    %5162 = vmatpush2.bf16.msra.mxu0 %v3818
    %5163 = vmatprep.subr.bf16.mxu0 %v3815
    %5164 = vmatpush2.bf16.msra.mxu0 %v3814
    %5165 = vmatprep.subr.bf16.mxu0 %v3811
    %5166 = vmatpush2.bf16.msra.mxu0 %v3810
    %5167 = vmatprep.subr.bf16.mxu0 %v3807
    %5168 = vmatpush2.bf16.msra.mxu0 %v3806
    %5169 = vmatprep.subr.bf16.mxu0 %v3803
    %5170 = vmatpush2.bf16.msra.mxu0 %v3802
    %5171 = vmatprep.subr.bf16.mxu0 %v3799
    %5172 = vmatpush2.bf16.msra.mxu0 %v3798
    %5173 = vmatprep.mubr.bf16.mxu0 %v215
    %5174 = vmatmul.mubr.bf16.gmra.mxu0 %v214
    %v5175 = vpop.f32.mrf.mxu0
    %v5176 = vadd.f32 %v5135, %v5175
    %v5177 = vpop.f32.mrf.mxu0
    %v5178 = vadd.f32 %v5137, %v5177
    %v5179 = vpop.f32.mrf.mxu0
    %v5180 = vpop.f32.mrf.mxu0
    %5181 = vdwg.mxu0
    %5182 = vmatprep.subr.bf16.mxu0 %v3859
    %5183 = vmatpush1.bf16.msra.mxu0 %v3858
    %5184 = vmatprep.subr.bf16.mxu0 %v3855
    %5185 = vmatpush1.bf16.msra.mxu0 %v3854
    %5186 = vmatprep.subr.bf16.mxu0 %v3851
    %5187 = vmatpush1.bf16.msra.mxu0 %v3850
    %5188 = vmatprep.subr.bf16.mxu0 %v3847
    %5189 = vmatpush1.bf16.msra.mxu0 %v3846
    %5190 = vmatprep.subr.bf16.mxu0 %v3843
    %5191 = vmatpush1.bf16.msra.mxu0 %v3842
    %5192 = vmatprep.subr.bf16.mxu0 %v3839
    %5193 = vmatpush1.bf16.msra.mxu0 %v3838
    %5194 = vmatprep.subr.bf16.mxu0 %v3835
    %5195 = vmatpush1.bf16.msra.mxu0 %v3834
    %5196 = vmatprep.subr.bf16.mxu0 %v3831
    %5197 = vmatpush1.bf16.msra.mxu0 %v3830
    %5198 = vmatprep.subr.bf16.mxu0 %v3891
    %5199 = vmatpush2.bf16.msra.mxu0 %v3890
    %5200 = vmatprep.subr.bf16.mxu0 %v3887
    %5201 = vmatpush2.bf16.msra.mxu0 %v3886
    %5202 = vmatprep.subr.bf16.mxu0 %v3883
    %5203 = vmatpush2.bf16.msra.mxu0 %v3882
    %5204 = vmatprep.subr.bf16.mxu0 %v3879
    %5205 = vmatpush2.bf16.msra.mxu0 %v3878
    %5206 = vmatprep.subr.bf16.mxu0 %v3875
    %5207 = vmatpush2.bf16.msra.mxu0 %v3874
    %5208 = vmatprep.subr.bf16.mxu0 %v3871
    %5209 = vmatpush2.bf16.msra.mxu0 %v3870
    %5210 = vmatprep.subr.bf16.mxu0 %v3867
    %5211 = vmatpush2.bf16.msra.mxu0 %v3866
    %5212 = vmatprep.subr.bf16.mxu0 %v3863
    %5213 = vmatpush2.bf16.msra.mxu0 %v3862
    %5214 = vmatprep.mubr.bf16.mxu0 %v217
    %5215 = vmatmul.mubr.bf16.gmra.mxu0 %v216
    %v5216 = vpop.f32.mrf.mxu0
    %v5217 = vadd.f32 %v5176, %v5216
    %v5218 = vpop.f32.mrf.mxu0
    %v5219 = vadd.f32 %v5178, %v5218
    %v5220 = vpop.f32.mrf.mxu0
    %v5221 = vpop.f32.mrf.mxu0
    %5222 = vdwg.mxu0
    %5223 = vmatprep.subr.bf16.mxu0 %v3923
    %5224 = vmatpush1.bf16.msra.mxu0 %v3922
    %5225 = vmatprep.subr.bf16.mxu0 %v3919
    %5226 = vmatpush1.bf16.msra.mxu0 %v3918
    %5227 = vmatprep.subr.bf16.mxu0 %v3915
    %5228 = vmatpush1.bf16.msra.mxu0 %v3914
    %5229 = vmatprep.subr.bf16.mxu0 %v3911
    %5230 = vmatpush1.bf16.msra.mxu0 %v3910
    %5231 = vmatprep.subr.bf16.mxu0 %v3907
    %5232 = vmatpush1.bf16.msra.mxu0 %v3906
    %5233 = vmatprep.subr.bf16.mxu0 %v3903
    %5234 = vmatpush1.bf16.msra.mxu0 %v3902
    %5235 = vmatprep.subr.bf16.mxu0 %v3899
    %5236 = vmatpush1.bf16.msra.mxu0 %v3898
    %5237 = vmatprep.subr.bf16.mxu0 %v3895
    %5238 = vmatpush1.bf16.msra.mxu0 %v3894
    %5239 = vmatprep.subr.bf16.mxu0 %v3955
    %5240 = vmatpush2.bf16.msra.mxu0 %v3954
    %5241 = vmatprep.subr.bf16.mxu0 %v3951
    %5242 = vmatpush2.bf16.msra.mxu0 %v3950
    %5243 = vmatprep.subr.bf16.mxu0 %v3947
    %5244 = vmatpush2.bf16.msra.mxu0 %v3946
    %5245 = vmatprep.subr.bf16.mxu0 %v3943
    %5246 = vmatpush2.bf16.msra.mxu0 %v3942
    %5247 = vmatprep.subr.bf16.mxu0 %v3939
    %5248 = vmatpush2.bf16.msra.mxu0 %v3938
    %5249 = vmatprep.subr.bf16.mxu0 %v3935
    %5250 = vmatpush2.bf16.msra.mxu0 %v3934
    %5251 = vmatprep.subr.bf16.mxu0 %v3931
    %5252 = vmatpush2.bf16.msra.mxu0 %v3930
    %5253 = vmatprep.subr.bf16.mxu0 %v3927
    %5254 = vmatpush2.bf16.msra.mxu0 %v3926
    %5255 = vmatprep.mubr.bf16.mxu0 %v219
    %5256 = vmatmul.mubr.bf16.gmra.mxu0 %v218
    %v5257 = vpop.f32.mrf.mxu0
    %v5258 = vadd.f32 %v5217, %v5257
    %v5259 = vpop.f32.mrf.mxu0
    %v5260 = vadd.f32 %v5219, %v5259
    %v5261 = vpop.f32.mrf.mxu0
    %v5262 = vpop.f32.mrf.mxu0
    %5263 = vdwg.mxu0
    %5264 = vmatprep.subr.bf16.mxu0 %v3987
    %5265 = vmatpush1.bf16.msra.mxu0 %v3986
    %5266 = vmatprep.subr.bf16.mxu0 %v3983
    %5267 = vmatpush1.bf16.msra.mxu0 %v3982
    %5268 = vmatprep.subr.bf16.mxu0 %v3979
    %5269 = vmatpush1.bf16.msra.mxu0 %v3978
    %5270 = vmatprep.subr.bf16.mxu0 %v3975
    %5271 = vmatpush1.bf16.msra.mxu0 %v3974
    %5272 = vmatprep.subr.bf16.mxu0 %v3971
    %5273 = vmatpush1.bf16.msra.mxu0 %v3970
    %5274 = vmatprep.subr.bf16.mxu0 %v3967
    %5275 = vmatpush1.bf16.msra.mxu0 %v3966
    %5276 = vmatprep.subr.bf16.mxu0 %v3963
    %5277 = vmatpush1.bf16.msra.mxu0 %v3962
    %5278 = vmatprep.subr.bf16.mxu0 %v3959
    %5279 = vmatpush1.bf16.msra.mxu0 %v3958
    %5280 = vmatprep.subr.bf16.mxu0 %v4019
    %5281 = vmatpush2.bf16.msra.mxu0 %v4018
    %5282 = vmatprep.subr.bf16.mxu0 %v4015
    %5283 = vmatpush2.bf16.msra.mxu0 %v4014
    %5284 = vmatprep.subr.bf16.mxu0 %v4011
    %5285 = vmatpush2.bf16.msra.mxu0 %v4010
    %5286 = vmatprep.subr.bf16.mxu0 %v4007
    %5287 = vmatpush2.bf16.msra.mxu0 %v4006
    %5288 = vmatprep.subr.bf16.mxu0 %v4003
    %5289 = vmatpush2.bf16.msra.mxu0 %v4002
    %5290 = vmatprep.subr.bf16.mxu0 %v3999
    %5291 = vmatpush2.bf16.msra.mxu0 %v3998
    %5292 = vmatprep.subr.bf16.mxu0 %v3995
    %5293 = vmatpush2.bf16.msra.mxu0 %v3994
    %5294 = vmatprep.subr.bf16.mxu0 %v3991
    %5295 = vmatpush2.bf16.msra.mxu0 %v3990
    %5296 = vmatprep.mubr.bf16.mxu0 %v221
    %5297 = vmatmul.mubr.bf16.gmra.mxu0 %v220
    %v5298 = vpop.f32.mrf.mxu0
    %v5299 = vadd.f32 %v5258, %v5298
    %v5300 = vpop.f32.mrf.mxu0
    %v5301 = vadd.f32 %v5260, %v5300
    %v5302 = vpop.f32.mrf.mxu0
    %v5303 = vpop.f32.mrf.mxu0
    %5304 = vdwg.mxu0
    %5305 = vmatprep.subr.bf16.mxu0 %v4051
    %5306 = vmatpush1.bf16.msra.mxu0 %v4050
    %5307 = vmatprep.subr.bf16.mxu0 %v4047
    %5308 = vmatpush1.bf16.msra.mxu0 %v4046
    %5309 = vmatprep.subr.bf16.mxu0 %v4043
    %5310 = vmatpush1.bf16.msra.mxu0 %v4042
    %5311 = vmatprep.subr.bf16.mxu0 %v4039
    %5312 = vmatpush1.bf16.msra.mxu0 %v4038
    %5313 = vmatprep.subr.bf16.mxu0 %v4035
    %5314 = vmatpush1.bf16.msra.mxu0 %v4034
    %5315 = vmatprep.subr.bf16.mxu0 %v4031
    %5316 = vmatpush1.bf16.msra.mxu0 %v4030
    %5317 = vmatprep.subr.bf16.mxu0 %v4027
    %5318 = vmatpush1.bf16.msra.mxu0 %v4026
    %5319 = vmatprep.subr.bf16.mxu0 %v4023
    %5320 = vmatpush1.bf16.msra.mxu0 %v4022
    %5321 = vmatprep.subr.bf16.mxu0 %v4083
    %5322 = vmatpush2.bf16.msra.mxu0 %v4082
    %5323 = vmatprep.subr.bf16.mxu0 %v4079
    %5324 = vmatpush2.bf16.msra.mxu0 %v4078
    %5325 = vmatprep.subr.bf16.mxu0 %v4075
    %5326 = vmatpush2.bf16.msra.mxu0 %v4074
    %5327 = vmatprep.subr.bf16.mxu0 %v4071
    %5328 = vmatpush2.bf16.msra.mxu0 %v4070
    %5329 = vmatprep.subr.bf16.mxu0 %v4067
    %5330 = vmatpush2.bf16.msra.mxu0 %v4066
    %5331 = vmatprep.subr.bf16.mxu0 %v4063
    %5332 = vmatpush2.bf16.msra.mxu0 %v4062
    %5333 = vmatprep.subr.bf16.mxu0 %v4059
    %5334 = vmatpush2.bf16.msra.mxu0 %v4058
    %5335 = vmatprep.subr.bf16.mxu0 %v4055
    %5336 = vmatpush2.bf16.msra.mxu0 %v4054
    %5337 = vmatprep.mubr.bf16.mxu0 %v223
    %5338 = vmatmul.mubr.bf16.gmra.mxu0 %v222
    %v5339 = vpop.f32.mrf.mxu0
    %v5340 = vadd.f32 %v5299, %v5339
    %v5341 = vpop.f32.mrf.mxu0
    %v5342 = vadd.f32 %v5301, %v5341
    %v5343 = vpop.f32.mrf.mxu0
    %v5344 = vpop.f32.mrf.mxu0
    %5345 = vdwg.mxu0
    %5346 = vmatprep.subr.bf16.mxu0 %v3349
    %5347 = vmatpush1.bf16.msra.mxu0 %v3348
    %5348 = vmatprep.subr.bf16.mxu0 %v3345
    %5349 = vmatpush1.bf16.msra.mxu0 %v3344
    %5350 = vmatprep.subr.bf16.mxu0 %v3341
    %5351 = vmatpush1.bf16.msra.mxu0 %v3340
    %5352 = vmatprep.subr.bf16.mxu0 %v3337
    %5353 = vmatpush1.bf16.msra.mxu0 %v3336
    %5354 = vmatprep.subr.bf16.mxu0 %v3333
    %5355 = vmatpush1.bf16.msra.mxu0 %v3332
    %5356 = vmatprep.subr.bf16.mxu0 %v3329
    %5357 = vmatpush1.bf16.msra.mxu0 %v3328
    %5358 = vmatprep.subr.bf16.mxu0 %v3325
    %5359 = vmatpush1.bf16.msra.mxu0 %v3324
    %5360 = vmatprep.subr.bf16.mxu0 %v3321
    %5361 = vmatpush1.bf16.msra.mxu0 %v3320
    %5362 = vmatprep.subr.bf16.mxu0 %v3381
    %5363 = vmatpush2.bf16.msra.mxu0 %v3380
    %5364 = vmatprep.subr.bf16.mxu0 %v3377
    %5365 = vmatpush2.bf16.msra.mxu0 %v3376
    %5366 = vmatprep.subr.bf16.mxu0 %v3373
    %5367 = vmatpush2.bf16.msra.mxu0 %v3372
    %5368 = vmatprep.subr.bf16.mxu0 %v3369
    %5369 = vmatpush2.bf16.msra.mxu0 %v3368
    %5370 = vmatprep.subr.bf16.mxu0 %v3365
    %5371 = vmatpush2.bf16.msra.mxu0 %v3364
    %5372 = vmatprep.subr.bf16.mxu0 %v3361
    %5373 = vmatpush2.bf16.msra.mxu0 %v3360
    %5374 = vmatprep.subr.bf16.mxu0 %v3357
    %5375 = vmatpush2.bf16.msra.mxu0 %v3356
    %5376 = vmatprep.subr.bf16.mxu0 %v3353
    %5377 = vmatpush2.bf16.msra.mxu0 %v3352
    %5378 = vmatprep.mubr.bf16.mxu0 %v201
    %5379 = vmatmul.mubr.bf16.gmra.mxu0 %v200
    %v5380 = vpop.f32.mrf.mxu0
    %v5381 = vadd.f32 %v1005, %v5380
    %v5382 = vpop.f32.mrf.mxu0
    %v5383 = vadd.f32 %v1009, %v5382
    %v5384 = vpop.f32.mrf.mxu0
    %v5385 = vpop.f32.mrf.mxu0
    %5386 = vdwg.mxu0
    %5387 = vmatprep.subr.bf16.mxu0 %v3413
    %5388 = vmatpush1.bf16.msra.mxu0 %v3412
    %5389 = vmatprep.subr.bf16.mxu0 %v3409
    %5390 = vmatpush1.bf16.msra.mxu0 %v3408
    %5391 = vmatprep.subr.bf16.mxu0 %v3405
    %5392 = vmatpush1.bf16.msra.mxu0 %v3404
    %5393 = vmatprep.subr.bf16.mxu0 %v3401
    %5394 = vmatpush1.bf16.msra.mxu0 %v3400
    %5395 = vmatprep.subr.bf16.mxu0 %v3397
    %5396 = vmatpush1.bf16.msra.mxu0 %v3396
    %5397 = vmatprep.subr.bf16.mxu0 %v3393
    %5398 = vmatpush1.bf16.msra.mxu0 %v3392
    %5399 = vmatprep.subr.bf16.mxu0 %v3389
    %5400 = vmatpush1.bf16.msra.mxu0 %v3388
    %5401 = vmatprep.subr.bf16.mxu0 %v3385
    %5402 = vmatpush1.bf16.msra.mxu0 %v3384
    %5403 = vmatprep.subr.bf16.mxu0 %v3445
    %5404 = vmatpush2.bf16.msra.mxu0 %v3444
    %5405 = vmatprep.subr.bf16.mxu0 %v3441
    %5406 = vmatpush2.bf16.msra.mxu0 %v3440
    %5407 = vmatprep.subr.bf16.mxu0 %v3437
    %5408 = vmatpush2.bf16.msra.mxu0 %v3436
    %5409 = vmatprep.subr.bf16.mxu0 %v3433
    %5410 = vmatpush2.bf16.msra.mxu0 %v3432
    %5411 = vmatprep.subr.bf16.mxu0 %v3429
    %5412 = vmatpush2.bf16.msra.mxu0 %v3428
    %5413 = vmatprep.subr.bf16.mxu0 %v3425
    %5414 = vmatpush2.bf16.msra.mxu0 %v3424
    %5415 = vmatprep.subr.bf16.mxu0 %v3421
    %5416 = vmatpush2.bf16.msra.mxu0 %v3420
    %5417 = vmatprep.subr.bf16.mxu0 %v3417
    %5418 = vmatpush2.bf16.msra.mxu0 %v3416
    %5419 = vmatprep.mubr.bf16.mxu0 %v203
    %5420 = vmatmul.mubr.bf16.gmra.mxu0 %v202
    %v5421 = vpop.f32.mrf.mxu0
    %v5422 = vadd.f32 %v5381, %v5421
    %v5423 = vpop.f32.mrf.mxu0
    %v5424 = vadd.f32 %v5383, %v5423
    %v5425 = vpop.f32.mrf.mxu0
    %v5426 = vpop.f32.mrf.mxu0
    %5427 = vdwg.mxu0
    %5428 = vmatprep.subr.bf16.mxu0 %v3477
    %5429 = vmatpush1.bf16.msra.mxu0 %v3476
    %5430 = vmatprep.subr.bf16.mxu0 %v3473
    %5431 = vmatpush1.bf16.msra.mxu0 %v3472
    %5432 = vmatprep.subr.bf16.mxu0 %v3469
    %5433 = vmatpush1.bf16.msra.mxu0 %v3468
    %5434 = vmatprep.subr.bf16.mxu0 %v3465
    %5435 = vmatpush1.bf16.msra.mxu0 %v3464
    %5436 = vmatprep.subr.bf16.mxu0 %v3461
    %5437 = vmatpush1.bf16.msra.mxu0 %v3460
    %5438 = vmatprep.subr.bf16.mxu0 %v3457
    %5439 = vmatpush1.bf16.msra.mxu0 %v3456
    %5440 = vmatprep.subr.bf16.mxu0 %v3453
    %5441 = vmatpush1.bf16.msra.mxu0 %v3452
    %5442 = vmatprep.subr.bf16.mxu0 %v3449
    %5443 = vmatpush1.bf16.msra.mxu0 %v3448
    %5444 = vmatprep.subr.bf16.mxu0 %v3509
    %5445 = vmatpush2.bf16.msra.mxu0 %v3508
    %5446 = vmatprep.subr.bf16.mxu0 %v3505
    %5447 = vmatpush2.bf16.msra.mxu0 %v3504
    %5448 = vmatprep.subr.bf16.mxu0 %v3501
    %5449 = vmatpush2.bf16.msra.mxu0 %v3500
    %5450 = vmatprep.subr.bf16.mxu0 %v3497
    %5451 = vmatpush2.bf16.msra.mxu0 %v3496
    %5452 = vmatprep.subr.bf16.mxu0 %v3493
    %5453 = vmatpush2.bf16.msra.mxu0 %v3492
    %5454 = vmatprep.subr.bf16.mxu0 %v3489
    %5455 = vmatpush2.bf16.msra.mxu0 %v3488
    %5456 = vmatprep.subr.bf16.mxu0 %v3485
    %5457 = vmatpush2.bf16.msra.mxu0 %v3484
    %5458 = vmatprep.subr.bf16.mxu0 %v3481
    %5459 = vmatpush2.bf16.msra.mxu0 %v3480
    %5460 = vmatprep.mubr.bf16.mxu0 %v205
    %5461 = vmatmul.mubr.bf16.gmra.mxu0 %v204
    %v5462 = vpop.f32.mrf.mxu0
    %v5463 = vadd.f32 %v5422, %v5462
    %v5464 = vpop.f32.mrf.mxu0
    %v5465 = vadd.f32 %v5424, %v5464
    %v5466 = vpop.f32.mrf.mxu0
    %v5467 = vpop.f32.mrf.mxu0
    %5468 = vdwg.mxu0
    %5469 = vmatprep.subr.bf16.mxu0 %v3541
    %5470 = vmatpush1.bf16.msra.mxu0 %v3540
    %5471 = vmatprep.subr.bf16.mxu0 %v3537
    %5472 = vmatpush1.bf16.msra.mxu0 %v3536
    %5473 = vmatprep.subr.bf16.mxu0 %v3533
    %5474 = vmatpush1.bf16.msra.mxu0 %v3532
    %5475 = vmatprep.subr.bf16.mxu0 %v3529
    %5476 = vmatpush1.bf16.msra.mxu0 %v3528
    %5477 = vmatprep.subr.bf16.mxu0 %v3525
    %5478 = vmatpush1.bf16.msra.mxu0 %v3524
    %5479 = vmatprep.subr.bf16.mxu0 %v3521
    %5480 = vmatpush1.bf16.msra.mxu0 %v3520
    %5481 = vmatprep.subr.bf16.mxu0 %v3517
    %5482 = vmatpush1.bf16.msra.mxu0 %v3516
    %5483 = vmatprep.subr.bf16.mxu0 %v3513
    %5484 = vmatpush1.bf16.msra.mxu0 %v3512
    %5485 = vmatprep.subr.bf16.mxu0 %v3573
    %5486 = vmatpush2.bf16.msra.mxu0 %v3572
    %5487 = vmatprep.subr.bf16.mxu0 %v3569
    %5488 = vmatpush2.bf16.msra.mxu0 %v3568
    %5489 = vmatprep.subr.bf16.mxu0 %v3565
    %5490 = vmatpush2.bf16.msra.mxu0 %v3564
    %5491 = vmatprep.subr.bf16.mxu0 %v3561
    %5492 = vmatpush2.bf16.msra.mxu0 %v3560
    %5493 = vmatprep.subr.bf16.mxu0 %v3557
    %5494 = vmatpush2.bf16.msra.mxu0 %v3556
    %5495 = vmatprep.subr.bf16.mxu0 %v3553
    %5496 = vmatpush2.bf16.msra.mxu0 %v3552
    %5497 = vmatprep.subr.bf16.mxu0 %v3549
    %5498 = vmatpush2.bf16.msra.mxu0 %v3548
    %5499 = vmatprep.subr.bf16.mxu0 %v3545
    %5500 = vmatpush2.bf16.msra.mxu0 %v3544
    %5501 = vmatprep.mubr.bf16.mxu0 %v207
    %5502 = vmatmul.mubr.bf16.gmra.mxu0 %v206
    %v5503 = vpop.f32.mrf.mxu0
    %v5504 = vadd.f32 %v5463, %v5503
    %v5505 = vpop.f32.mrf.mxu0
    %v5506 = vadd.f32 %v5465, %v5505
    %v5507 = vpop.f32.mrf.mxu0
    %v5508 = vpop.f32.mrf.mxu0
    %5509 = vdwg.mxu0
    %5510 = vmatprep.subr.bf16.mxu0 %v3605
    %5511 = vmatpush1.bf16.msra.mxu0 %v3604
    %5512 = vmatprep.subr.bf16.mxu0 %v3601
    %5513 = vmatpush1.bf16.msra.mxu0 %v3600
    %5514 = vmatprep.subr.bf16.mxu0 %v3597
    %5515 = vmatpush1.bf16.msra.mxu0 %v3596
    %5516 = vmatprep.subr.bf16.mxu0 %v3593
    %5517 = vmatpush1.bf16.msra.mxu0 %v3592
    %5518 = vmatprep.subr.bf16.mxu0 %v3589
    %5519 = vmatpush1.bf16.msra.mxu0 %v3588
    %5520 = vmatprep.subr.bf16.mxu0 %v3585
    %5521 = vmatpush1.bf16.msra.mxu0 %v3584
    %5522 = vmatprep.subr.bf16.mxu0 %v3581
    %5523 = vmatpush1.bf16.msra.mxu0 %v3580
    %5524 = vmatprep.subr.bf16.mxu0 %v3577
    %5525 = vmatpush1.bf16.msra.mxu0 %v3576
    %5526 = vmatprep.subr.bf16.mxu0 %v3637
    %5527 = vmatpush2.bf16.msra.mxu0 %v3636
    %5528 = vmatprep.subr.bf16.mxu0 %v3633
    %5529 = vmatpush2.bf16.msra.mxu0 %v3632
    %5530 = vmatprep.subr.bf16.mxu0 %v3629
    %5531 = vmatpush2.bf16.msra.mxu0 %v3628
    %5532 = vmatprep.subr.bf16.mxu0 %v3625
    %5533 = vmatpush2.bf16.msra.mxu0 %v3624
    %5534 = vmatprep.subr.bf16.mxu0 %v3621
    %5535 = vmatpush2.bf16.msra.mxu0 %v3620
    %5536 = vmatprep.subr.bf16.mxu0 %v3617
    %5537 = vmatpush2.bf16.msra.mxu0 %v3616
    %5538 = vmatprep.subr.bf16.mxu0 %v3613
    %5539 = vmatpush2.bf16.msra.mxu0 %v3612
    %5540 = vmatprep.subr.bf16.mxu0 %v3609
    %5541 = vmatpush2.bf16.msra.mxu0 %v3608
    %5542 = vmatprep.mubr.bf16.mxu0 %v209
    %5543 = vmatmul.mubr.bf16.gmra.mxu0 %v208
    %v5544 = vpop.f32.mrf.mxu0
    %v5545 = vadd.f32 %v5504, %v5544
    %v5546 = vpop.f32.mrf.mxu0
    %v5547 = vadd.f32 %v5506, %v5546
    %v5548 = vpop.f32.mrf.mxu0
    %v5549 = vpop.f32.mrf.mxu0
    %5550 = vdwg.mxu0
    %5551 = vmatprep.subr.bf16.mxu0 %v3669
    %5552 = vmatpush1.bf16.msra.mxu0 %v3668
    %5553 = vmatprep.subr.bf16.mxu0 %v3665
    %5554 = vmatpush1.bf16.msra.mxu0 %v3664
    %5555 = vmatprep.subr.bf16.mxu0 %v3661
    %5556 = vmatpush1.bf16.msra.mxu0 %v3660
    %5557 = vmatprep.subr.bf16.mxu0 %v3657
    %5558 = vmatpush1.bf16.msra.mxu0 %v3656
    %5559 = vmatprep.subr.bf16.mxu0 %v3653
    %5560 = vmatpush1.bf16.msra.mxu0 %v3652
    %5561 = vmatprep.subr.bf16.mxu0 %v3649
    %5562 = vmatpush1.bf16.msra.mxu0 %v3648
    %5563 = vmatprep.subr.bf16.mxu0 %v3645
    %5564 = vmatpush1.bf16.msra.mxu0 %v3644
    %5565 = vmatprep.subr.bf16.mxu0 %v3641
    %5566 = vmatpush1.bf16.msra.mxu0 %v3640
    %5567 = vmatprep.subr.bf16.mxu0 %v3701
    %5568 = vmatpush2.bf16.msra.mxu0 %v3700
    %5569 = vmatprep.subr.bf16.mxu0 %v3697
    %5570 = vmatpush2.bf16.msra.mxu0 %v3696
    %5571 = vmatprep.subr.bf16.mxu0 %v3693
    %5572 = vmatpush2.bf16.msra.mxu0 %v3692
    %5573 = vmatprep.subr.bf16.mxu0 %v3689
    %5574 = vmatpush2.bf16.msra.mxu0 %v3688
    %5575 = vmatprep.subr.bf16.mxu0 %v3685
    %5576 = vmatpush2.bf16.msra.mxu0 %v3684
    %5577 = vmatprep.subr.bf16.mxu0 %v3681
    %5578 = vmatpush2.bf16.msra.mxu0 %v3680
    %5579 = vmatprep.subr.bf16.mxu0 %v3677
    %5580 = vmatpush2.bf16.msra.mxu0 %v3676
    %5581 = vmatprep.subr.bf16.mxu0 %v3673
    %5582 = vmatpush2.bf16.msra.mxu0 %v3672
    %5583 = vmatprep.mubr.bf16.mxu0 %v211
    %5584 = vmatmul.mubr.bf16.gmra.mxu0 %v210
    %v5585 = vpop.f32.mrf.mxu0
    %v5586 = vadd.f32 %v5545, %v5585
    %v5587 = vpop.f32.mrf.mxu0
    %v5588 = vadd.f32 %v5547, %v5587
    %v5589 = vpop.f32.mrf.mxu0
    %v5590 = vpop.f32.mrf.mxu0
    %5591 = vdwg.mxu0
    %5592 = vmatprep.subr.bf16.mxu0 %v3733
    %5593 = vmatpush1.bf16.msra.mxu0 %v3732
    %5594 = vmatprep.subr.bf16.mxu0 %v3729
    %5595 = vmatpush1.bf16.msra.mxu0 %v3728
    %5596 = vmatprep.subr.bf16.mxu0 %v3725
    %5597 = vmatpush1.bf16.msra.mxu0 %v3724
    %5598 = vmatprep.subr.bf16.mxu0 %v3721
    %5599 = vmatpush1.bf16.msra.mxu0 %v3720
    %5600 = vmatprep.subr.bf16.mxu0 %v3717
    %5601 = vmatpush1.bf16.msra.mxu0 %v3716
    %5602 = vmatprep.subr.bf16.mxu0 %v3713
    %5603 = vmatpush1.bf16.msra.mxu0 %v3712
    %5604 = vmatprep.subr.bf16.mxu0 %v3709
    %5605 = vmatpush1.bf16.msra.mxu0 %v3708
    %5606 = vmatprep.subr.bf16.mxu0 %v3705
    %5607 = vmatpush1.bf16.msra.mxu0 %v3704
    %5608 = vmatprep.subr.bf16.mxu0 %v3765
    %5609 = vmatpush2.bf16.msra.mxu0 %v3764
    %5610 = vmatprep.subr.bf16.mxu0 %v3761
    %5611 = vmatpush2.bf16.msra.mxu0 %v3760
    %5612 = vmatprep.subr.bf16.mxu0 %v3757
    %5613 = vmatpush2.bf16.msra.mxu0 %v3756
    %5614 = vmatprep.subr.bf16.mxu0 %v3753
    %5615 = vmatpush2.bf16.msra.mxu0 %v3752
    %5616 = vmatprep.subr.bf16.mxu0 %v3749
    %5617 = vmatpush2.bf16.msra.mxu0 %v3748
    %5618 = vmatprep.subr.bf16.mxu0 %v3745
    %5619 = vmatpush2.bf16.msra.mxu0 %v3744
    %5620 = vmatprep.subr.bf16.mxu0 %v3741
    %5621 = vmatpush2.bf16.msra.mxu0 %v3740
    %5622 = vmatprep.subr.bf16.mxu0 %v3737
    %5623 = vmatpush2.bf16.msra.mxu0 %v3736
    %5624 = vmatprep.mubr.bf16.mxu0 %v213
    %5625 = vmatmul.mubr.bf16.gmra.mxu0 %v212
    %v5626 = vpop.f32.mrf.mxu0
    %v5627 = vadd.f32 %v5586, %v5626
    %v5628 = vpop.f32.mrf.mxu0
    %v5629 = vadd.f32 %v5588, %v5628
    %v5630 = vpop.f32.mrf.mxu0
    %v5631 = vpop.f32.mrf.mxu0
    %5632 = vdwg.mxu0
    %5633 = vmatprep.subr.bf16.mxu0 %v3797
    %5634 = vmatpush1.bf16.msra.mxu0 %v3796
    %5635 = vmatprep.subr.bf16.mxu0 %v3793
    %5636 = vmatpush1.bf16.msra.mxu0 %v3792
    %5637 = vmatprep.subr.bf16.mxu0 %v3789
    %5638 = vmatpush1.bf16.msra.mxu0 %v3788
    %5639 = vmatprep.subr.bf16.mxu0 %v3785
    %5640 = vmatpush1.bf16.msra.mxu0 %v3784
    %5641 = vmatprep.subr.bf16.mxu0 %v3781
    %5642 = vmatpush1.bf16.msra.mxu0 %v3780
    %5643 = vmatprep.subr.bf16.mxu0 %v3777
    %5644 = vmatpush1.bf16.msra.mxu0 %v3776
    %5645 = vmatprep.subr.bf16.mxu0 %v3773
    %5646 = vmatpush1.bf16.msra.mxu0 %v3772
    %5647 = vmatprep.subr.bf16.mxu0 %v3769
    %5648 = vmatpush1.bf16.msra.mxu0 %v3768
    %5649 = vmatprep.subr.bf16.mxu0 %v3829
    %5650 = vmatpush2.bf16.msra.mxu0 %v3828
    %5651 = vmatprep.subr.bf16.mxu0 %v3825
    %5652 = vmatpush2.bf16.msra.mxu0 %v3824
    %5653 = vmatprep.subr.bf16.mxu0 %v3821
    %5654 = vmatpush2.bf16.msra.mxu0 %v3820
    %5655 = vmatprep.subr.bf16.mxu0 %v3817
    %5656 = vmatpush2.bf16.msra.mxu0 %v3816
    %5657 = vmatprep.subr.bf16.mxu0 %v3813
    %5658 = vmatpush2.bf16.msra.mxu0 %v3812
    %5659 = vmatprep.subr.bf16.mxu0 %v3809
    %5660 = vmatpush2.bf16.msra.mxu0 %v3808
    %5661 = vmatprep.subr.bf16.mxu0 %v3805
    %5662 = vmatpush2.bf16.msra.mxu0 %v3804
    %5663 = vmatprep.subr.bf16.mxu0 %v3801
    %5664 = vmatpush2.bf16.msra.mxu0 %v3800
    %5665 = vmatprep.mubr.bf16.mxu0 %v215
    %5666 = vmatmul.mubr.bf16.gmra.mxu0 %v214
    %v5667 = vpop.f32.mrf.mxu0
    %v5668 = vadd.f32 %v5627, %v5667
    %v5669 = vpop.f32.mrf.mxu0
    %v5670 = vadd.f32 %v5629, %v5669
    %v5671 = vpop.f32.mrf.mxu0
    %v5672 = vpop.f32.mrf.mxu0
    %5673 = vdwg.mxu0
    %5674 = vmatprep.subr.bf16.mxu0 %v3861
    %5675 = vmatpush1.bf16.msra.mxu0 %v3860
    %5676 = vmatprep.subr.bf16.mxu0 %v3857
    %5677 = vmatpush1.bf16.msra.mxu0 %v3856
    %5678 = vmatprep.subr.bf16.mxu0 %v3853
    %5679 = vmatpush1.bf16.msra.mxu0 %v3852
    %5680 = vmatprep.subr.bf16.mxu0 %v3849
    %5681 = vmatpush1.bf16.msra.mxu0 %v3848
    %5682 = vmatprep.subr.bf16.mxu0 %v3845
    %5683 = vmatpush1.bf16.msra.mxu0 %v3844
    %5684 = vmatprep.subr.bf16.mxu0 %v3841
    %5685 = vmatpush1.bf16.msra.mxu0 %v3840
    %5686 = vmatprep.subr.bf16.mxu0 %v3837
    %5687 = vmatpush1.bf16.msra.mxu0 %v3836
    %5688 = vmatprep.subr.bf16.mxu0 %v3833
    %5689 = vmatpush1.bf16.msra.mxu0 %v3832
    %5690 = vmatprep.subr.bf16.mxu0 %v3893
    %5691 = vmatpush2.bf16.msra.mxu0 %v3892
    %5692 = vmatprep.subr.bf16.mxu0 %v3889
    %5693 = vmatpush2.bf16.msra.mxu0 %v3888
    %5694 = vmatprep.subr.bf16.mxu0 %v3885
    %5695 = vmatpush2.bf16.msra.mxu0 %v3884
    %5696 = vmatprep.subr.bf16.mxu0 %v3881
    %5697 = vmatpush2.bf16.msra.mxu0 %v3880
    %5698 = vmatprep.subr.bf16.mxu0 %v3877
    %5699 = vmatpush2.bf16.msra.mxu0 %v3876
    %5700 = vmatprep.subr.bf16.mxu0 %v3873
    %5701 = vmatpush2.bf16.msra.mxu0 %v3872
    %5702 = vmatprep.subr.bf16.mxu0 %v3869
    %5703 = vmatpush2.bf16.msra.mxu0 %v3868
    %5704 = vmatprep.subr.bf16.mxu0 %v3865
    %5705 = vmatpush2.bf16.msra.mxu0 %v3864
    %5706 = vmatprep.mubr.bf16.mxu0 %v217
    %5707 = vmatmul.mubr.bf16.gmra.mxu0 %v216
    %v5708 = vpop.f32.mrf.mxu0
    %v5709 = vadd.f32 %v5668, %v5708
    %v5710 = vpop.f32.mrf.mxu0
    %v5711 = vadd.f32 %v5670, %v5710
    %v5712 = vpop.f32.mrf.mxu0
    %v5713 = vpop.f32.mrf.mxu0
    %5714 = vdwg.mxu0
    %5715 = vmatprep.subr.bf16.mxu0 %v3925
    %5716 = vmatpush1.bf16.msra.mxu0 %v3924
    %5717 = vmatprep.subr.bf16.mxu0 %v3921
    %5718 = vmatpush1.bf16.msra.mxu0 %v3920
    %5719 = vmatprep.subr.bf16.mxu0 %v3917
    %5720 = vmatpush1.bf16.msra.mxu0 %v3916
    %5721 = vmatprep.subr.bf16.mxu0 %v3913
    %5722 = vmatpush1.bf16.msra.mxu0 %v3912
    %5723 = vmatprep.subr.bf16.mxu0 %v3909
    %5724 = vmatpush1.bf16.msra.mxu0 %v3908
    %5725 = vmatprep.subr.bf16.mxu0 %v3905
    %5726 = vmatpush1.bf16.msra.mxu0 %v3904
    %5727 = vmatprep.subr.bf16.mxu0 %v3901
    %5728 = vmatpush1.bf16.msra.mxu0 %v3900
    %5729 = vmatprep.subr.bf16.mxu0 %v3897
    %5730 = vmatpush1.bf16.msra.mxu0 %v3896
    %5731 = vmatprep.subr.bf16.mxu0 %v3957
    %5732 = vmatpush2.bf16.msra.mxu0 %v3956
    %5733 = vmatprep.subr.bf16.mxu0 %v3953
    %5734 = vmatpush2.bf16.msra.mxu0 %v3952
    %5735 = vmatprep.subr.bf16.mxu0 %v3949
    %5736 = vmatpush2.bf16.msra.mxu0 %v3948
    %5737 = vmatprep.subr.bf16.mxu0 %v3945
    %5738 = vmatpush2.bf16.msra.mxu0 %v3944
    %5739 = vmatprep.subr.bf16.mxu0 %v3941
    %5740 = vmatpush2.bf16.msra.mxu0 %v3940
    %5741 = vmatprep.subr.bf16.mxu0 %v3937
    %5742 = vmatpush2.bf16.msra.mxu0 %v3936
    %5743 = vmatprep.subr.bf16.mxu0 %v3933
    %5744 = vmatpush2.bf16.msra.mxu0 %v3932
    %5745 = vmatprep.subr.bf16.mxu0 %v3929
    %5746 = vmatpush2.bf16.msra.mxu0 %v3928
    %5747 = vmatprep.mubr.bf16.mxu0 %v219
    %5748 = vmatmul.mubr.bf16.gmra.mxu0 %v218
    %v5749 = vpop.f32.mrf.mxu0
    %v5750 = vadd.f32 %v5709, %v5749
    %v5751 = vpop.f32.mrf.mxu0
    %v5752 = vadd.f32 %v5711, %v5751
    %v5753 = vpop.f32.mrf.mxu0
    %v5754 = vpop.f32.mrf.mxu0
    %5755 = vdwg.mxu0
    %5756 = vmatprep.subr.bf16.mxu0 %v3989
    %5757 = vmatpush1.bf16.msra.mxu0 %v3988
    %5758 = vmatprep.subr.bf16.mxu0 %v3985
    %5759 = vmatpush1.bf16.msra.mxu0 %v3984
    %5760 = vmatprep.subr.bf16.mxu0 %v3981
    %5761 = vmatpush1.bf16.msra.mxu0 %v3980
    %5762 = vmatprep.subr.bf16.mxu0 %v3977
    %5763 = vmatpush1.bf16.msra.mxu0 %v3976
    %5764 = vmatprep.subr.bf16.mxu0 %v3973
    %5765 = vmatpush1.bf16.msra.mxu0 %v3972
    %5766 = vmatprep.subr.bf16.mxu0 %v3969
    %5767 = vmatpush1.bf16.msra.mxu0 %v3968
    %5768 = vmatprep.subr.bf16.mxu0 %v3965
    %5769 = vmatpush1.bf16.msra.mxu0 %v3964
    %5770 = vmatprep.subr.bf16.mxu0 %v3961
    %5771 = vmatpush1.bf16.msra.mxu0 %v3960
    %5772 = vmatprep.subr.bf16.mxu0 %v4021
    %5773 = vmatpush2.bf16.msra.mxu0 %v4020
    %5774 = vmatprep.subr.bf16.mxu0 %v4017
    %5775 = vmatpush2.bf16.msra.mxu0 %v4016
    %5776 = vmatprep.subr.bf16.mxu0 %v4013
    %5777 = vmatpush2.bf16.msra.mxu0 %v4012
    %5778 = vmatprep.subr.bf16.mxu0 %v4009
    %5779 = vmatpush2.bf16.msra.mxu0 %v4008
    %5780 = vmatprep.subr.bf16.mxu0 %v4005
    %5781 = vmatpush2.bf16.msra.mxu0 %v4004
    %5782 = vmatprep.subr.bf16.mxu0 %v4001
    %5783 = vmatpush2.bf16.msra.mxu0 %v4000
    %5784 = vmatprep.subr.bf16.mxu0 %v3997
    %5785 = vmatpush2.bf16.msra.mxu0 %v3996
    %5786 = vmatprep.subr.bf16.mxu0 %v3993
    %5787 = vmatpush2.bf16.msra.mxu0 %v3992
    %5788 = vmatprep.mubr.bf16.mxu0 %v221
    %5789 = vmatmul.mubr.bf16.gmra.mxu0 %v220
    %v5790 = vpop.f32.mrf.mxu0
    %v5791 = vadd.f32 %v5750, %v5790
    %v5792 = vpop.f32.mrf.mxu0
    %v5793 = vadd.f32 %v5752, %v5792
    %v5794 = vpop.f32.mrf.mxu0
    %v5795 = vpop.f32.mrf.mxu0
    %5796 = vdwg.mxu0
    %5797 = vmatprep.subr.bf16.mxu0 %v4053
    %5798 = vmatpush1.bf16.msra.mxu0 %v4052
    %5799 = vmatprep.subr.bf16.mxu0 %v4049
    %5800 = vmatpush1.bf16.msra.mxu0 %v4048
    %5801 = vmatprep.subr.bf16.mxu0 %v4045
    %5802 = vmatpush1.bf16.msra.mxu0 %v4044
    %5803 = vmatprep.subr.bf16.mxu0 %v4041
    %5804 = vmatpush1.bf16.msra.mxu0 %v4040
    %5805 = vmatprep.subr.bf16.mxu0 %v4037
    %5806 = vmatpush1.bf16.msra.mxu0 %v4036
    %5807 = vmatprep.subr.bf16.mxu0 %v4033
    %5808 = vmatpush1.bf16.msra.mxu0 %v4032
    %5809 = vmatprep.subr.bf16.mxu0 %v4029
    %5810 = vmatpush1.bf16.msra.mxu0 %v4028
    %5811 = vmatprep.subr.bf16.mxu0 %v4025
    %5812 = vmatpush1.bf16.msra.mxu0 %v4024
    %5813 = vmatprep.subr.bf16.mxu0 %v4085
    %5814 = vmatpush2.bf16.msra.mxu0 %v4084
    %5815 = vmatprep.subr.bf16.mxu0 %v4081
    %5816 = vmatpush2.bf16.msra.mxu0 %v4080
    %5817 = vmatprep.subr.bf16.mxu0 %v4077
    %5818 = vmatpush2.bf16.msra.mxu0 %v4076
    %5819 = vmatprep.subr.bf16.mxu0 %v4073
    %5820 = vmatpush2.bf16.msra.mxu0 %v4072
    %5821 = vmatprep.subr.bf16.mxu0 %v4069
    %5822 = vmatpush2.bf16.msra.mxu0 %v4068
    %5823 = vmatprep.subr.bf16.mxu0 %v4065
    %5824 = vmatpush2.bf16.msra.mxu0 %v4064
    %5825 = vmatprep.subr.bf16.mxu0 %v4061
    %5826 = vmatpush2.bf16.msra.mxu0 %v4060
    %5827 = vmatprep.subr.bf16.mxu0 %v4057
    %5828 = vmatpush2.bf16.msra.mxu0 %v4056
    %5829 = vmatprep.mubr.bf16.mxu0 %v223
    %5830 = vmatmul.mubr.bf16.gmra.mxu0 %v222
    %v5831 = vpop.f32.mrf.mxu0
    %v5832 = vadd.f32 %v5791, %v5831
    %v5833 = vpop.f32.mrf.mxu0
    %v5834 = vadd.f32 %v5793, %v5833
    %v5835 = vpop.f32.mrf.mxu0
    %v5836 = vpop.f32.mrf.mxu0
    %5837 = vdwg.mxu0
    %v5838 = vmax.f32 %v5340, 0.0
    %v5839 = vmax.f32 %v5342, 0.0
    %v5840 = vmax.f32 %v5832, 0.0
    %v5841 = vmax.f32 %v5834, 0.0
    %v5842 = vpack.c.bf16 %v5838, %v5838
    %v5843 = vpack.c.bf16 %v5839, %v5839
    %v5844 = vpack.c.bf16 %v5840, %v5840
    %v5845 = vpack.c.bf16 %v5841, %v5841
    %v5846 = vld [vmem:[#allocation8] sm:$0xff]
    %v5847 = vld [vmem:[#allocation8 + $0x8] sm:$0xff]
    %v5848 = vld [vmem:[#allocation8 + $0x10] sm:$0xff]
    %v5849 = vld [vmem:[#allocation8 + $0x18] sm:$0xff]
    %v5850 = vld [vmem:[#allocation8 + $0x20] sm:$0xff]
    %v5851 = vld [vmem:[#allocation8 + $0x28] sm:$0xff]
    %v5852 = vld [vmem:[#allocation8 + $0x30] sm:$0xff]
    %v5853 = vld [vmem:[#allocation8 + $0x38] sm:$0xff]
    %v5854 = vld [vmem:[#allocation8 + $0x40] sm:$0xff]
    %v5855 = vld [vmem:[#allocation8 + $0x48] sm:$0xff]
    %v5856 = vld [vmem:[#allocation8 + $0x50] sm:$0xff]
    %v5857 = vld [vmem:[#allocation8 + $0x58] sm:$0xff]
    %v5858 = vld [vmem:[#allocation8 + $0x60] sm:$0xff]
    %v5859 = vld [vmem:[#allocation8 + $0x68] sm:$0xff]
    %v5860 = vld [vmem:[#allocation8 + $0x70] sm:$0xff]
    %v5861 = vld [vmem:[#allocation8 + $0x78] sm:$0xff]
    %v5862 = vld [vmem:[#allocation8 + $0x80] sm:$0xff]
    %v5863 = vld [vmem:[#allocation8 + $0x88] sm:$0xff]
    %v5864 = vld [vmem:[#allocation8 + $0x90] sm:$0xff]
    %v5865 = vld [vmem:[#allocation8 + $0x98] sm:$0xff]
    %v5866 = vld [vmem:[#allocation8 + $0xa0] sm:$0xff]
    %v5867 = vld [vmem:[#allocation8 + $0xa8] sm:$0xff]
    %v5868 = vld [vmem:[#allocation8 + $0xb0] sm:$0xff]
    %v5869 = vld [vmem:[#allocation8 + $0xb8] sm:$0xff]
    %v5870 = vld [vmem:[#allocation8 + $0xc0] sm:$0xff]
    %v5871 = vld [vmem:[#allocation8 + $0xc8] sm:$0xff]
    %v5872 = vld [vmem:[#allocation8 + $0xd0] sm:$0xff]
    %v5873 = vld [vmem:[#allocation8 + $0xd8] sm:$0xff]
    %v5874 = vld [vmem:[#allocation8 + $0xe0] sm:$0xff]
    %v5875 = vld [vmem:[#allocation8 + $0xe8] sm:$0xff]
    %v5876 = vld [vmem:[#allocation8 + $0xf0] sm:$0xff]
    %v5877 = vld [vmem:[#allocation8 + $0xf8] sm:$0xff]
    %v5878 = vld [vmem:[#allocation8 + $0x100] sm:$0xff]
    %v5879 = vld [vmem:[#allocation8 + $0x108] sm:$0xff]
    %v5880 = vld [vmem:[#allocation8 + $0x110] sm:$0xff]
    %v5881 = vld [vmem:[#allocation8 + $0x118] sm:$0xff]
    %v5882 = vld [vmem:[#allocation8 + $0x120] sm:$0xff]
    %v5883 = vld [vmem:[#allocation8 + $0x128] sm:$0xff]
    %v5884 = vld [vmem:[#allocation8 + $0x130] sm:$0xff]
    %v5885 = vld [vmem:[#allocation8 + $0x138] sm:$0xff]
    %v5886 = vld [vmem:[#allocation8 + $0x140] sm:$0xff]
    %v5887 = vld [vmem:[#allocation8 + $0x148] sm:$0xff]
    %v5888 = vld [vmem:[#allocation8 + $0x150] sm:$0xff]
    %v5889 = vld [vmem:[#allocation8 + $0x158] sm:$0xff]
    %v5890 = vld [vmem:[#allocation8 + $0x160] sm:$0xff]
    %v5891 = vld [vmem:[#allocation8 + $0x168] sm:$0xff]
    %v5892 = vld [vmem:[#allocation8 + $0x170] sm:$0xff]
    %v5893 = vld [vmem:[#allocation8 + $0x178] sm:$0xff]
    %v5894 = vld [vmem:[#allocation8 + $0x180] sm:$0xff]
    %v5895 = vld [vmem:[#allocation8 + $0x188] sm:$0xff]
    %v5896 = vld [vmem:[#allocation8 + $0x190] sm:$0xff]
    %v5897 = vld [vmem:[#allocation8 + $0x198] sm:$0xff]
    %v5898 = vld [vmem:[#allocation8 + $0x1a0] sm:$0xff]
    %v5899 = vld [vmem:[#allocation8 + $0x1a8] sm:$0xff]
    %v5900 = vld [vmem:[#allocation8 + $0x1b0] sm:$0xff]
    %v5901 = vld [vmem:[#allocation8 + $0x1b8] sm:$0xff]
    %v5902 = vld [vmem:[#allocation8 + $0x1c0] sm:$0xff]
    %v5903 = vld [vmem:[#allocation8 + $0x1c8] sm:$0xff]
    %v5904 = vld [vmem:[#allocation8 + $0x1d0] sm:$0xff]
    %v5905 = vld [vmem:[#allocation8 + $0x1d8] sm:$0xff]
    %v5906 = vld [vmem:[#allocation8 + $0x1e0] sm:$0xff]
    %v5907 = vld [vmem:[#allocation8 + $0x1e8] sm:$0xff]
    %v5908 = vld [vmem:[#allocation8 + $0x1f0] sm:$0xff]
    %v5909 = vld [vmem:[#allocation8 + $0x1f8] sm:$0xff]
    %v5910 = vld [vmem:[#allocation10] sm:$0x3]
    %v5912 = vlaneseq
    %v5913 = vshrl.u32 %v5912, 7
    %v5914 = vsub.s32 0, %v5913
    %v5915 = vrot.slane %v5910, %v5914
    %v5916 = vlaneseq
    %v5917 = vshrl.u32 %v5916, 7
    %v5918 = vsub.s32 1, %v5917
    %v5919 = vrot.slane %v5910, %v5918
    %v5986 = vunpack.c.l.b16 %v5846
    %v5987 = vunpack.c.h.b16 %v5846
    %v5988 = vunpack.c.l.b16 %v5847
    %v5989 = vunpack.c.h.b16 %v5847
    %v5990 = vunpack.c.l.b16 %v5848
    %v5991 = vunpack.c.h.b16 %v5848
    %v5992 = vunpack.c.l.b16 %v5849
    %v5993 = vunpack.c.h.b16 %v5849
    %v5994 = vunpack.c.l.b16 %v5850
    %v5995 = vunpack.c.h.b16 %v5850
    %v5996 = vunpack.c.l.b16 %v5851
    %v5997 = vunpack.c.h.b16 %v5851
    %v5998 = vunpack.c.l.b16 %v5852
    %v5999 = vunpack.c.h.b16 %v5852
    %v6000 = vunpack.c.l.b16 %v5853
    %v6001 = vunpack.c.h.b16 %v5853
    %v6002 = vunpack.c.l.b16 %v5854
    %v6003 = vunpack.c.h.b16 %v5854
    %v6004 = vunpack.c.l.b16 %v5855
    %v6005 = vunpack.c.h.b16 %v5855
    %v6006 = vunpack.c.l.b16 %v5856
    %v6007 = vunpack.c.h.b16 %v5856
    %v6008 = vunpack.c.l.b16 %v5857
    %v6009 = vunpack.c.h.b16 %v5857
    %v6010 = vunpack.c.l.b16 %v5858
    %v6011 = vunpack.c.h.b16 %v5858
    %v6012 = vunpack.c.l.b16 %v5859
    %v6013 = vunpack.c.h.b16 %v5859
    %v6014 = vunpack.c.l.b16 %v5860
    %v6015 = vunpack.c.h.b16 %v5860
    %v6016 = vunpack.c.l.b16 %v5861
    %v6017 = vunpack.c.h.b16 %v5861
    %v6018 = vunpack.c.l.b16 %v5862
    %v6019 = vunpack.c.h.b16 %v5862
    %v6020 = vunpack.c.l.b16 %v5863
    %v6021 = vunpack.c.h.b16 %v5863
    %v6022 = vunpack.c.l.b16 %v5864
    %v6023 = vunpack.c.h.b16 %v5864
    %v6024 = vunpack.c.l.b16 %v5865
    %v6025 = vunpack.c.h.b16 %v5865
    %v6026 = vunpack.c.l.b16 %v5866
    %v6027 = vunpack.c.h.b16 %v5866
    %v6028 = vunpack.c.l.b16 %v5867
    %v6029 = vunpack.c.h.b16 %v5867
    %v6030 = vunpack.c.l.b16 %v5868
    %v6031 = vunpack.c.h.b16 %v5868
    %v6032 = vunpack.c.l.b16 %v5869
    %v6033 = vunpack.c.h.b16 %v5869
    %v6034 = vunpack.c.l.b16 %v5870
    %v6035 = vunpack.c.h.b16 %v5870
    %v6036 = vunpack.c.l.b16 %v5871
    %v6037 = vunpack.c.h.b16 %v5871
    %v6038 = vunpack.c.l.b16 %v5872
    %v6039 = vunpack.c.h.b16 %v5872
    %v6040 = vunpack.c.l.b16 %v5873
    %v6041 = vunpack.c.h.b16 %v5873
    %v6042 = vunpack.c.l.b16 %v5874
    %v6043 = vunpack.c.h.b16 %v5874
    %v6044 = vunpack.c.l.b16 %v5875
    %v6045 = vunpack.c.h.b16 %v5875
    %v6046 = vunpack.c.l.b16 %v5876
    %v6047 = vunpack.c.h.b16 %v5876
    %v6048 = vunpack.c.l.b16 %v5877
    %v6049 = vunpack.c.h.b16 %v5877
    %v6050 = vunpack.c.l.b16 %v5878
    %v6051 = vunpack.c.h.b16 %v5878
    %v6052 = vunpack.c.l.b16 %v5879
    %v6053 = vunpack.c.h.b16 %v5879
    %v6054 = vunpack.c.l.b16 %v5880
    %v6055 = vunpack.c.h.b16 %v5880
    %v6056 = vunpack.c.l.b16 %v5881
    %v6057 = vunpack.c.h.b16 %v5881
    %v6058 = vunpack.c.l.b16 %v5882
    %v6059 = vunpack.c.h.b16 %v5882
    %v6060 = vunpack.c.l.b16 %v5883
    %v6061 = vunpack.c.h.b16 %v5883
    %v6062 = vunpack.c.l.b16 %v5884
    %v6063 = vunpack.c.h.b16 %v5884
    %v6064 = vunpack.c.l.b16 %v5885
    %v6065 = vunpack.c.h.b16 %v5885
    %v6066 = vunpack.c.l.b16 %v5886
    %v6067 = vunpack.c.h.b16 %v5886
    %v6068 = vunpack.c.l.b16 %v5887
    %v6069 = vunpack.c.h.b16 %v5887
    %v6070 = vunpack.c.l.b16 %v5888
    %v6071 = vunpack.c.h.b16 %v5888
    %v6072 = vunpack.c.l.b16 %v5889
    %v6073 = vunpack.c.h.b16 %v5889
    %v6074 = vunpack.c.l.b16 %v5890
    %v6075 = vunpack.c.h.b16 %v5890
    %v6076 = vunpack.c.l.b16 %v5891
    %v6077 = vunpack.c.h.b16 %v5891
    %v6078 = vunpack.c.l.b16 %v5892
    %v6079 = vunpack.c.h.b16 %v5892
    %v6080 = vunpack.c.l.b16 %v5893
    %v6081 = vunpack.c.h.b16 %v5893
    %v6082 = vunpack.c.l.b16 %v5894
    %v6083 = vunpack.c.h.b16 %v5894
    %v6084 = vunpack.c.l.b16 %v5895
    %v6085 = vunpack.c.h.b16 %v5895
    %v6086 = vunpack.c.l.b16 %v5896
    %v6087 = vunpack.c.h.b16 %v5896
    %v6088 = vunpack.c.l.b16 %v5897
    %v6089 = vunpack.c.h.b16 %v5897
    %v6090 = vunpack.c.l.b16 %v5898
    %v6091 = vunpack.c.h.b16 %v5898
    %v6092 = vunpack.c.l.b16 %v5899
    %v6093 = vunpack.c.h.b16 %v5899
    %v6094 = vunpack.c.l.b16 %v5900
    %v6095 = vunpack.c.h.b16 %v5900
    %v6096 = vunpack.c.l.b16 %v5901
    %v6097 = vunpack.c.h.b16 %v5901
    %v6098 = vunpack.c.l.b16 %v5902
    %v6099 = vunpack.c.h.b16 %v5902
    %v6100 = vunpack.c.l.b16 %v5903
    %v6101 = vunpack.c.h.b16 %v5903
    %v6102 = vunpack.c.l.b16 %v5904
    %v6103 = vunpack.c.h.b16 %v5904
    %v6104 = vunpack.c.l.b16 %v5905
    %v6105 = vunpack.c.h.b16 %v5905
    %v6106 = vunpack.c.l.b16 %v5906
    %v6107 = vunpack.c.h.b16 %v5906
    %v6108 = vunpack.c.l.b16 %v5907
    %v6109 = vunpack.c.h.b16 %v5907
    %v6110 = vunpack.c.l.b16 %v5908
    %v6111 = vunpack.c.h.b16 %v5908
    %v6112 = vunpack.c.l.b16 %v5909
    %v6113 = vunpack.c.h.b16 %v5909
    %v6114 = vpack.c.b16 %v5988, %v5986
    %v6115 = vpack.c.b16 %v5989, %v5987
    %v6116 = vpack.c.b16 %v5992, %v5990
    %v6117 = vpack.c.b16 %v5993, %v5991
    %v6118 = vpack.c.b16 %v5996, %v5994
    %v6119 = vpack.c.b16 %v5997, %v5995
    %v6120 = vpack.c.b16 %v6000, %v5998
    %v6121 = vpack.c.b16 %v6001, %v5999
    %v6122 = vpack.c.b16 %v6004, %v6002
    %v6123 = vpack.c.b16 %v6005, %v6003
    %v6124 = vpack.c.b16 %v6008, %v6006
    %v6125 = vpack.c.b16 %v6009, %v6007
    %v6126 = vpack.c.b16 %v6012, %v6010
    %v6127 = vpack.c.b16 %v6013, %v6011
    %v6128 = vpack.c.b16 %v6016, %v6014
    %v6129 = vpack.c.b16 %v6017, %v6015
    %v6130 = vpack.c.b16 %v6020, %v6018
    %v6131 = vpack.c.b16 %v6021, %v6019
    %v6132 = vpack.c.b16 %v6024, %v6022
    %v6133 = vpack.c.b16 %v6025, %v6023
    %v6134 = vpack.c.b16 %v6028, %v6026
    %v6135 = vpack.c.b16 %v6029, %v6027
    %v6136 = vpack.c.b16 %v6032, %v6030
    %v6137 = vpack.c.b16 %v6033, %v6031
    %v6138 = vpack.c.b16 %v6036, %v6034
    %v6139 = vpack.c.b16 %v6037, %v6035
    %v6140 = vpack.c.b16 %v6040, %v6038
    %v6141 = vpack.c.b16 %v6041, %v6039
    %v6142 = vpack.c.b16 %v6044, %v6042
    %v6143 = vpack.c.b16 %v6045, %v6043
    %v6144 = vpack.c.b16 %v6048, %v6046
    %v6145 = vpack.c.b16 %v6049, %v6047
    %v6146 = vpack.c.b16 %v6052, %v6050
    %v6147 = vpack.c.b16 %v6053, %v6051
    %v6148 = vpack.c.b16 %v6056, %v6054
    %v6149 = vpack.c.b16 %v6057, %v6055
    %v6150 = vpack.c.b16 %v6060, %v6058
    %v6151 = vpack.c.b16 %v6061, %v6059
    %v6152 = vpack.c.b16 %v6064, %v6062
    %v6153 = vpack.c.b16 %v6065, %v6063
    %v6154 = vpack.c.b16 %v6068, %v6066
    %v6155 = vpack.c.b16 %v6069, %v6067
    %v6156 = vpack.c.b16 %v6072, %v6070
    %v6157 = vpack.c.b16 %v6073, %v6071
    %v6158 = vpack.c.b16 %v6076, %v6074
    %v6159 = vpack.c.b16 %v6077, %v6075
    %v6160 = vpack.c.b16 %v6080, %v6078
    %v6161 = vpack.c.b16 %v6081, %v6079
    %v6162 = vpack.c.b16 %v6084, %v6082
    %v6163 = vpack.c.b16 %v6085, %v6083
    %v6164 = vpack.c.b16 %v6088, %v6086
    %v6165 = vpack.c.b16 %v6089, %v6087
    %v6166 = vpack.c.b16 %v6092, %v6090
    %v6167 = vpack.c.b16 %v6093, %v6091
    %v6168 = vpack.c.b16 %v6096, %v6094
    %v6169 = vpack.c.b16 %v6097, %v6095
    %v6170 = vpack.c.b16 %v6100, %v6098
    %v6171 = vpack.c.b16 %v6101, %v6099
    %v6172 = vpack.c.b16 %v6104, %v6102
    %v6173 = vpack.c.b16 %v6105, %v6103
    %v6174 = vpack.c.b16 %v6108, %v6106
    %v6175 = vpack.c.b16 %v6109, %v6107
    %v6176 = vpack.c.b16 %v6112, %v6110
    %v6177 = vpack.c.b16 %v6113, %v6111
    %6242 = vmatprep.subr.bf16.mxu0 %v6129
    %6243 = vmatpush1.bf16.msra.mxu0 %v6128
    %6244 = vmatprep.subr.bf16.mxu0 %v6127
    %6245 = vmatpush1.bf16.msra.mxu0 %v6126
    %6246 = vmatprep.subr.bf16.mxu0 %v6125
    %6247 = vmatpush1.bf16.msra.mxu0 %v6124
    %6248 = vmatprep.subr.bf16.mxu0 %v6123
    %6249 = vmatpush1.bf16.msra.mxu0 %v6122
    %6250 = vmatprep.subr.bf16.mxu0 %v6121
    %6251 = vmatpush1.bf16.msra.mxu0 %v6120
    %6252 = vmatprep.subr.bf16.mxu0 %v6119
    %6253 = vmatpush1.bf16.msra.mxu0 %v6118
    %6254 = vmatprep.subr.bf16.mxu0 %v6117
    %6255 = vmatpush1.bf16.msra.mxu0 %v6116
    %6256 = vmatprep.subr.bf16.mxu0 %v6115
    %6257 = vmatpush1.bf16.msra.mxu0 %v6114
    %6258 = vmatprep.subr.bf16.mxu0 %v6145
    %6259 = vmatpush2.bf16.msra.mxu0 %v6144
    %6260 = vmatprep.subr.bf16.mxu0 %v6143
    %6261 = vmatpush2.bf16.msra.mxu0 %v6142
    %6262 = vmatprep.subr.bf16.mxu0 %v6141
    %6263 = vmatpush2.bf16.msra.mxu0 %v6140
    %6264 = vmatprep.subr.bf16.mxu0 %v6139
    %6265 = vmatpush2.bf16.msra.mxu0 %v6138
    %6266 = vmatprep.subr.bf16.mxu0 %v6137
    %6267 = vmatpush2.bf16.msra.mxu0 %v6136
    %6268 = vmatprep.subr.bf16.mxu0 %v6135
    %6269 = vmatpush2.bf16.msra.mxu0 %v6134
    %6270 = vmatprep.subr.bf16.mxu0 %v6133
    %6271 = vmatpush2.bf16.msra.mxu0 %v6132
    %6272 = vmatprep.subr.bf16.mxu0 %v6131
    %6273 = vmatpush2.bf16.msra.mxu0 %v6130
    %6274 = vmatprep.mubr.bf16.mxu0 %v5843
    %6275 = vmatmul.mubr.bf16.gmra.mxu0 %v5842
    %v6276 = vpop.f32.mrf.mxu0
    %v6277 = vadd.f32 %v5915, %v6276
    %v6278 = vpop.f32.mrf.mxu0
    %v6279 = vadd.f32 %v5919, %v6278
    %v6280 = vpop.f32.mrf.mxu0
    %v6281 = vpop.f32.mrf.mxu0
    %6282 = vdwg.mxu0
    %6283 = vmatprep.subr.bf16.mxu0 %v6161
    %6284 = vmatpush1.bf16.msra.mxu0 %v6160
    %6285 = vmatprep.subr.bf16.mxu0 %v6159
    %6286 = vmatpush1.bf16.msra.mxu0 %v6158
    %6287 = vmatprep.subr.bf16.mxu0 %v6157
    %6288 = vmatpush1.bf16.msra.mxu0 %v6156
    %6289 = vmatprep.subr.bf16.mxu0 %v6155
    %6290 = vmatpush1.bf16.msra.mxu0 %v6154
    %6291 = vmatprep.subr.bf16.mxu0 %v6153
    %6292 = vmatpush1.bf16.msra.mxu0 %v6152
    %6293 = vmatprep.subr.bf16.mxu0 %v6151
    %6294 = vmatpush1.bf16.msra.mxu0 %v6150
    %6295 = vmatprep.subr.bf16.mxu0 %v6149
    %6296 = vmatpush1.bf16.msra.mxu0 %v6148
    %6297 = vmatprep.subr.bf16.mxu0 %v6147
    %6298 = vmatpush1.bf16.msra.mxu0 %v6146
    %6299 = vmatprep.subr.bf16.mxu0 %v6177
    %6300 = vmatpush2.bf16.msra.mxu0 %v6176
    %6301 = vmatprep.subr.bf16.mxu0 %v6175
    %6302 = vmatpush2.bf16.msra.mxu0 %v6174
    %6303 = vmatprep.subr.bf16.mxu0 %v6173
    %6304 = vmatpush2.bf16.msra.mxu0 %v6172
    %6305 = vmatprep.subr.bf16.mxu0 %v6171
    %6306 = vmatpush2.bf16.msra.mxu0 %v6170
    %6307 = vmatprep.subr.bf16.mxu0 %v6169
    %6308 = vmatpush2.bf16.msra.mxu0 %v6168
    %6309 = vmatprep.subr.bf16.mxu0 %v6167
    %6310 = vmatpush2.bf16.msra.mxu0 %v6166
    %6311 = vmatprep.subr.bf16.mxu0 %v6165
    %6312 = vmatpush2.bf16.msra.mxu0 %v6164
    %6313 = vmatprep.subr.bf16.mxu0 %v6163
    %6314 = vmatpush2.bf16.msra.mxu0 %v6162
    %6315 = vmatprep.mubr.bf16.mxu0 %v5845
    %6316 = vmatmul.mubr.bf16.gmra.mxu0 %v5844
    %v6317 = vpop.f32.mrf.mxu0
    %v6318 = vadd.f32 %v6277, %v6317
    %v6319 = vpop.f32.mrf.mxu0
    %v6320 = vadd.f32 %v6279, %v6319
    %v6321 = vpop.f32.mrf.mxu0
    %v6322 = vpop.f32.mrf.mxu0
    %6323 = vdwg.mxu0
    %v6324 = vmax.f32 %v6318, 0.0
    %v6325 = vmax.f32 %v6320, 0.0
    %v6326 = vpack.c.bf16 %v6324, %v6324
    %v6327 = vpack.c.bf16 %v6325, %v6325
    %v6328 = vld [vmem:[#allocation11] sm:$0xff]
    %v6329 = vld [vmem:[#allocation11 + $0x8] sm:$0xff]
    %v6330 = vld [vmem:[#allocation11 + $0x10] sm:$0xff]
    %v6331 = vld [vmem:[#allocation11 + $0x18] sm:$0xff]
    %v6332 = vld [vmem:[#allocation11 + $0x20] sm:$0xff]
    %v6333 = vld [vmem:[#allocation11 + $0x28] sm:$0xff]
    %v6334 = vld [vmem:[#allocation11 + $0x30] sm:$0xff]
    %v6335 = vld [vmem:[#allocation11 + $0x38] sm:$0xff]
    %v6336 = vld [vmem:[#allocation11 + $0x40] sm:$0xff]
    %v6337 = vld [vmem:[#allocation11 + $0x48] sm:$0xff]
    %v6338 = vld [vmem:[#allocation11 + $0x50] sm:$0xff]
    %v6339 = vld [vmem:[#allocation11 + $0x58] sm:$0xff]
    %v6340 = vld [vmem:[#allocation11 + $0x60] sm:$0xff]
    %v6341 = vld [vmem:[#allocation11 + $0x68] sm:$0xff]
    %v6342 = vld [vmem:[#allocation11 + $0x70] sm:$0xff]
    %v6343 = vld [vmem:[#allocation11 + $0x78] sm:$0xff]
    %v6344 = vld [vmem:[#allocation11 + $0x80] sm:$0xff]
    %v6345 = vld [vmem:[#allocation11 + $0x88] sm:$0xff]
    %v6346 = vld [vmem:[#allocation11 + $0x90] sm:$0xff]
    %v6347 = vld [vmem:[#allocation11 + $0x98] sm:$0xff]
    %v6348 = vld [vmem:[#allocation11 + $0xa0] sm:$0xff]
    %v6349 = vld [vmem:[#allocation11 + $0xa8] sm:$0xff]
    %v6350 = vld [vmem:[#allocation11 + $0xb0] sm:$0xff]
    %v6351 = vld [vmem:[#allocation11 + $0xb8] sm:$0xff]
    %v6352 = vld [vmem:[#allocation11 + $0xc0] sm:$0xff]
    %v6353 = vld [vmem:[#allocation11 + $0xc8] sm:$0xff]
    %v6354 = vld [vmem:[#allocation11 + $0xd0] sm:$0xff]
    %v6355 = vld [vmem:[#allocation11 + $0xd8] sm:$0xff]
    %v6356 = vld [vmem:[#allocation11 + $0xe0] sm:$0xff]
    %v6357 = vld [vmem:[#allocation11 + $0xe8] sm:$0xff]
    %v6358 = vld [vmem:[#allocation11 + $0xf0] sm:$0xff]
    %v6359 = vld [vmem:[#allocation11 + $0xf8] sm:$0xff]
    %v6360 = vld [vmem:[#allocation13] sm:$0x3]
    %v6362 = vlaneseq
    %v6363 = vshrl.u32 %v6362, 7
    %v6364 = vsub.s32 0, %v6363
    %v6365 = vrot.slane %v6360, %v6364
    %v6366 = vlaneseq
    %v6367 = vshrl.u32 %v6366, 7
    %v6368 = vsub.s32 1, %v6367
    %v6369 = vrot.slane %v6360, %v6368
    %v6404 = vunpack.c.l.b16 %v6328
    %v6405 = vunpack.c.h.b16 %v6328
    %v6406 = vunpack.c.l.b16 %v6329
    %v6407 = vunpack.c.h.b16 %v6329
    %v6408 = vunpack.c.l.b16 %v6330
    %v6409 = vunpack.c.h.b16 %v6330
    %v6410 = vunpack.c.l.b16 %v6331
    %v6411 = vunpack.c.h.b16 %v6331
    %v6412 = vunpack.c.l.b16 %v6332
    %v6413 = vunpack.c.h.b16 %v6332
    %v6414 = vunpack.c.l.b16 %v6333
    %v6415 = vunpack.c.h.b16 %v6333
    %v6416 = vunpack.c.l.b16 %v6334
    %v6417 = vunpack.c.h.b16 %v6334
    %v6418 = vunpack.c.l.b16 %v6335
    %v6419 = vunpack.c.h.b16 %v6335
    %v6420 = vunpack.c.l.b16 %v6336
    %v6421 = vunpack.c.h.b16 %v6336
    %v6422 = vunpack.c.l.b16 %v6337
    %v6423 = vunpack.c.h.b16 %v6337
    %v6424 = vunpack.c.l.b16 %v6338
    %v6425 = vunpack.c.h.b16 %v6338
    %v6426 = vunpack.c.l.b16 %v6339
    %v6427 = vunpack.c.h.b16 %v6339
    %v6428 = vunpack.c.l.b16 %v6340
    %v6429 = vunpack.c.h.b16 %v6340
    %v6430 = vunpack.c.l.b16 %v6341
    %v6431 = vunpack.c.h.b16 %v6341
    %v6432 = vunpack.c.l.b16 %v6342
    %v6433 = vunpack.c.h.b16 %v6342
    %v6434 = vunpack.c.l.b16 %v6343
    %v6435 = vunpack.c.h.b16 %v6343
    %v6436 = vunpack.c.l.b16 %v6344
    %v6437 = vunpack.c.h.b16 %v6344
    %v6438 = vunpack.c.l.b16 %v6345
    %v6439 = vunpack.c.h.b16 %v6345
    %v6440 = vunpack.c.l.b16 %v6346
    %v6441 = vunpack.c.h.b16 %v6346
    %v6442 = vunpack.c.l.b16 %v6347
    %v6443 = vunpack.c.h.b16 %v6347
    %v6444 = vunpack.c.l.b16 %v6348
    %v6445 = vunpack.c.h.b16 %v6348
    %v6446 = vunpack.c.l.b16 %v6349
    %v6447 = vunpack.c.h.b16 %v6349
    %v6448 = vunpack.c.l.b16 %v6350
    %v6449 = vunpack.c.h.b16 %v6350
    %v6450 = vunpack.c.l.b16 %v6351
    %v6451 = vunpack.c.h.b16 %v6351
    %v6452 = vunpack.c.l.b16 %v6352
    %v6453 = vunpack.c.h.b16 %v6352
    %v6454 = vunpack.c.l.b16 %v6353
    %v6455 = vunpack.c.h.b16 %v6353
    %v6456 = vunpack.c.l.b16 %v6354
    %v6457 = vunpack.c.h.b16 %v6354
    %v6458 = vunpack.c.l.b16 %v6355
    %v6459 = vunpack.c.h.b16 %v6355
    %v6460 = vunpack.c.l.b16 %v6356
    %v6461 = vunpack.c.h.b16 %v6356
    %v6462 = vunpack.c.l.b16 %v6357
    %v6463 = vunpack.c.h.b16 %v6357
    %v6464 = vunpack.c.l.b16 %v6358
    %v6465 = vunpack.c.h.b16 %v6358
    %v6466 = vunpack.c.l.b16 %v6359
    %v6467 = vunpack.c.h.b16 %v6359
    %v6468 = vpack.c.b16 %v6406, %v6404
    %v6469 = vpack.c.b16 %v6407, %v6405
    %v6470 = vpack.c.b16 %v6410, %v6408
    %v6471 = vpack.c.b16 %v6411, %v6409
    %v6472 = vpack.c.b16 %v6414, %v6412
    %v6473 = vpack.c.b16 %v6415, %v6413
    %v6474 = vpack.c.b16 %v6418, %v6416
    %v6475 = vpack.c.b16 %v6419, %v6417
    %v6476 = vpack.c.b16 %v6422, %v6420
    %v6477 = vpack.c.b16 %v6423, %v6421
    %v6478 = vpack.c.b16 %v6426, %v6424
    %v6479 = vpack.c.b16 %v6427, %v6425
    %v6480 = vpack.c.b16 %v6430, %v6428
    %v6481 = vpack.c.b16 %v6431, %v6429
    %v6482 = vpack.c.b16 %v6434, %v6432
    %v6483 = vpack.c.b16 %v6435, %v6433
    %v6484 = vpack.c.b16 %v6438, %v6436
    %v6485 = vpack.c.b16 %v6439, %v6437
    %v6486 = vpack.c.b16 %v6442, %v6440
    %v6487 = vpack.c.b16 %v6443, %v6441
    %v6488 = vpack.c.b16 %v6446, %v6444
    %v6489 = vpack.c.b16 %v6447, %v6445
    %v6490 = vpack.c.b16 %v6450, %v6448
    %v6491 = vpack.c.b16 %v6451, %v6449
    %v6492 = vpack.c.b16 %v6454, %v6452
    %v6493 = vpack.c.b16 %v6455, %v6453
    %v6494 = vpack.c.b16 %v6458, %v6456
    %v6495 = vpack.c.b16 %v6459, %v6457
    %v6496 = vpack.c.b16 %v6462, %v6460
    %v6497 = vpack.c.b16 %v6463, %v6461
    %v6498 = vpack.c.b16 %v6466, %v6464
    %v6499 = vpack.c.b16 %v6467, %v6465
    %6532 = vmatprep.subr.bf16.mxu0 %v6483
    %6533 = vmatpush1.bf16.msra.mxu0 %v6482
    %6534 = vmatprep.subr.bf16.mxu0 %v6481
    %6535 = vmatpush1.bf16.msra.mxu0 %v6480
    %6536 = vmatprep.subr.bf16.mxu0 %v6479
    %6537 = vmatpush1.bf16.msra.mxu0 %v6478
    %6538 = vmatprep.subr.bf16.mxu0 %v6477
    %6539 = vmatpush1.bf16.msra.mxu0 %v6476
    %6540 = vmatprep.subr.bf16.mxu0 %v6475
    %6541 = vmatpush1.bf16.msra.mxu0 %v6474
    %6542 = vmatprep.subr.bf16.mxu0 %v6473
    %6543 = vmatpush1.bf16.msra.mxu0 %v6472
    %6544 = vmatprep.subr.bf16.mxu0 %v6471
    %6545 = vmatpush1.bf16.msra.mxu0 %v6470
    %6546 = vmatprep.subr.bf16.mxu0 %v6469
    %6547 = vmatpush1.bf16.msra.mxu0 %v6468
    %6548 = vmatprep.subr.bf16.mxu0 %v6499
    %6549 = vmatpush2.bf16.msra.mxu0 %v6498
    %6550 = vmatprep.subr.bf16.mxu0 %v6497
    %6551 = vmatpush2.bf16.msra.mxu0 %v6496
    %6552 = vmatprep.subr.bf16.mxu0 %v6495
    %6553 = vmatpush2.bf16.msra.mxu0 %v6494
    %6554 = vmatprep.subr.bf16.mxu0 %v6493
    %6555 = vmatpush2.bf16.msra.mxu0 %v6492
    %6556 = vmatprep.subr.bf16.mxu0 %v6491
    %6557 = vmatpush2.bf16.msra.mxu0 %v6490
    %6558 = vmatprep.subr.bf16.mxu0 %v6489
    %6559 = vmatpush2.bf16.msra.mxu0 %v6488
    %6560 = vmatprep.subr.bf16.mxu0 %v6487
    %6561 = vmatpush2.bf16.msra.mxu0 %v6486
    %6562 = vmatprep.subr.bf16.mxu0 %v6485
    %6563 = vmatpush2.bf16.msra.mxu0 %v6484
    %6564 = vmatprep.mubr.bf16.mxu0 %v6327
    %6565 = vmatmul.mubr.bf16.gmra.mxu0 %v6326
    %v6566 = vpop.f32.mrf.mxu0
    %v6567 = vadd.f32 %v6365, %v6566
    %v6568 = vpop.f32.mrf.mxu0
    %v6569 = vadd.f32 %v6369, %v6568
    %v6570 = vpop.f32.mrf.mxu0
    %v6571 = vpop.f32.mrf.mxu0
    %6572 = vdwg.mxu0
    %v6573 = vmax.f32 %v6567, 0.0
    %v6574 = vmax.f32 %v6569, 0.0
    %v6575 = vpack.c.bf16 %v6573, %v6573
    %v6576 = vpack.c.bf16 %v6574, %v6574
    %v6577 = vld [vmem:[#allocation14] sm:$0xff]
    %v6578 = vld [vmem:[#allocation14 + $0x8] sm:$0xff]
    %v6579 = vld [vmem:[#allocation14 + $0x10] sm:$0xff]
    %v6580 = vld [vmem:[#allocation14 + $0x18] sm:$0xff]
    %v6581 = vld [vmem:[#allocation14 + $0x20] sm:$0xff]
    %v6582 = vld [vmem:[#allocation14 + $0x28] sm:$0xff]
    %v6583 = vld [vmem:[#allocation14 + $0x30] sm:$0xff]
    %v6584 = vld [vmem:[#allocation14 + $0x38] sm:$0xff]
    %v6585 = vld [vmem:[#allocation14 + $0x40] sm:$0xff]
    %v6586 = vld [vmem:[#allocation14 + $0x48] sm:$0xff]
    %v6587 = vld [vmem:[#allocation14 + $0x50] sm:$0xff]
    %v6588 = vld [vmem:[#allocation14 + $0x58] sm:$0xff]
    %v6589 = vld [vmem:[#allocation14 + $0x60] sm:$0xff]
    %v6590 = vld [vmem:[#allocation14 + $0x68] sm:$0xff]
    %v6591 = vld [vmem:[#allocation14 + $0x70] sm:$0xff]
    %v6592 = vld [vmem:[#allocation14 + $0x78] sm:$0xff]
    %v6593 = vld [vmem:[#allocation14 + $0x80] sm:$0xff]
    %v6594 = vld [vmem:[#allocation14 + $0x88] sm:$0xff]
    %v6595 = vld [vmem:[#allocation14 + $0x90] sm:$0xff]
    %v6596 = vld [vmem:[#allocation14 + $0x98] sm:$0xff]
    %v6597 = vld [vmem:[#allocation14 + $0xa0] sm:$0xff]
    %v6598 = vld [vmem:[#allocation14 + $0xa8] sm:$0xff]
    %v6599 = vld [vmem:[#allocation14 + $0xb0] sm:$0xff]
    %v6600 = vld [vmem:[#allocation14 + $0xb8] sm:$0xff]
    %v6601 = vld [vmem:[#allocation14 + $0xc0] sm:$0xff]
    %v6602 = vld [vmem:[#allocation14 + $0xc8] sm:$0xff]
    %v6603 = vld [vmem:[#allocation14 + $0xd0] sm:$0xff]
    %v6604 = vld [vmem:[#allocation14 + $0xd8] sm:$0xff]
    %v6605 = vld [vmem:[#allocation14 + $0xe0] sm:$0xff]
    %v6606 = vld [vmem:[#allocation14 + $0xe8] sm:$0xff]
    %v6607 = vld [vmem:[#allocation14 + $0xf0] sm:$0xff]
    %v6608 = vld [vmem:[#allocation14 + $0xf8] sm:$0xff]
    %v6609 = vld [vmem:[#allocation16] sm:$0x3]
    %v6611 = vlaneseq
    %v6612 = vshrl.u32 %v6611, 7
    %v6613 = vsub.s32 0, %v6612
    %v6614 = vrot.slane %v6609, %v6613
    %v6615 = vlaneseq
    %v6616 = vshrl.u32 %v6615, 7
    %v6617 = vsub.s32 1, %v6616
    %v6618 = vrot.slane %v6609, %v6617
    %v6653 = vunpack.c.l.b16 %v6577
    %v6654 = vunpack.c.h.b16 %v6577
    %v6655 = vunpack.c.l.b16 %v6578
    %v6656 = vunpack.c.h.b16 %v6578
    %v6657 = vunpack.c.l.b16 %v6579
    %v6658 = vunpack.c.h.b16 %v6579
    %v6659 = vunpack.c.l.b16 %v6580
    %v6660 = vunpack.c.h.b16 %v6580
    %v6661 = vunpack.c.l.b16 %v6581
    %v6662 = vunpack.c.h.b16 %v6581
    %v6663 = vunpack.c.l.b16 %v6582
    %v6664 = vunpack.c.h.b16 %v6582
    %v6665 = vunpack.c.l.b16 %v6583
    %v6666 = vunpack.c.h.b16 %v6583
    %v6667 = vunpack.c.l.b16 %v6584
    %v6668 = vunpack.c.h.b16 %v6584
    %v6669 = vunpack.c.l.b16 %v6585
    %v6670 = vunpack.c.h.b16 %v6585
    %v6671 = vunpack.c.l.b16 %v6586
    %v6672 = vunpack.c.h.b16 %v6586
    %v6673 = vunpack.c.l.b16 %v6587
    %v6674 = vunpack.c.h.b16 %v6587
    %v6675 = vunpack.c.l.b16 %v6588
    %v6676 = vunpack.c.h.b16 %v6588
    %v6677 = vunpack.c.l.b16 %v6589
    %v6678 = vunpack.c.h.b16 %v6589
    %v6679 = vunpack.c.l.b16 %v6590
    %v6680 = vunpack.c.h.b16 %v6590
    %v6681 = vunpack.c.l.b16 %v6591
    %v6682 = vunpack.c.h.b16 %v6591
    %v6683 = vunpack.c.l.b16 %v6592
    %v6684 = vunpack.c.h.b16 %v6592
    %v6685 = vunpack.c.l.b16 %v6593
    %v6686 = vunpack.c.h.b16 %v6593
    %v6687 = vunpack.c.l.b16 %v6594
    %v6688 = vunpack.c.h.b16 %v6594
    %v6689 = vunpack.c.l.b16 %v6595
    %v6690 = vunpack.c.h.b16 %v6595
    %v6691 = vunpack.c.l.b16 %v6596
    %v6692 = vunpack.c.h.b16 %v6596
    %v6693 = vunpack.c.l.b16 %v6597
    %v6694 = vunpack.c.h.b16 %v6597
    %v6695 = vunpack.c.l.b16 %v6598
    %v6696 = vunpack.c.h.b16 %v6598
    %v6697 = vunpack.c.l.b16 %v6599
    %v6698 = vunpack.c.h.b16 %v6599
    %v6699 = vunpack.c.l.b16 %v6600
    %v6700 = vunpack.c.h.b16 %v6600
    %v6701 = vunpack.c.l.b16 %v6601
    %v6702 = vunpack.c.h.b16 %v6601
    %v6703 = vunpack.c.l.b16 %v6602
    %v6704 = vunpack.c.h.b16 %v6602
    %v6705 = vunpack.c.l.b16 %v6603
    %v6706 = vunpack.c.h.b16 %v6603
    %v6707 = vunpack.c.l.b16 %v6604
    %v6708 = vunpack.c.h.b16 %v6604
    %v6709 = vunpack.c.l.b16 %v6605
    %v6710 = vunpack.c.h.b16 %v6605
    %v6711 = vunpack.c.l.b16 %v6606
    %v6712 = vunpack.c.h.b16 %v6606
    %v6713 = vunpack.c.l.b16 %v6607
    %v6714 = vunpack.c.h.b16 %v6607
    %v6715 = vunpack.c.l.b16 %v6608
    %v6716 = vunpack.c.h.b16 %v6608
    %v6717 = vpack.c.b16 %v6655, %v6653
    %v6718 = vpack.c.b16 %v6656, %v6654
    %v6719 = vpack.c.b16 %v6659, %v6657
    %v6720 = vpack.c.b16 %v6660, %v6658
    %v6721 = vpack.c.b16 %v6663, %v6661
    %v6722 = vpack.c.b16 %v6664, %v6662
    %v6723 = vpack.c.b16 %v6667, %v6665
    %v6724 = vpack.c.b16 %v6668, %v6666
    %v6725 = vpack.c.b16 %v6671, %v6669
    %v6726 = vpack.c.b16 %v6672, %v6670
    %v6727 = vpack.c.b16 %v6675, %v6673
    %v6728 = vpack.c.b16 %v6676, %v6674
    %v6729 = vpack.c.b16 %v6679, %v6677
    %v6730 = vpack.c.b16 %v6680, %v6678
    %v6731 = vpack.c.b16 %v6683, %v6681
    %v6732 = vpack.c.b16 %v6684, %v6682
    %v6733 = vpack.c.b16 %v6687, %v6685
    %v6734 = vpack.c.b16 %v6688, %v6686
    %v6735 = vpack.c.b16 %v6691, %v6689
    %v6736 = vpack.c.b16 %v6692, %v6690
    %v6737 = vpack.c.b16 %v6695, %v6693
    %v6738 = vpack.c.b16 %v6696, %v6694
    %v6739 = vpack.c.b16 %v6699, %v6697
    %v6740 = vpack.c.b16 %v6700, %v6698
    %v6741 = vpack.c.b16 %v6703, %v6701
    %v6742 = vpack.c.b16 %v6704, %v6702
    %v6743 = vpack.c.b16 %v6707, %v6705
    %v6744 = vpack.c.b16 %v6708, %v6706
    %v6745 = vpack.c.b16 %v6711, %v6709
    %v6746 = vpack.c.b16 %v6712, %v6710
    %v6747 = vpack.c.b16 %v6715, %v6713
    %v6748 = vpack.c.b16 %v6716, %v6714
    %6781 = vmatprep.subr.bf16.mxu0 %v6732
    %6782 = vmatpush1.bf16.msra.mxu0 %v6731
    %6783 = vmatprep.subr.bf16.mxu0 %v6730
    %6784 = vmatpush1.bf16.msra.mxu0 %v6729
    %6785 = vmatprep.subr.bf16.mxu0 %v6728
    %6786 = vmatpush1.bf16.msra.mxu0 %v6727
    %6787 = vmatprep.subr.bf16.mxu0 %v6726
    %6788 = vmatpush1.bf16.msra.mxu0 %v6725
    %6789 = vmatprep.subr.bf16.mxu0 %v6724
    %6790 = vmatpush1.bf16.msra.mxu0 %v6723
    %6791 = vmatprep.subr.bf16.mxu0 %v6722
    %6792 = vmatpush1.bf16.msra.mxu0 %v6721
    %6793 = vmatprep.subr.bf16.mxu0 %v6720
    %6794 = vmatpush1.bf16.msra.mxu0 %v6719
    %6795 = vmatprep.subr.bf16.mxu0 %v6718
    %6796 = vmatpush1.bf16.msra.mxu0 %v6717
    %6797 = vmatprep.subr.bf16.mxu0 %v6748
    %6798 = vmatpush2.bf16.msra.mxu0 %v6747
    %6799 = vmatprep.subr.bf16.mxu0 %v6746
    %6800 = vmatpush2.bf16.msra.mxu0 %v6745
    %6801 = vmatprep.subr.bf16.mxu0 %v6744
    %6802 = vmatpush2.bf16.msra.mxu0 %v6743
    %6803 = vmatprep.subr.bf16.mxu0 %v6742
    %6804 = vmatpush2.bf16.msra.mxu0 %v6741
    %6805 = vmatprep.subr.bf16.mxu0 %v6740
    %6806 = vmatpush2.bf16.msra.mxu0 %v6739
    %6807 = vmatprep.subr.bf16.mxu0 %v6738
    %6808 = vmatpush2.bf16.msra.mxu0 %v6737
    %6809 = vmatprep.subr.bf16.mxu0 %v6736
    %6810 = vmatpush2.bf16.msra.mxu0 %v6735
    %6811 = vmatprep.subr.bf16.mxu0 %v6734
    %6812 = vmatpush2.bf16.msra.mxu0 %v6733
    %6813 = vmatprep.mubr.bf16.mxu0 %v6576
    %6814 = vmatmul.mubr.bf16.gmra.mxu0 %v6575
    %v6815 = vpop.f32.mrf.mxu0
    %v6816 = vadd.f32 %v6614, %v6815
    %v6817 = vpop.f32.mrf.mxu0
    %v6818 = vadd.f32 %v6618, %v6817
    %v6819 = vpop.f32.mrf.mxu0
    %v6820 = vpop.f32.mrf.mxu0
    %6821 = vdwg.mxu0
    %v6822 = vmax.f32 %v6816, 0.0
    %v6823 = vmax.f32 %v6818, 0.0
    %v6824 = vpack.c.bf16 %v6822, %v6822
    %v6825 = vpack.c.bf16 %v6823, %v6823
    %v6826 = vld [vmem:[#allocation17] sm:$0xff]
    %v6827 = vld [vmem:[#allocation17 + $0x8] sm:$0xff]
    %v6828 = vld [vmem:[#allocation17 + $0x10] sm:$0xff]
    %v6829 = vld [vmem:[#allocation17 + $0x18] sm:$0xff]
    %v6830 = vld [vmem:[#allocation17 + $0x20] sm:$0xff]
    %v6831 = vld [vmem:[#allocation17 + $0x28] sm:$0xff]
    %v6832 = vld [vmem:[#allocation17 + $0x30] sm:$0xff]
    %v6833 = vld [vmem:[#allocation17 + $0x38] sm:$0xff]
    %v6834 = vld [vmem:[#allocation17 + $0x40] sm:$0xff]
    %v6835 = vld [vmem:[#allocation17 + $0x48] sm:$0xff]
    %v6836 = vld [vmem:[#allocation17 + $0x50] sm:$0xff]
    %v6837 = vld [vmem:[#allocation17 + $0x58] sm:$0xff]
    %v6838 = vld [vmem:[#allocation17 + $0x60] sm:$0xff]
    %v6839 = vld [vmem:[#allocation17 + $0x68] sm:$0xff]
    %v6840 = vld [vmem:[#allocation17 + $0x70] sm:$0xff]
    %v6841 = vld [vmem:[#allocation17 + $0x78] sm:$0xff]
    %v6842 = vld [vmem:[#allocation17 + $0x80] sm:$0xff]
    %v6843 = vld [vmem:[#allocation17 + $0x88] sm:$0xff]
    %v6844 = vld [vmem:[#allocation17 + $0x90] sm:$0xff]
    %v6845 = vld [vmem:[#allocation17 + $0x98] sm:$0xff]
    %v6846 = vld [vmem:[#allocation17 + $0xa0] sm:$0xff]
    %v6847 = vld [vmem:[#allocation17 + $0xa8] sm:$0xff]
    %v6848 = vld [vmem:[#allocation17 + $0xb0] sm:$0xff]
    %v6849 = vld [vmem:[#allocation17 + $0xb8] sm:$0xff]
    %v6850 = vld [vmem:[#allocation17 + $0xc0] sm:$0xff]
    %v6851 = vld [vmem:[#allocation17 + $0xc8] sm:$0xff]
    %v6852 = vld [vmem:[#allocation17 + $0xd0] sm:$0xff]
    %v6853 = vld [vmem:[#allocation17 + $0xd8] sm:$0xff]
    %v6854 = vld [vmem:[#allocation17 + $0xe0] sm:$0xff]
    %v6855 = vld [vmem:[#allocation17 + $0xe8] sm:$0xff]
    %v6856 = vld [vmem:[#allocation17 + $0xf0] sm:$0xff]
    %v6857 = vld [vmem:[#allocation17 + $0xf8] sm:$0xff]
    %v6858 = vld [vmem:[#allocation19] sm:$0x3]
    %v6860 = vlaneseq
    %v6861 = vshrl.u32 %v6860, 7
    %v6862 = vsub.s32 0, %v6861
    %v6863 = vrot.slane %v6858, %v6862
    %v6864 = vlaneseq
    %v6865 = vshrl.u32 %v6864, 7
    %v6866 = vsub.s32 1, %v6865
    %v6867 = vrot.slane %v6858, %v6866
    %v6902 = vunpack.c.l.b16 %v6826
    %v6903 = vunpack.c.h.b16 %v6826
    %v6904 = vunpack.c.l.b16 %v6827
    %v6905 = vunpack.c.h.b16 %v6827
    %v6906 = vunpack.c.l.b16 %v6828
    %v6907 = vunpack.c.h.b16 %v6828
    %v6908 = vunpack.c.l.b16 %v6829
    %v6909 = vunpack.c.h.b16 %v6829
    %v6910 = vunpack.c.l.b16 %v6830
    %v6911 = vunpack.c.h.b16 %v6830
    %v6912 = vunpack.c.l.b16 %v6831
    %v6913 = vunpack.c.h.b16 %v6831
    %v6914 = vunpack.c.l.b16 %v6832
    %v6915 = vunpack.c.h.b16 %v6832
    %v6916 = vunpack.c.l.b16 %v6833
    %v6917 = vunpack.c.h.b16 %v6833
    %v6918 = vunpack.c.l.b16 %v6834
    %v6919 = vunpack.c.h.b16 %v6834
    %v6920 = vunpack.c.l.b16 %v6835
    %v6921 = vunpack.c.h.b16 %v6835
    %v6922 = vunpack.c.l.b16 %v6836
    %v6923 = vunpack.c.h.b16 %v6836
    %v6924 = vunpack.c.l.b16 %v6837
    %v6925 = vunpack.c.h.b16 %v6837
    %v6926 = vunpack.c.l.b16 %v6838
    %v6927 = vunpack.c.h.b16 %v6838
    %v6928 = vunpack.c.l.b16 %v6839
    %v6929 = vunpack.c.h.b16 %v6839
    %v6930 = vunpack.c.l.b16 %v6840
    %v6931 = vunpack.c.h.b16 %v6840
    %v6932 = vunpack.c.l.b16 %v6841
    %v6933 = vunpack.c.h.b16 %v6841
    %v6934 = vunpack.c.l.b16 %v6842
    %v6935 = vunpack.c.h.b16 %v6842
    %v6936 = vunpack.c.l.b16 %v6843
    %v6937 = vunpack.c.h.b16 %v6843
    %v6938 = vunpack.c.l.b16 %v6844
    %v6939 = vunpack.c.h.b16 %v6844
    %v6940 = vunpack.c.l.b16 %v6845
    %v6941 = vunpack.c.h.b16 %v6845
    %v6942 = vunpack.c.l.b16 %v6846
    %v6943 = vunpack.c.h.b16 %v6846
    %v6944 = vunpack.c.l.b16 %v6847
    %v6945 = vunpack.c.h.b16 %v6847
    %v6946 = vunpack.c.l.b16 %v6848
    %v6947 = vunpack.c.h.b16 %v6848
    %v6948 = vunpack.c.l.b16 %v6849
    %v6949 = vunpack.c.h.b16 %v6849
    %v6950 = vunpack.c.l.b16 %v6850
    %v6951 = vunpack.c.h.b16 %v6850
    %v6952 = vunpack.c.l.b16 %v6851
    %v6953 = vunpack.c.h.b16 %v6851
    %v6954 = vunpack.c.l.b16 %v6852
    %v6955 = vunpack.c.h.b16 %v6852
    %v6956 = vunpack.c.l.b16 %v6853
    %v6957 = vunpack.c.h.b16 %v6853
    %v6958 = vunpack.c.l.b16 %v6854
    %v6959 = vunpack.c.h.b16 %v6854
    %v6960 = vunpack.c.l.b16 %v6855
    %v6961 = vunpack.c.h.b16 %v6855
    %v6962 = vunpack.c.l.b16 %v6856
    %v6963 = vunpack.c.h.b16 %v6856
    %v6964 = vunpack.c.l.b16 %v6857
    %v6965 = vunpack.c.h.b16 %v6857
    %v6966 = vpack.c.b16 %v6904, %v6902
    %v6967 = vpack.c.b16 %v6905, %v6903
    %v6968 = vpack.c.b16 %v6908, %v6906
    %v6969 = vpack.c.b16 %v6909, %v6907
    %v6970 = vpack.c.b16 %v6912, %v6910
    %v6971 = vpack.c.b16 %v6913, %v6911
    %v6972 = vpack.c.b16 %v6916, %v6914
    %v6973 = vpack.c.b16 %v6917, %v6915
    %v6974 = vpack.c.b16 %v6920, %v6918
    %v6975 = vpack.c.b16 %v6921, %v6919
    %v6976 = vpack.c.b16 %v6924, %v6922
    %v6977 = vpack.c.b16 %v6925, %v6923
    %v6978 = vpack.c.b16 %v6928, %v6926
    %v6979 = vpack.c.b16 %v6929, %v6927
    %v6980 = vpack.c.b16 %v6932, %v6930
    %v6981 = vpack.c.b16 %v6933, %v6931
    %v6982 = vpack.c.b16 %v6936, %v6934
    %v6983 = vpack.c.b16 %v6937, %v6935
    %v6984 = vpack.c.b16 %v6940, %v6938
    %v6985 = vpack.c.b16 %v6941, %v6939
    %v6986 = vpack.c.b16 %v6944, %v6942
    %v6987 = vpack.c.b16 %v6945, %v6943
    %v6988 = vpack.c.b16 %v6948, %v6946
    %v6989 = vpack.c.b16 %v6949, %v6947
    %v6990 = vpack.c.b16 %v6952, %v6950
    %v6991 = vpack.c.b16 %v6953, %v6951
    %v6992 = vpack.c.b16 %v6956, %v6954
    %v6993 = vpack.c.b16 %v6957, %v6955
    %v6994 = vpack.c.b16 %v6960, %v6958
    %v6995 = vpack.c.b16 %v6961, %v6959
    %v6996 = vpack.c.b16 %v6964, %v6962
    %v6997 = vpack.c.b16 %v6965, %v6963
    %7030 = vmatprep.subr.bf16.mxu0 %v6981
    %7031 = vmatpush1.bf16.msra.mxu0 %v6980
    %7032 = vmatprep.subr.bf16.mxu0 %v6979
    %7033 = vmatpush1.bf16.msra.mxu0 %v6978
    %7034 = vmatprep.subr.bf16.mxu0 %v6977
    %7035 = vmatpush1.bf16.msra.mxu0 %v6976
    %7036 = vmatprep.subr.bf16.mxu0 %v6975
    %7037 = vmatpush1.bf16.msra.mxu0 %v6974
    %7038 = vmatprep.subr.bf16.mxu0 %v6973
    %7039 = vmatpush1.bf16.msra.mxu0 %v6972
    %7040 = vmatprep.subr.bf16.mxu0 %v6971
    %7041 = vmatpush1.bf16.msra.mxu0 %v6970
    %7042 = vmatprep.subr.bf16.mxu0 %v6969
    %7043 = vmatpush1.bf16.msra.mxu0 %v6968
    %7044 = vmatprep.subr.bf16.mxu0 %v6967
    %7045 = vmatpush1.bf16.msra.mxu0 %v6966
    %7046 = vmatprep.subr.bf16.mxu0 %v6997
    %7047 = vmatpush2.bf16.msra.mxu0 %v6996
    %7048 = vmatprep.subr.bf16.mxu0 %v6995
    %7049 = vmatpush2.bf16.msra.mxu0 %v6994
    %7050 = vmatprep.subr.bf16.mxu0 %v6993
    %7051 = vmatpush2.bf16.msra.mxu0 %v6992
    %7052 = vmatprep.subr.bf16.mxu0 %v6991
    %7053 = vmatpush2.bf16.msra.mxu0 %v6990
    %7054 = vmatprep.subr.bf16.mxu0 %v6989
    %7055 = vmatpush2.bf16.msra.mxu0 %v6988
    %7056 = vmatprep.subr.bf16.mxu0 %v6987
    %7057 = vmatpush2.bf16.msra.mxu0 %v6986
    %7058 = vmatprep.subr.bf16.mxu0 %v6985
    %7059 = vmatpush2.bf16.msra.mxu0 %v6984
    %7060 = vmatprep.subr.bf16.mxu0 %v6983
    %7061 = vmatpush2.bf16.msra.mxu0 %v6982
    %7062 = vmatprep.mubr.bf16.mxu0 %v6825
    %7063 = vmatmul.mubr.bf16.gmra.mxu0 %v6824
    %v7064 = vpop.f32.mrf.mxu0
    %v7065 = vadd.f32 %v6863, %v7064
    %v7066 = vpop.f32.mrf.mxu0
    %v7067 = vadd.f32 %v6867, %v7066
    %v7068 = vpop.f32.mrf.mxu0
    %v7069 = vpop.f32.mrf.mxu0
    %7070 = vdwg.mxu0
    %v7071 = vmax.f32 %v7065, 0.0
    %v7072 = vmax.f32 %v7067, 0.0
    %v7073 = vpack.c.bf16 %v7071, %v7071
    %v7074 = vpack.c.bf16 %v7072, %v7072
    %v7077 = vunpack.c.l.b16 %v7073
    %v7078 = vunpack.c.l.b16 %v7074
    %v7079 = vpack.c.b16 %v7078, %v7077
    %7081 = vst [vmem:[#allocation20] sm:$0xff] %v7079
    // Predicated region
    $region90: #{tpu_custom_call.1} parent=1 // pred_check
      _
    $region91: #{tpu_custom_call.1} parent=1 // pred_check_branch
      %7083 = sbr.rel (0) target = $region93
    $region92: #{tpu_custom_call.1} parent=1 // pred_region
      %s7085 = ssub.s32 128, 128
      %7086 = vsyncadd [#allocation4], %s7085
      %s7088 = sshll.u32 [#allocation20], 4
      %s7089 = int_to_ptr.vmem [resolvable:$true] %s7088
      %7091 = dma.vmem_to_hbm [thread:$0]  %s7089, 128, %s11, [#allocation4]
    $region93: #{tpu_custom_call.1} parent=1 // pred_fallthru
      _
    // Predicated region
    $region94: #{tpu_custom_call.1} parent=1 // pred_check
      _
    $region95: #{tpu_custom_call.1} parent=1 // pred_check_branch
      %7093 = sbr.rel (0) target = $region97
    $region96: #{tpu_custom_call.1} parent=1 // pred_region
      %7094 = dma.done [#allocation4], 128
    $region97: #{tpu_custom_call.1} parent=1 // pred_fallthru
      _
    %7095 = vsyncpa [#allocation3], 1
    %7096 = vsyncpa [#allocation6], 1
    %7097 = vsyncpa [#allocation9], 1
    %7098 = vsyncpa [#allocation12], 1
    %7099 = vsyncpa [#allocation15], 1
    %7100 = vsyncpa [#allocation18], 1
    %7101 = vsyncpa [#allocation4], 1

</llo_original>
